<compile_context>
chip_gen: v7x
topology: tpu7x:2x2x1
jax: 0.10.0
libtpu: 0.0.40
codegen_flags: <defaults>
</compile_context>

<pallas_src>
import functools

import jax
import jax.numpy as jnp
import numpy as np
from jax.experimental import pallas as pl
from jax.experimental.pallas import tpu as pltpu


def _basic_block_kernel(x_ref, w1_ref, w2_ref, b1_ref, b2_ref, o_ref,
                        xpad, mid, *, TH, W, Cin, Cmid, Cout):
    """Fused BasicBlock forward for one (batch, H-tile) grid step.

    x_ref : (1, H, W, Cin) bf16    whole image for this batch (auto-pipelined)
    w1_ref: (3, 3*Cin,  Cmid) bf16 conv1 weights, BN1 scale folded, kx in K
    w2_ref: (3, 3*Cmid, Cout) bf16 conv2 weights, BN2 scale folded
    b1/b2 : (1, C) f32             folded BN biases
    o_ref : (1, TH, W, Cout)       output tile
    xpad  : (TH+4, W+2, Cin) bf16  input tile + 2-row halo, zero-padded in W
    mid   : (TH+2, W+2, Cmid) bf16 conv1 activation incl. 1-row halo, W-padded
    """
    t = pl.program_id(1)
    T = pl.num_programs(1)
    row0 = pl.multiple_of(t * TH, TH)

    # ---- Stage the padded input tile (VMEM -> VMEM copy; HBM DMA is handled
    #      and overlapped by the BlockSpec pipeline).
    zc_x = jnp.zeros((TH + 4, 1, Cin), jnp.bfloat16)
    xpad[:, 0:1, :] = zc_x                       # left zero column
    xpad[:, W + 1:W + 2, :] = zc_x               # right zero column
    xpad[2:TH + 2, 1:W + 1, :] = x_ref[0, pl.ds(row0, TH), :, :]

    @pl.when(t > 0)
    def _():
        xpad[0:2, 1:W + 1, :] = x_ref[0, pl.ds(row0 - 2, 2), :, :]

    @pl.when(t == 0)
    def _():
        xpad[0:2, :, :] = jnp.zeros((2, W + 2, Cin), jnp.bfloat16)

    @pl.when(t < T - 1)
    def _():
        xpad[TH + 2:TH + 4, 1:W + 1, :] = x_ref[0, pl.ds(row0 + TH, 2), :, :]

    @pl.when(t == T - 1)
    def _():
        xpad[TH + 2:TH + 4, :, :] = jnp.zeros((2, W + 2, Cin), jnp.bfloat16)

    def im2row(buf, r0, R, C):
        """(R, W+2, C) window of `buf` -> (R*W, 3*C): 3 kx taps lane-concatenated."""
        rows = buf[r0:r0 + R, :, :]                                  # static slice
        patch = jnp.concatenate(
            [rows[:, 0:W], rows[:, 1:W + 1], rows[:, 2:W + 2]], axis=-1)
        return patch.reshape(R * W, 3 * C)

    # ---- conv1 (3x3, pad 1, BN1 scale pre-folded) + bias + relu -> mid
    R1 = TH + 2
    h = (jnp.dot(im2row(xpad, 0, R1, Cin), w1_ref[0], preferred_element_type=jnp.float32)
         + jnp.dot(im2row(xpad, 1, R1, Cin), w1_ref[1], preferred_element_type=jnp.float32)
         + jnp.dot(im2row(xpad, 2, R1, Cin), w1_ref[2], preferred_element_type=jnp.float32))
    h = jnp.maximum(h + b1_ref[...], 0.0)

    zc_m = jnp.zeros((R1, 1, Cmid), jnp.bfloat16)
    mid[:, 0:1, :] = zc_m
    mid[:, W + 1:W + 2, :] = zc_m
    mid[:, 1:W + 1, :] = h.reshape(R1, W, Cmid).astype(jnp.bfloat16)

    # Intermediate rows outside the image behave like conv2's zero pad.
    @pl.when(t == 0)
    def _():
        mid[0:1, :, :] = jnp.zeros((1, W + 2, Cmid), jnp.bfloat16)

    @pl.when(t == T - 1)
    def _():
        mid[R1 - 1:R1, :, :] = jnp.zeros((1, W + 2, Cmid), jnp.bfloat16)

    # ---- conv2 (3x3, pad 1, BN2 scale pre-folded) + bias + residual + relu
    acc = (jnp.dot(im2row(mid, 0, TH, Cmid), w2_ref[0], preferred_element_type=jnp.float32)
           + jnp.dot(im2row(mid, 1, TH, Cmid), w2_ref[1], preferred_element_type=jnp.float32)
           + jnp.dot(im2row(mid, 2, TH, Cmid), w2_ref[2], preferred_element_type=jnp.float32))
    res = x_ref[0, pl.ds(row0, TH), :, :].astype(jnp.float32).reshape(TH * W, Cin)
    out = jnp.maximum(acc + b2_ref[...] + res, 0.0)
    o_ref[...] = out.reshape(1, TH, W, Cout).astype(o_ref.dtype)


def _fold_bn(bn, eps=1e-5):
    scale = bn["gamma"] / jnp.sqrt(bn["var"] + eps)
    bias = bn["beta"] - bn["mean"] * scale
    return scale, bias


def _vmem_bytes(TH, H, W, Cin, Cmid, Cout, out_bytes):
    """Rough per-step VMEM footprint of the kernel (bytes)."""
    bf = 2
    x_block = 2 * H * W * Cin * bf                        # double-buffered input block
    out_block = 2 * TH * W * Cout * out_bytes             # double-buffered output block
    weights = 2 * 9 * (Cin * Cmid + Cmid * Cout) * bf     # (possibly) double-buffered
    xpad = (TH + 4) * (W + 2) * Cin * bf
    mid = (TH + 2) * (W + 2) * Cmid * bf
    conv1_live = (TH + 2) * W * (3 * Cin * bf + Cmid * 4)  # patches + f32 acc
    conv2_live = TH * W * (3 * Cmid * bf + Cout * 4 + Cin * 4)
    return x_block + out_block + weights + xpad + mid + max(conv1_live, conv2_live)


def _pick_tile_rows(N, H, W, Cin, Cmid, Cout, out_bytes, budget):
    """Largest divisor of H whose estimated footprint fits `budget` (with margin).

    Keeps N * (H // TH) >= 2 when possible so both v7x TensorCores stay busy.
    """
    divisors = [d for d in range(1, H + 1) if H % d == 0]
    legal = [d for d in divisors if d == H or d >= 2]      # halo logic needs TH>=2 when T>1
    ok = [d for d in legal
          if int(1.3 * _vmem_bytes(d, H, W, Cin, Cmid, Cout, out_bytes)) <= budget]
    if not ok:
        return min(legal)
    th = max(ok)
    if N * (H // th) < 2:                                  # v7x megacore: want >= 2 steps
        smaller = [d for d in ok if H // d >= 2]
        if smaller:
            th = max(smaller)
    return th


def basic_block_forward(x_nchw, params, tile_rows=None):
    """BasicBlock.forward with stride=1, downsample=None. Input/output are NCHW."""
    orig_dtype = x_nchw.dtype
    # NCHW -> NHWC, streamed as bf16 (halves HBM reads; acc/epilogue stay f32).
    x = jnp.transpose(x_nchw, (0, 2, 3, 1)).astype(jnp.bfloat16)
    N, H, W, Cin = x.shape
    Cmid = params["w1"].shape[-1]
    Cout = params["w2"].shape[-1]
    assert Cin == Cout, "residual path requires Cin == Cout (downsample=None)"
    # TODO(synk): for v5e, pad Cin/Cmid/Cout to multiples of 128 in production.

    s1, b1 = _fold_bn(params["bn1"])
    s2, b2 = _fold_bn(params["bn2"])

    # Fold BN scales into weights (per out-channel, in f32), fold kx into the
    # contraction dim, then cast the MXU operands to bf16.
    w1 = (params["w1"] * s1).reshape(3, 3 * Cin, Cmid).astype(jnp.bfloat16)
    w2 = (params["w2"] * s2).reshape(3, 3 * Cmid, Cout).astype(jnp.bfloat16)
    b1 = b1.reshape(1, Cmid).astype(jnp.float32)
    b2 = b2.reshape(1, Cout).astype(jnp.float32)

    # Per-generation VMEM budget (v7x: 64 MiB physical; v5e/v6e: 128 MiB).
    try:
        vmem_cap = int(pltpu.get_tpu_info().vmem_capacity_bytes)
    except Exception:
        vmem_cap = 64 * 1024 * 1024
    vmem_limit = min(max(int(0.75 * vmem_cap), 32 * 1024 * 1024), 110 * 1024 * 1024)
    budget = int(0.65 * vmem_limit)

    out_bytes = np.dtype(orig_dtype).itemsize
    if tile_rows is None:
        TH = _pick_tile_rows(N, H, W, Cin, Cmid, Cout, out_bytes, budget)
    else:
        TH = tile_rows
    assert H % TH == 0, "tile_rows must divide H"
    T = H // TH
    assert T == 1 or TH >= 2, "row tiles must be >= 2 rows when tiling"

    kernel = functools.partial(_basic_block_kernel, TH=TH, W=W,
                               Cin=Cin, Cmid=Cmid, Cout=Cout)

    out = pl.pallas_call(
        kernel,
        out_shape=jax.ShapeDtypeStruct((N, H, W, Cout), orig_dtype),
        grid=(N, T),
        in_specs=[
            # Whole image per batch: block index only changes with n, so the
            # pipeline prefetches the next batch's image during compute and
            # never re-waits inside a row-tile step.
            pl.BlockSpec((1, H, W, Cin), lambda n, t: (n, 0, 0, 0)),
            pl.BlockSpec((3, 3 * Cin, Cmid), lambda n, t: (0, 0, 0)),
            pl.BlockSpec((3, 3 * Cmid, Cout), lambda n, t: (0, 0, 0)),
            pl.BlockSpec((1, Cmid), lambda n, t: (0, 0)),
            pl.BlockSpec((1, Cout), lambda n, t: (0, 0)),
        ],
        out_specs=pl.BlockSpec((1, TH, W, Cout), lambda n, t: (n, t, 0, 0)),
        scratch_shapes=[
            pltpu.VMEM((TH + 4, W + 2, Cin), jnp.bfloat16),   # W-padded input tile
            pltpu.VMEM((TH + 2, W + 2, Cmid), jnp.bfloat16),  # W-padded conv1 activation
        ],
        compiler_params=pltpu.CompilerParams(
            dimension_semantics=("parallel", "parallel"),
            vmem_limit_bytes=vmem_limit),
    )(x, w1, w2, b1, b2)

    return jnp.transpose(out, (0, 3, 1, 2))                 # NHWC -> NCHW


def init_basic_block_params(key, inplanes, planes):
    k1, k2, k3, k4 = jax.random.split(key, 4)
    return {
        # conv weights stored HWIO (3, 3, Cin, Cout)
        "w1": 0.1 * jax.random.normal(k1, (3, 3, inplanes, planes), jnp.float32),
        "w2": 0.1 * jax.random.normal(k2, (3, 3, planes, planes), jnp.float32),
        "bn1": {
            "gamma": 1.0 + 0.05 * jax.random.normal(k3, (planes,), jnp.float32),
            "beta": 0.02 * jnp.arange(planes, dtype=jnp.float32),
            "mean": 0.01 * jnp.arange(planes, dtype=jnp.float32),
            "var": jnp.ones((planes,), jnp.float32),
        },
        "bn2": {
            "gamma": 1.0 + 0.05 * jax.random.normal(k4, (planes,), jnp.float32),
            "beta": -0.02 * jnp.arange(planes, dtype=jnp.float32),
            "mean": 0.005 * jnp.arange(planes, dtype=jnp.float32),
            "var": jnp.ones((planes,), jnp.float32),
        },
    }


def _reference(x_nchw, params, eps=1e-5):
    """Pure-JAX reference (same inference-mode BasicBlock semantics)."""
    x = jnp.transpose(x_nchw, (0, 2, 3, 1))

    def conv(h, w):
        return jax.lax.conv_general_dilated(
            h, w, window_strides=(1, 1), padding=((1, 1), (1, 1)),
            dimension_numbers=("NHWC", "HWIO", "NHWC"),
            precision=jax.lax.Precision.HIGHEST)

    def bn(h, p):
        s = p["gamma"] / jnp.sqrt(p["var"] + eps)
        b = p["beta"] - p["mean"] * s
        return h * s + b

    out = jax.nn.relu(bn(conv(x, params["w1"]), params["bn1"]))
    out = jax.nn.relu(bn(conv(out, params["w2"]), params["bn2"]) + x)
    return jnp.transpose(out, (0, 3, 1, 2))


if __name__ == "__main__":
    key = jax.random.PRNGKey(0)
    kx, kp = jax.random.split(key)

    N, C, H, W = 2, 4, 16, 16                      # inplanes == planes, stride 1
    x = jax.random.normal(kx, (N, C, H, W), jnp.float32)
    params = init_basic_block_params(kp, inplanes=C, planes=C)

    y_ref = _reference(x, params)

    # Multi-tile path (exercises the row-halo + boundary-zero logic).
    y = basic_block_forward(x, params, tile_rows=8)
    jax.block_until_ready(y)
    assert y.shape == (N, C, H, W)
    np.testing.assert_allclose(np.asarray(y), np.asarray(y_ref),
                               atol=2e-2, rtol=2e-2)

    # Auto-picked tile (whole image per batch at this size).
    y2 = basic_block_forward(x, params)
    jax.block_until_ready(y2)
    np.testing.assert_allclose(np.asarray(y2), np.asarray(y_ref),
                               atol=2e-2, rtol=2e-2)

    print("KERNEL_OK")
</pallas_src>

<mosaic_0001>
module attributes {stable_mosaic.version = 11 : i64} {
  func.func @_basic_block_kernel(%arg0: i32, %arg1: i32, %arg2: memref<1x16x16x4xbf16, #tpu.memory_space<vmem>>, %arg3: memref<3x12x4xbf16, #tpu.memory_space<vmem>>, %arg4: memref<3x12x4xbf16, #tpu.memory_space<vmem>>, %arg5: memref<1x4xf32, #tpu.memory_space<vmem>>, %arg6: memref<1x4xf32, #tpu.memory_space<vmem>>, %arg7: memref<1x8x16x4xf32, #tpu.memory_space<vmem>>, %arg8: memref<12x18x4xbf16, #tpu.memory_space<vmem>>, %arg9: memref<10x18x4xbf16, #tpu.memory_space<vmem>>) attributes {dimension_semantics = [#tpu.dimension_semantics<parallel>, #tpu.dimension_semantics<parallel>], iteration_bounds = array<i64: 2, 2>, scalar_prefetch = 0 : i64, scratch_operands = 2 : i64, tpu.core_type = #tpu.core_type<tc>, window_params = [{transform_indices = @transform_0, window_bounds = array<i64: 1, 16, 16, 4>}, {pipeline_mode = #tpu.pipeline_mode<synchronous>, transform_indices = @transform_1, window_bounds = array<i64: 3, 12, 4>}, {pipeline_mode = #tpu.pipeline_mode<synchronous>, transform_indices = @transform_2, window_bounds = array<i64: 3, 12, 4>}, {pipeline_mode = #tpu.pipeline_mode<synchronous>, transform_indices = @transform_3, window_bounds = array<i64: 1, 4>}, {pipeline_mode = #tpu.pipeline_mode<synchronous>, transform_indices = @transform_4, window_bounds = array<i64: 1, 4>}, {transform_indices = @transform_5, window_bounds = array<i64: 1, 8, 16, 4>}]} {
    %c8_i32 = arith.constant 8 : i32
    %0 = arith.muli %arg1, %c8_i32 : i32
    %1 = tpu.assume_multiple %0, 8 : i32
    %cst = arith.constant 0.000000e+00 : bf16
    %2 = vector.broadcast %cst : bf16 to vector<12x1x4xbf16>
    %c0 = arith.constant 0 : index
    %c0_0 = arith.constant 0 : index
    %c0_1 = arith.constant 0 : index
    %3 = vector.load %arg8[%c0, %c0_0, %c0_1] : memref<12x18x4xbf16, #tpu.memory_space<vmem>>, vector<12x1x4xbf16>
    tpu.vector_store %arg8[%c0, %c0_0, %c0_1], %2 {strides = array<i32>} : memref<12x18x4xbf16, #tpu.memory_space<vmem>>, vector<12x1x4xbf16>,
    %c0_2 = arith.constant 0 : index
    %c17 = arith.constant 17 : index
    %c0_3 = arith.constant 0 : index
    %4 = vector.load %arg8[%c0_2, %c17, %c0_3] : memref<12x18x4xbf16, #tpu.memory_space<vmem>>, vector<12x1x4xbf16>
    tpu.vector_store %arg8[%c0_2, %c17, %c0_3], %2 {strides = array<i32>} : memref<12x18x4xbf16, #tpu.memory_space<vmem>>, vector<12x1x4xbf16>,
    %c0_4 = arith.constant 0 : index
    %5 = arith.index_cast %1 : i32 to index
    %c0_5 = arith.constant 0 : index
    %c0_6 = arith.constant 0 : index
    %6 = vector.load %arg2[%c0_4, %5, %c0_5, %c0_6] : memref<1x16x16x4xbf16, #tpu.memory_space<vmem>>, vector<1x8x16x4xbf16>
    %7 = vector.shape_cast %6 : vector<1x8x16x4xbf16> to vector<8x16x4xbf16>
    %c2 = arith.constant 2 : index
    %c1 = arith.constant 1 : index
    %c0_7 = arith.constant 0 : index
    %8 = vector.load %arg8[%c2, %c1, %c0_7] : memref<12x18x4xbf16, #tpu.memory_space<vmem>>, vector<8x16x4xbf16>
    tpu.vector_store %arg8[%c2, %c1, %c0_7], %7 {strides = array<i32>} : memref<12x18x4xbf16, #tpu.memory_space<vmem>>, vector<8x16x4xbf16>,
    %c0_i32 = arith.constant 0 : i32
    %9 = arith.cmpi sgt, %arg1, %c0_i32 : i32
    %10 = arith.extui %9 : i1 to i32
    %c0_i32_8 = arith.constant 0 : i32
    %11 = arith.cmpi ne, %10, %c0_i32_8 : i32
    scf.if %11 {
      %c2_i32 = arith.constant 2 : i32
      %109 = arith.subi %1, %c2_i32 : i32
      %c0_83 = arith.constant 0 : index
      %110 = arith.index_cast %109 : i32 to index
      %c0_84 = arith.constant 0 : index
      %c0_85 = arith.constant 0 : index
      %111 = vector.load %arg2[%c0_83, %110, %c0_84, %c0_85] : memref<1x16x16x4xbf16, #tpu.memory_space<vmem>>, vector<1x2x16x4xbf16>
      %112 = vector.shape_cast %111 : vector<1x2x16x4xbf16> to vector<2x16x4xbf16>
      %c0_86 = arith.constant 0 : index
      %c1_87 = arith.constant 1 : index
      %c0_88 = arith.constant 0 : index
      %113 = vector.load %arg8[%c0_86, %c1_87, %c0_88] : memref<12x18x4xbf16, #tpu.memory_space<vmem>>, vector<2x16x4xbf16>
      tpu.vector_store %arg8[%c0_86, %c1_87, %c0_88], %112 {strides = array<i32>} : memref<12x18x4xbf16, #tpu.memory_space<vmem>>, vector<2x16x4xbf16>,
    } else {
    }
    %c0_i32_9 = arith.constant 0 : i32
    %12 = arith.cmpi eq, %arg1, %c0_i32_9 : i32
    %13 = arith.extui %12 : i1 to i32
    %c0_i32_10 = arith.constant 0 : i32
    %14 = arith.cmpi ne, %13, %c0_i32_10 : i32
    scf.if %14 {
      %cst_83 = arith.constant 0.000000e+00 : bf16
      %109 = vector.broadcast %cst_83 : bf16 to vector<2x18x4xbf16>
      %c0_84 = arith.constant 0 : index
      %c0_85 = arith.constant 0 : index
      %c0_86 = arith.constant 0 : index
      %110 = vector.load %arg8[%c0_84, %c0_85, %c0_86] : memref<12x18x4xbf16, #tpu.memory_space<vmem>>, vector<2x18x4xbf16>
      tpu.vector_store %arg8[%c0_84, %c0_85, %c0_86], %109 {strides = array<i32>} : memref<12x18x4xbf16, #tpu.memory_space<vmem>>, vector<2x18x4xbf16>,
    } else {
    }
    %c1_i32 = arith.constant 1 : i32
    %15 = arith.cmpi slt, %arg1, %c1_i32 : i32
    %16 = arith.extui %15 : i1 to i32
    %c0_i32_11 = arith.constant 0 : i32
    %17 = arith.cmpi ne, %16, %c0_i32_11 : i32
    scf.if %17 {
      %c8_i32_83 = arith.constant 8 : i32
      %109 = arith.addi %1, %c8_i32_83 : i32
      %c0_84 = arith.constant 0 : index
      %110 = arith.index_cast %109 : i32 to index
      %c0_85 = arith.constant 0 : index
      %c0_86 = arith.constant 0 : index
      %111 = vector.load %arg2[%c0_84, %110, %c0_85, %c0_86] : memref<1x16x16x4xbf16, #tpu.memory_space<vmem>>, vector<1x2x16x4xbf16>
      %112 = vector.shape_cast %111 : vector<1x2x16x4xbf16> to vector<2x16x4xbf16>
      %c10 = arith.constant 10 : index
      %c1_87 = arith.constant 1 : index
      %c0_88 = arith.constant 0 : index
      %113 = vector.load %arg8[%c10, %c1_87, %c0_88] : memref<12x18x4xbf16, #tpu.memory_space<vmem>>, vector<2x16x4xbf16>
      tpu.vector_store %arg8[%c10, %c1_87, %c0_88], %112 {strides = array<i32>} : memref<12x18x4xbf16, #tpu.memory_space<vmem>>, vector<2x16x4xbf16>,
    } else {
    }
    %c1_i32_12 = arith.constant 1 : i32
    %18 = arith.cmpi eq, %arg1, %c1_i32_12 : i32
    %19 = arith.extui %18 : i1 to i32
    %c0_i32_13 = arith.constant 0 : i32
    %20 = arith.cmpi ne, %19, %c0_i32_13 : i32
    scf.if %20 {
      %cst_83 = arith.constant 0.000000e+00 : bf16
      %109 = vector.broadcast %cst_83 : bf16 to vector<2x18x4xbf16>
      %c10 = arith.constant 10 : index
      %c0_84 = arith.constant 0 : index
      %c0_85 = arith.constant 0 : index
      %110 = vector.load %arg8[%c10, %c0_84, %c0_85] : memref<12x18x4xbf16, #tpu.memory_space<vmem>>, vector<2x18x4xbf16>
      tpu.vector_store %arg8[%c10, %c0_84, %c0_85], %109 {strides = array<i32>} : memref<12x18x4xbf16, #tpu.memory_space<vmem>>, vector<2x18x4xbf16>,
    } else {
    }
    %c0_14 = arith.constant 0 : index
    %c0_15 = arith.constant 0 : index
    %c0_16 = arith.constant 0 : index
    %21 = vector.load %arg8[%c0_14, %c0_15, %c0_16] : memref<12x18x4xbf16, #tpu.memory_space<vmem>>, vector<10x18x4xbf16>
    %22 = vector.extract_strided_slice %21 {offsets = [0, 0, 0], sizes = [10, 16, 4], strides = [1, 1, 1]} : vector<10x18x4xbf16> to vector<10x16x4xbf16>
    %23 = vector.extract_strided_slice %21 {offsets = [0, 1, 0], sizes = [10, 16, 4], strides = [1, 1, 1]} : vector<10x18x4xbf16> to vector<10x16x4xbf16>
    %24 = vector.extract_strided_slice %21 {offsets = [0, 2, 0], sizes = [10, 16, 4], strides = [1, 1, 1]} : vector<10x18x4xbf16> to vector<10x16x4xbf16>
    %25 = tpu.concatenate %22, %23, %24 in 2 : vector<10x16x4xbf16>, vector<10x16x4xbf16>, vector<10x16x4xbf16> -> vector<10x16x12xbf16>
    %26 = vector.shape_cast %25 : vector<10x16x12xbf16> to vector<160x12xbf16>
    %c0_17 = arith.constant 0 : index
    %c0_18 = arith.constant 0 : index
    %c0_19 = arith.constant 0 : index
    %27 = vector.load %arg3[%c0_17, %c0_18, %c0_19] : memref<3x12x4xbf16, #tpu.memory_space<vmem>>, vector<1x12x4xbf16>
    %28 = vector.shape_cast %27 : vector<1x12x4xbf16> to vector<12x4xbf16>
    %cst_20 = arith.constant dense<0.000000e+00> : vector<160x4xf32>
    %29 = tpu.matmul %26, %28, %cst_20 {dimension_numbers = #tpu.dot_dimension_numbers<[1], [0], [0], [1], [0, 0, 1, 1], [], []>} : vector<160x12xbf16>, vector<12x4xbf16>, vector<160x4xf32> -> vector<160x4xf32>
    %c1_21 = arith.constant 1 : index
    %c0_22 = arith.constant 0 : index
    %c0_23 = arith.constant 0 : index
    %30 = vector.load %arg8[%c1_21, %c0_22, %c0_23] : memref<12x18x4xbf16, #tpu.memory_space<vmem>>, vector<10x18x4xbf16>
    %31 = vector.extract_strided_slice %30 {offsets = [0, 0, 0], sizes = [10, 16, 4], strides = [1, 1, 1]} : vector<10x18x4xbf16> to vector<10x16x4xbf16>
    %32 = vector.extract_strided_slice %30 {offsets = [0, 1, 0], sizes = [10, 16, 4], strides = [1, 1, 1]} : vector<10x18x4xbf16> to vector<10x16x4xbf16>
    %33 = vector.extract_strided_slice %30 {offsets = [0, 2, 0], sizes = [10, 16, 4], strides = [1, 1, 1]} : vector<10x18x4xbf16> to vector<10x16x4xbf16>
    %34 = tpu.concatenate %31, %32, %33 in 2 : vector<10x16x4xbf16>, vector<10x16x4xbf16>, vector<10x16x4xbf16> -> vector<10x16x12xbf16>
    %35 = vector.shape_cast %34 : vector<10x16x12xbf16> to vector<160x12xbf16>
    %c1_24 = arith.constant 1 : index
    %c0_25 = arith.constant 0 : index
    %c0_26 = arith.constant 0 : index
    %36 = vector.load %arg3[%c1_24, %c0_25, %c0_26] : memref<3x12x4xbf16, #tpu.memory_space<vmem>>, vector<1x12x4xbf16>
    %37 = vector.shape_cast %36 : vector<1x12x4xbf16> to vector<12x4xbf16>
    %cst_27 = arith.constant dense<0.000000e+00> : vector<160x4xf32>
    %38 = tpu.matmul %35, %37, %cst_27 {dimension_numbers = #tpu.dot_dimension_numbers<[1], [0], [0], [1], [0, 0, 1, 1], [], []>} : vector<160x12xbf16>, vector<12x4xbf16>, vector<160x4xf32> -> vector<160x4xf32>
    %39 = arith.addf %29, %38 : vector<160x4xf32>
    %c2_28 = arith.constant 2 : index
    %c0_29 = arith.constant 0 : index
    %c0_30 = arith.constant 0 : index
    %40 = vector.load %arg8[%c2_28, %c0_29, %c0_30] : memref<12x18x4xbf16, #tpu.memory_space<vmem>>, vector<10x18x4xbf16>
    %41 = vector.extract_strided_slice %40 {offsets = [0, 0, 0], sizes = [10, 16, 4], strides = [1, 1, 1]} : vector<10x18x4xbf16> to vector<10x16x4xbf16>
    %42 = vector.extract_strided_slice %40 {offsets = [0, 1, 0], sizes = [10, 16, 4], strides = [1, 1, 1]} : vector<10x18x4xbf16> to vector<10x16x4xbf16>
    %43 = vector.extract_strided_slice %40 {offsets = [0, 2, 0], sizes = [10, 16, 4], strides = [1, 1, 1]} : vector<10x18x4xbf16> to vector<10x16x4xbf16>
    %44 = tpu.concatenate %41, %42, %43 in 2 : vector<10x16x4xbf16>, vector<10x16x4xbf16>, vector<10x16x4xbf16> -> vector<10x16x12xbf16>
    %45 = vector.shape_cast %44 : vector<10x16x12xbf16> to vector<160x12xbf16>
    %c2_31 = arith.constant 2 : index
    %c0_32 = arith.constant 0 : index
    %c0_33 = arith.constant 0 : index
    %46 = vector.load %arg3[%c2_31, %c0_32, %c0_33] : memref<3x12x4xbf16, #tpu.memory_space<vmem>>, vector<1x12x4xbf16>
    %47 = vector.shape_cast %46 : vector<1x12x4xbf16> to vector<12x4xbf16>
    %cst_34 = arith.constant dense<0.000000e+00> : vector<160x4xf32>
    %48 = tpu.matmul %45, %47, %cst_34 {dimension_numbers = #tpu.dot_dimension_numbers<[1], [0], [0], [1], [0, 0, 1, 1], [], []>} : vector<160x12xbf16>, vector<12x4xbf16>, vector<160x4xf32> -> vector<160x4xf32>
    %49 = arith.addf %39, %48 : vector<160x4xf32>
    %c0_35 = arith.constant 0 : index
    %c0_36 = arith.constant 0 : index
    %50 = vector.load %arg5[%c0_35, %c0_36] : memref<1x4xf32, #tpu.memory_space<vmem>>, vector<1x4xf32>
    %51 = vector.broadcast %50 : vector<1x4xf32> to vector<160x4xf32>
    %52 = arith.addf %49, %51 : vector<160x4xf32>
    %cst_37 = arith.constant 0.000000e+00 : f32
    %53 = vector.broadcast %cst_37 : f32 to vector<160x4xf32>
    %54 = arith.maximumf %52, %53 : vector<160x4xf32>
    %cst_38 = arith.constant 0.000000e+00 : bf16
    %55 = vector.broadcast %cst_38 : bf16 to vector<10x1x4xbf16>
    %c0_39 = arith.constant 0 : index
    %c0_40 = arith.constant 0 : index
    %c0_41 = arith.constant 0 : index
    %56 = vector.load %arg9[%c0_39, %c0_40, %c0_41] : memref<10x18x4xbf16, #tpu.memory_space<vmem>>, vector<10x1x4xbf16>
    tpu.vector_store %arg9[%c0_39, %c0_40, %c0_41], %55 {strides = array<i32>} : memref<10x18x4xbf16, #tpu.memory_space<vmem>>, vector<10x1x4xbf16>,
    %c0_42 = arith.constant 0 : index
    %c17_43 = arith.constant 17 : index
    %c0_44 = arith.constant 0 : index
    %57 = vector.load %arg9[%c0_42, %c17_43, %c0_44] : memref<10x18x4xbf16, #tpu.memory_space<vmem>>, vector<10x1x4xbf16>
    tpu.vector_store %arg9[%c0_42, %c17_43, %c0_44], %55 {strides = array<i32>} : memref<10x18x4xbf16, #tpu.memory_space<vmem>>, vector<10x1x4xbf16>,
    %58 = vector.shape_cast %54 : vector<160x4xf32> to vector<10x16x4xf32>
    %59 = arith.truncf %58 : vector<10x16x4xf32> to vector<10x16x4xbf16>
    %c0_45 = arith.constant 0 : index
    %c1_46 = arith.constant 1 : index
    %c0_47 = arith.constant 0 : index
    %60 = vector.load %arg9[%c0_45, %c1_46, %c0_47] : memref<10x18x4xbf16, #tpu.memory_space<vmem>>, vector<10x16x4xbf16>
    tpu.vector_store %arg9[%c0_45, %c1_46, %c0_47], %59 {strides = array<i32>} : memref<10x18x4xbf16, #tpu.memory_space<vmem>>, vector<10x16x4xbf16>,
    %c0_i32_48 = arith.constant 0 : i32
    %61 = arith.cmpi eq, %arg1, %c0_i32_48 : i32
    %62 = arith.extui %61 : i1 to i32
    %c0_i32_49 = arith.constant 0 : i32
    %63 = arith.cmpi ne, %62, %c0_i32_49 : i32
    scf.if %63 {
      %cst_83 = arith.constant 0.000000e+00 : bf16
      %109 = vector.broadcast %cst_83 : bf16 to vector<1x18x4xbf16>
      %c0_84 = arith.constant 0 : index
      %c0_85 = arith.constant 0 : index
      %c0_86 = arith.constant 0 : index
      %110 = vector.load %arg9[%c0_84, %c0_85, %c0_86] : memref<10x18x4xbf16, #tpu.memory_space<vmem>>, vector<1x18x4xbf16>
      tpu.vector_store %arg9[%c0_84, %c0_85, %c0_86], %109 {strides = array<i32>} : memref<10x18x4xbf16, #tpu.memory_space<vmem>>, vector<1x18x4xbf16>,
    } else {
    }
    %c1_i32_50 = arith.constant 1 : i32
    %64 = arith.cmpi eq, %arg1, %c1_i32_50 : i32
    %65 = arith.extui %64 : i1 to i32
    %c0_i32_51 = arith.constant 0 : i32
    %66 = arith.cmpi ne, %65, %c0_i32_51 : i32
    scf.if %66 {
      %cst_83 = arith.constant 0.000000e+00 : bf16
      %109 = vector.broadcast %cst_83 : bf16 to vector<1x18x4xbf16>
      %c9 = arith.constant 9 : index
      %c0_84 = arith.constant 0 : index
      %c0_85 = arith.constant 0 : index
      %110 = vector.load %arg9[%c9, %c0_84, %c0_85] : memref<10x18x4xbf16, #tpu.memory_space<vmem>>, vector<1x18x4xbf16>
      tpu.vector_store %arg9[%c9, %c0_84, %c0_85], %109 {strides = array<i32>} : memref<10x18x4xbf16, #tpu.memory_space<vmem>>, vector<1x18x4xbf16>,
    } else {
    }
    %c0_52 = arith.constant 0 : index
    %c0_53 = arith.constant 0 : index
    %c0_54 = arith.constant 0 : index
    %67 = vector.load %arg9[%c0_52, %c0_53, %c0_54] : memref<10x18x4xbf16, #tpu.memory_space<vmem>>, vector<8x18x4xbf16>
    %68 = vector.extract_strided_slice %67 {offsets = [0, 0, 0], sizes = [8, 16, 4], strides = [1, 1, 1]} : vector<8x18x4xbf16> to vector<8x16x4xbf16>
    %69 = vector.extract_strided_slice %67 {offsets = [0, 1, 0], sizes = [8, 16, 4], strides = [1, 1, 1]} : vector<8x18x4xbf16> to vector<8x16x4xbf16>
    %70 = vector.extract_strided_slice %67 {offsets = [0, 2, 0], sizes = [8, 16, 4], strides = [1, 1, 1]} : vector<8x18x4xbf16> to vector<8x16x4xbf16>
    %71 = tpu.concatenate %68, %69, %70 in 2 : vector<8x16x4xbf16>, vector<8x16x4xbf16>, vector<8x16x4xbf16> -> vector<8x16x12xbf16>
    %72 = vector.shape_cast %71 : vector<8x16x12xbf16> to vector<128x12xbf16>
    %c0_55 = arith.constant 0 : index
    %c0_56 = arith.constant 0 : index
    %c0_57 = arith.constant 0 : index
    %73 = vector.load %arg4[%c0_55, %c0_56, %c0_57] : memref<3x12x4xbf16, #tpu.memory_space<vmem>>, vector<1x12x4xbf16>
    %74 = vector.shape_cast %73 : vector<1x12x4xbf16> to vector<12x4xbf16>
    %cst_58 = arith.constant dense<0.000000e+00> : vector<128x4xf32>
    %75 = tpu.matmul %72, %74, %cst_58 {dimension_numbers = #tpu.dot_dimension_numbers<[1], [0], [0], [1], [0, 0, 1, 1], [], []>} : vector<128x12xbf16>, vector<12x4xbf16>, vector<128x4xf32> -> vector<128x4xf32>
    %c1_59 = arith.constant 1 : index
    %c0_60 = arith.constant 0 : index
    %c0_61 = arith.constant 0 : index
    %76 = vector.load %arg9[%c1_59, %c0_60, %c0_61] : memref<10x18x4xbf16, #tpu.memory_space<vmem>>, vector<8x18x4xbf16>
    %77 = vector.extract_strided_slice %76 {offsets = [0, 0, 0], sizes = [8, 16, 4], strides = [1, 1, 1]} : vector<8x18x4xbf16> to vector<8x16x4xbf16>
    %78 = vector.extract_strided_slice %76 {offsets = [0, 1, 0], sizes = [8, 16, 4], strides = [1, 1, 1]} : vector<8x18x4xbf16> to vector<8x16x4xbf16>
    %79 = vector.extract_strided_slice %76 {offsets = [0, 2, 0], sizes = [8, 16, 4], strides = [1, 1, 1]} : vector<8x18x4xbf16> to vector<8x16x4xbf16>
    %80 = tpu.concatenate %77, %78, %79 in 2 : vector<8x16x4xbf16>, vector<8x16x4xbf16>, vector<8x16x4xbf16> -> vector<8x16x12xbf16>
    %81 = vector.shape_cast %80 : vector<8x16x12xbf16> to vector<128x12xbf16>
    %c1_62 = arith.constant 1 : index
    %c0_63 = arith.constant 0 : index
    %c0_64 = arith.constant 0 : index
    %82 = vector.load %arg4[%c1_62, %c0_63, %c0_64] : memref<3x12x4xbf16, #tpu.memory_space<vmem>>, vector<1x12x4xbf16>
    %83 = vector.shape_cast %82 : vector<1x12x4xbf16> to vector<12x4xbf16>
    %cst_65 = arith.constant dense<0.000000e+00> : vector<128x4xf32>
    %84 = tpu.matmul %81, %83, %cst_65 {dimension_numbers = #tpu.dot_dimension_numbers<[1], [0], [0], [1], [0, 0, 1, 1], [], []>} : vector<128x12xbf16>, vector<12x4xbf16>, vector<128x4xf32> -> vector<128x4xf32>
    %85 = arith.addf %75, %84 : vector<128x4xf32>
    %c2_66 = arith.constant 2 : index
    %c0_67 = arith.constant 0 : index
    %c0_68 = arith.constant 0 : index
    %86 = vector.load %arg9[%c2_66, %c0_67, %c0_68] : memref<10x18x4xbf16, #tpu.memory_space<vmem>>, vector<8x18x4xbf16>
    %87 = vector.extract_strided_slice %86 {offsets = [0, 0, 0], sizes = [8, 16, 4], strides = [1, 1, 1]} : vector<8x18x4xbf16> to vector<8x16x4xbf16>
    %88 = vector.extract_strided_slice %86 {offsets = [0, 1, 0], sizes = [8, 16, 4], strides = [1, 1, 1]} : vector<8x18x4xbf16> to vector<8x16x4xbf16>
    %89 = vector.extract_strided_slice %86 {offsets = [0, 2, 0], sizes = [8, 16, 4], strides = [1, 1, 1]} : vector<8x18x4xbf16> to vector<8x16x4xbf16>
    %90 = tpu.concatenate %87, %88, %89 in 2 : vector<8x16x4xbf16>, vector<8x16x4xbf16>, vector<8x16x4xbf16> -> vector<8x16x12xbf16>
    %91 = vector.shape_cast %90 : vector<8x16x12xbf16> to vector<128x12xbf16>
    %c2_69 = arith.constant 2 : index
    %c0_70 = arith.constant 0 : index
    %c0_71 = arith.constant 0 : index
    %92 = vector.load %arg4[%c2_69, %c0_70, %c0_71] : memref<3x12x4xbf16, #tpu.memory_space<vmem>>, vector<1x12x4xbf16>
    %93 = vector.shape_cast %92 : vector<1x12x4xbf16> to vector<12x4xbf16>
    %cst_72 = arith.constant dense<0.000000e+00> : vector<128x4xf32>
    %94 = tpu.matmul %91, %93, %cst_72 {dimension_numbers = #tpu.dot_dimension_numbers<[1], [0], [0], [1], [0, 0, 1, 1], [], []>} : vector<128x12xbf16>, vector<12x4xbf16>, vector<128x4xf32> -> vector<128x4xf32>
    %95 = arith.addf %85, %94 : vector<128x4xf32>
    %c0_73 = arith.constant 0 : index
    %96 = arith.index_cast %1 : i32 to index
    %c0_74 = arith.constant 0 : index
    %c0_75 = arith.constant 0 : index
    %97 = vector.load %arg2[%c0_73, %96, %c0_74, %c0_75] : memref<1x16x16x4xbf16, #tpu.memory_space<vmem>>, vector<1x8x16x4xbf16>
    %98 = vector.shape_cast %97 : vector<1x8x16x4xbf16> to vector<8x16x4xbf16>
    %99 = arith.extf %98 : vector<8x16x4xbf16> to vector<8x16x4xf32>
    %100 = vector.shape_cast %99 : vector<8x16x4xf32> to vector<128x4xf32>
    %c0_76 = arith.constant 0 : index
    %c0_77 = arith.constant 0 : index
    %101 = vector.load %arg6[%c0_76, %c0_77] : memref<1x4xf32, #tpu.memory_space<vmem>>, vector<1x4xf32>
    %102 = vector.broadcast %101 : vector<1x4xf32> to vector<128x4xf32>
    %103 = arith.addf %95, %102 : vector<128x4xf32>
    %104 = arith.addf %103, %100 : vector<128x4xf32>
    %cst_78 = arith.constant 0.000000e+00 : f32
    %105 = vector.broadcast %cst_78 : f32 to vector<128x4xf32>
    %106 = arith.maximumf %104, %105 : vector<128x4xf32>
    %107 = vector.shape_cast %106 : vector<128x4xf32> to vector<1x8x16x4xf32>
    %c0_79 = arith.constant 0 : index
    %c0_80 = arith.constant 0 : index
    %c0_81 = arith.constant 0 : index
    %c0_82 = arith.constant 0 : index
    %108 = vector.load %arg7[%c0_79, %c0_80, %c0_81, %c0_82] : memref<1x8x16x4xf32, #tpu.memory_space<vmem>>, vector<1x8x16x4xf32>
    tpu.vector_store %arg7[%c0_79, %c0_80, %c0_81, %c0_82], %107 {strides = array<i32>} : memref<1x8x16x4xf32, #tpu.memory_space<vmem>>, vector<1x8x16x4xf32>,
    return
  }
  func.func @transform_0(%arg0: i32, %arg1: i32) -> (i32, i32, i32, i32) {
    %c0_i32 = arith.constant 0 : i32
    %c0_i32_0 = arith.constant 0 : i32
    %c0_i32_1 = arith.constant 0 : i32
    %c0_i32_2 = arith.constant 0 : i32
    return %arg0, %c0_i32, %c0_i32_0, %c0_i32_1 : i32, i32, i32, i32
  }
  func.func @transform_1(%arg0: i32, %arg1: i32) -> (i32, i32, i32) {
    %c0_i32 = arith.constant 0 : i32
    %c0_i32_0 = arith.constant 0 : i32
    %c0_i32_1 = arith.constant 0 : i32
    %c0_i32_2 = arith.constant 0 : i32
    return %c0_i32, %c0_i32_0, %c0_i32_1 : i32, i32, i32
  }
  func.func @transform_2(%arg0: i32, %arg1: i32) -> (i32, i32, i32) {
    %c0_i32 = arith.constant 0 : i32
    %c0_i32_0 = arith.constant 0 : i32
    %c0_i32_1 = arith.constant 0 : i32
    %c0_i32_2 = arith.constant 0 : i32
    return %c0_i32, %c0_i32_0, %c0_i32_1 : i32, i32, i32
  }
  func.func @transform_3(%arg0: i32, %arg1: i32) -> (i32, i32) {
    %c0_i32 = arith.constant 0 : i32
    %c0_i32_0 = arith.constant 0 : i32
    %c0_i32_1 = arith.constant 0 : i32
    return %c0_i32, %c0_i32_0 : i32, i32
  }
  func.func @transform_4(%arg0: i32, %arg1: i32) -> (i32, i32) {
    %c0_i32 = arith.constant 0 : i32
    %c0_i32_0 = arith.constant 0 : i32
    %c0_i32_1 = arith.constant 0 : i32
    return %c0_i32, %c0_i32_0 : i32, i32
  }
  func.func @transform_5(%arg0: i32, %arg1: i32) -> (i32, i32, i32, i32) {
    %c0_i32 = arith.constant 0 : i32
    %c0_i32_0 = arith.constant 0 : i32
    %c0_i32_1 = arith.constant 0 : i32
    return %arg0, %arg1, %c0_i32, %c0_i32_0 : i32, i32, i32, i32
  }
}

</mosaic_0001>

<llo_original>
// kernel: tpu_custom_call.1
$region0: #{tpu_custom_call.1}
  #allocation0 [shape = 'u32[]', space=smem, size = 0x4, offset = 0x4, fixed_abs, tag = 'smem constant byte address 0x4 - core index']
  #allocation1 [shape = 'u32[144,128]{1,0:T(1,128)}', space=vmem, size = 0x12000, scoped, tag = 'internal scratch']
  #allocation2 [shape = 'bf16[12,18,4]{2,1,0:T(8,128)(2,1)}', space=vmem, size = 0x12000, scoped, tag = 'scratch operand']
  #allocation3 [shape = 'bf16[10,18,4]{2,1,0:T(8,128)(2,1)}', space=vmem, size = 0xf000, scoped, tag = 'scratch operand']
  %s0 = inlined_call_operand.vmem [shape: bf16[2,16,16,4], index: 0, kind: input, shape index: {}]
  %s1 = inlined_call_operand.vmem [shape: bf16[3,12,4], index: 1, kind: input, shape index: {}]
  %s2 = inlined_call_operand.vmem [shape: bf16[3,12,4], index: 2, kind: input, shape index: {}]
  %s3 = inlined_call_operand.vmem [shape: f32[1,4], index: 3, kind: input, shape index: {}]
  %s4 = inlined_call_operand.vmem [shape: f32[1,4], index: 4, kind: input, shape index: {}]
  %s5 = inlined_call_operand.vmem [shape: f32[2,16,16,4], index: 5, kind: output, shape index: {}]
  %s6 = sld [smem:[#allocation0]]
  $region77: #{tpu_custom_call.1} parent=0
    _
  %s8 = ssub.s32 1, %s6
  %s9 = scalar_select 0, %s8, %s6
  loop: start=0, step=1, limit=6
  $region2: #{tpu_custom_call.1} parent=0 // loop_pre_header
    _
  $region3: #{tpu_custom_call.1} parent=0 // loop_header
    %s11 = sphi 0, %s15
    %p12 = scmp.ge.s32.totalorder %s11, 6
    %s18 = sphi 0, %s30
    %s19 = sphi 0, %s26
    %s20 = sphi 0, %s18
    %s21 = sphi 0, %s19
    %s22 = sphi 0, %s20
    %s23 = sphi 0, %s21
    %s33 = sphi 0, %s35
    %s36 = sphi 0, %s33
    %s37 = sphi 0, %s36
    %s53 = sphi 0, %s37
    %s57 = sphi 0, %s57
    %s59 = sphi 0, %s57
    %s60 = sphi 0, %s59
    %s74 = sphi 0, %s60
    %s78 = sphi 0, %s78
    %s80 = sphi 0, %s78
    %s81 = sphi 0, %s80
    %s95 = sphi 0, %s81
    %s99 = sphi 0, %s99
    %s101 = sphi 0, %s99
    %s102 = sphi 0, %s101
    %s116 = sphi 0, %s102
    %s120 = sphi 0, %s120
    %s122 = sphi 0, %s120
    %s123 = sphi 0, %s122
    %s137 = sphi 0, %s123
    %s145 = sphi 0, %s147
    %s148 = sphi 0, %s145
    %s149 = sphi 0, %s148
    %s165 = sphi 0, %s149
  $region4: #{tpu_custom_call.1} parent=0 // loop_header_branch
    %14 = sbr.rel (%p12) target = $region8
  $region5: #{tpu_custom_call.1} parent=0 // loop_body
    %s16 = ssub.s32 %s11, 1
    %s17 = ssub.s32 %s11, 2
    %s24 = sadd.s32 1, %s19
    %p25 = scmp.ge.s32.totalorder %s24, 2
    %s26 = scalar_select %p25, 0, %s24
    %s27 = sadd.s32 1, %s18
    %s28 = scalar_select %p25, %s27, %s18
    %p29 = scmp.ge.s32.totalorder %s28, 2
    %s30 = scalar_select %p29, 0, %s28
    %s31 = ssub.s32 %s18, %s30
    %p32 = scmp.eq.s32.totalorder %s31, 0
    %s34 = sadd.s32 %s33, 1
    %s35 = scalar_select %p32, %s33, %s34
    %p38 = pneg %p32
    %p39 = scmp.eq.s32.totalorder %s11, 3
    %p40 = por %p38, %p39
    %p41 = scmp.ne.s32.totalorder %s33, %s36
    %p42 = scmp.eq.s32.totalorder %s11, 0
    %p43 = por %p41, %p42
    %p44 = scmp.ne.s32.totalorder %s33, %s36
    %p45 = scmp.eq.s32.totalorder %s16, 3
    %p46 = por %p44, %p45
    %p47 = scmp.ne.s32.totalorder %s36, %s37
    %p48 = scmp.eq.s32.totalorder %s16, 0
    %p49 = por %p47, %p48
    %p50 = scmp.ne.s32.totalorder %s36, %s37
    %p51 = scmp.eq.s32.totalorder %s17, 3
    %p52 = por %p50, %p51
    %p54 = scmp.ne.s32.totalorder %s37, %s53
    %p55 = scmp.eq.s32.totalorder %s17, 0
    %p56 = por %p54, %p55
    %s58 = sadd.s32 %s57, 1
    %p61 = scmp.eq.s32.totalorder %s11, 3
    %p62 = scmp.ne.s32.totalorder %s57, %s59
    %p63 = scmp.eq.s32.totalorder %s11, 0
    %p64 = por %p62, %p63
    %p65 = scmp.ne.s32.totalorder %s57, %s59
    %p66 = scmp.eq.s32.totalorder %s16, 3
    %p67 = por %p65, %p66
    %p68 = scmp.ne.s32.totalorder %s59, %s60
    %p69 = scmp.eq.s32.totalorder %s16, 0
    %p70 = por %p68, %p69
    %p71 = scmp.ne.s32.totalorder %s59, %s60
    %p72 = scmp.eq.s32.totalorder %s17, 3
    %p73 = por %p71, %p72
    %p75 = scmp.ne.s32.totalorder %s60, %s74
    %p76 = scmp.eq.s32.totalorder %s17, 0
    %p77 = por %p75, %p76
    %s79 = sadd.s32 %s78, 1
    %p82 = scmp.eq.s32.totalorder %s11, 3
    %p83 = scmp.ne.s32.totalorder %s78, %s80
    %p84 = scmp.eq.s32.totalorder %s11, 0
    %p85 = por %p83, %p84
    %p86 = scmp.ne.s32.totalorder %s78, %s80
    %p87 = scmp.eq.s32.totalorder %s16, 3
    %p88 = por %p86, %p87
    %p89 = scmp.ne.s32.totalorder %s80, %s81
    %p90 = scmp.eq.s32.totalorder %s16, 0
    %p91 = por %p89, %p90
    %p92 = scmp.ne.s32.totalorder %s80, %s81
    %p93 = scmp.eq.s32.totalorder %s17, 3
    %p94 = por %p92, %p93
    %p96 = scmp.ne.s32.totalorder %s81, %s95
    %p97 = scmp.eq.s32.totalorder %s17, 0
    %p98 = por %p96, %p97
    %s100 = sadd.s32 %s99, 1
    %p103 = scmp.eq.s32.totalorder %s11, 3
    %p104 = scmp.ne.s32.totalorder %s99, %s101
    %p105 = scmp.eq.s32.totalorder %s11, 0
    %p106 = por %p104, %p105
    %p107 = scmp.ne.s32.totalorder %s99, %s101
    %p108 = scmp.eq.s32.totalorder %s16, 3
    %p109 = por %p107, %p108
    %p110 = scmp.ne.s32.totalorder %s101, %s102
    %p111 = scmp.eq.s32.totalorder %s16, 0
    %p112 = por %p110, %p111
    %p113 = scmp.ne.s32.totalorder %s101, %s102
    %p114 = scmp.eq.s32.totalorder %s17, 3
    %p115 = por %p113, %p114
    %p117 = scmp.ne.s32.totalorder %s102, %s116
    %p118 = scmp.eq.s32.totalorder %s17, 0
    %p119 = por %p117, %p118
    %s121 = sadd.s32 %s120, 1
    %p124 = scmp.eq.s32.totalorder %s11, 3
    %p125 = scmp.ne.s32.totalorder %s120, %s122
    %p126 = scmp.eq.s32.totalorder %s11, 0
    %p127 = por %p125, %p126
    %p128 = scmp.ne.s32.totalorder %s120, %s122
    %p129 = scmp.eq.s32.totalorder %s16, 3
    %p130 = por %p128, %p129
    %p131 = scmp.ne.s32.totalorder %s122, %s123
    %p132 = scmp.eq.s32.totalorder %s16, 0
    %p133 = por %p131, %p132
    %p134 = scmp.ne.s32.totalorder %s122, %s123
    %p135 = scmp.eq.s32.totalorder %s17, 3
    %p136 = por %p134, %p135
    %p138 = scmp.ne.s32.totalorder %s123, %s137
    %p139 = scmp.eq.s32.totalorder %s17, 0
    %p140 = por %p138, %p139
    %s141 = ssub.s32 %s18, %s30
    %s142 = ssub.s32 %s19, %s26
    %s143 = sor.u32 %s141, %s142
    %p144 = scmp.eq.s32.totalorder %s143, 0
    %s146 = sadd.s32 %s145, 1
    %s147 = scalar_select %p144, %s145, %s146
    %p150 = pneg %p144
    %p151 = scmp.eq.s32.totalorder %s11, 3
    %p152 = por %p150, %p151
    %p153 = scmp.ne.s32.totalorder %s145, %s148
    %p154 = scmp.eq.s32.totalorder %s11, 0
    %p155 = por %p153, %p154
    %p156 = scmp.ne.s32.totalorder %s145, %s148
    %p157 = scmp.eq.s32.totalorder %s16, 3
    %p158 = por %p156, %p157
    %p159 = scmp.ne.s32.totalorder %s148, %s149
    %p160 = scmp.eq.s32.totalorder %s16, 0
    %p161 = por %p159, %p160
    %p162 = scmp.ne.s32.totalorder %s148, %s149
    %p163 = scmp.eq.s32.totalorder %s17, 3
    %p164 = por %p162, %p163
    %p166 = scmp.ne.s32.totalorder %s149, %s165
    %p167 = scmp.eq.s32.totalorder %s17, 0
    %p168 = por %p166, %p167
    %p169 = scmp.le.s32.totalorder 1, %s11
    %p170 = scmp.lt.s32.totalorder %s11, 5
    %p171 = pnand %p169, %p170
    %p172 = pneg %p171
    // Predicated region
    $region9: #{tpu_custom_call.1} parent=5 // pred_check
      _
    $region10: #{tpu_custom_call.1} parent=5 // pred_check_branch
      %174 = sbr.rel (%p171) target = $region12
    $region11: #{tpu_custom_call.1} parent=5 // pred_region
      %s175 = ssub.s32 %s11, 1
      // Predicated region
      $region13: #{tpu_custom_call.1} parent=11 // pred_check
        %p176 = pneg %p70
      $region14: #{tpu_custom_call.1} parent=11 // pred_check_branch
        %178 = sbr.rel (%p176) target = $region16
      $region15: #{tpu_custom_call.1} parent=11 // pred_region
        _
      $region16: #{tpu_custom_call.1} parent=11 // pred_fallthru
        _
      // Predicated region
      $region17: #{tpu_custom_call.1} parent=11 // pred_check
        %p179 = pneg %p91
      $region18: #{tpu_custom_call.1} parent=11 // pred_check_branch
        %181 = sbr.rel (%p179) target = $region20
      $region19: #{tpu_custom_call.1} parent=11 // pred_region
        _
      $region20: #{tpu_custom_call.1} parent=11 // pred_fallthru
        _
      // Predicated region
      $region21: #{tpu_custom_call.1} parent=11 // pred_check
        %p182 = pneg %p112
      $region22: #{tpu_custom_call.1} parent=11 // pred_check_branch
        %184 = sbr.rel (%p182) target = $region24
      $region23: #{tpu_custom_call.1} parent=11 // pred_region
        _
      $region24: #{tpu_custom_call.1} parent=11 // pred_fallthru
        _
      // Predicated region
      $region25: #{tpu_custom_call.1} parent=11 // pred_check
        %p185 = pneg %p133
      $region26: #{tpu_custom_call.1} parent=11 // pred_check_branch
        %187 = sbr.rel (%p185) target = $region28
      $region27: #{tpu_custom_call.1} parent=11 // pred_region
        _
      $region28: #{tpu_custom_call.1} parent=11 // pred_fallthru
        _
    $region12: #{tpu_custom_call.1} parent=5 // pred_fallthru
      _
    %p188 = scmp.lt.s32.totalorder %s11, 4
    // Predicated region
    $region29: #{tpu_custom_call.1} parent=5 // pred_check
      %p189 = pneg %p188
    $region30: #{tpu_custom_call.1} parent=5 // pred_check_branch
      %191 = sbr.rel (%p189) target = $region32
    $region31: #{tpu_custom_call.1} parent=5 // pred_region
      // Predicated region
      $region33: #{tpu_custom_call.1} parent=31 // pred_check
        %p192 = pneg %p43
      $region34: #{tpu_custom_call.1} parent=31 // pred_check_branch
        %194 = sbr.rel (%p192) target = $region36
      $region35: #{tpu_custom_call.1} parent=31 // pred_region
        %p195 = scmp.lt.s32.totalorder %s18, 1
        %s196 = scalar_select %p195, %s18, 1
        %s197 = smul.addr %s196, 32
        %s198 = smul.addr %s197, 4
        %s199 = scalar_lea.vmem %s0, %s198
      $region36: #{tpu_custom_call.1} parent=31 // pred_fallthru
        _
    $region32: #{tpu_custom_call.1} parent=5 // pred_fallthru
      _
    %p200 = scmp.le.s32.totalorder 1, %s11
    %p201 = scmp.lt.s32.totalorder %s11, 5
    %p202 = pnand %p200, %p201
    %p203 = pneg %p202
    // Predicated region
    $region37: #{tpu_custom_call.1} parent=5 // pred_check
      _
    $region38: #{tpu_custom_call.1} parent=5 // pred_check_branch
      %205 = sbr.rel (%p202) target = $region40
    $region39: #{tpu_custom_call.1} parent=5 // pred_region
      %s206 = ssub.s32 %s11, 1
      %p207 = scmp.lt.s32.totalorder %s20, 1
      %s208 = scalar_select %p207, %s20, 1
      %s209 = smul.addr %s208, 32
      %s210 = smul.addr %s209, 4
      %s211 = scalar_lea.vmem %s0, %s210
      %p212 = pneg %p49
      %p213 = pneg %p46
      %p214 = pneg %p70
      %p215 = pneg %p67
      %p216 = pneg %p91
      %p217 = pneg %p88
      %p218 = pneg %p112
      %p219 = pneg %p109
      %p220 = pneg %p133
      %p221 = pneg %p130
      %p222 = pneg %p161
      %p223 = pneg %p158
      %s224 = smul.u32 8, %s21
      %p225 = scmp.lt.s32.totalorder %s20, 1
      %s226 = scalar_select %p225, %s20, 1
      %p227 = scmp.lt.s32.totalorder %s224, 15
      %s228 = scalar_select %p227, %s224, 15
      %s229 = smul.addr %s228, 2
      %s230 = smul.addr %s226, 32
      %s231 = sadd.s32 %s229, %s230
      %s232 = smul.addr %s231, 8
      %s233 = scalar_lea.vmem %s5, %s232
      %p234 = scmp.lt.s32.totalorder %s20, 1
      %s235 = scalar_select %p234, %s20, 1
      %s236 = smul.addr %s235, 32
      %s237 = smul.addr %s236, 4
      %s238 = scalar_lea.vmem %s0, %s237
      %s239 = smul.u32 8, %s21
      %p240 = scmp.lt.s32.totalorder %s20, 1
      %s241 = scalar_select %p240, %s20, 1
      %p242 = scmp.lt.s32.totalorder %s239, 15
      %s243 = scalar_select %p242, %s239, 15
      %s244 = smul.addr %s243, 2
      %s245 = smul.addr %s241, 32
      %s246 = sadd.s32 %s244, %s245
      %s247 = smul.addr %s246, 8
      %s248 = scalar_lea.vmem %s5, %s247
      %s249 = smul.u32 8, %s21
      %s251 = smul.u32 %s21, 8
      %vm252 = vcmask 24576
      %vm253 = vsmask.f32 256
      %vm254 = vmand %vm252, %vm253
      %v255 = vld [vmem:[#allocation2] sm:$0x1]
      %v256 = vsel %vm254, 0, %v255
      %257 = vst [vmem:[#allocation2] sm:$0x1] %v256
      %v258 = vld [vmem:[#allocation2 + $0xc] sm:$0x1]
      %v259 = vsel %vm254, 0, %v258
      %260 = vst [vmem:[#allocation2 + $0xc] sm:$0x1] %v259
      %v261 = vld [vmem:[#allocation2 + $0x18] sm:$0x1]
      %v262 = vsel %vm254, 0, %v261
      %263 = vst [vmem:[#allocation2 + $0x18] sm:$0x1] %v262
      %v264 = vld [vmem:[#allocation2 + $0x24] sm:$0x1]
      %v265 = vsel %vm254, 0, %v264
      %266 = vst [vmem:[#allocation2 + $0x24] sm:$0x1] %v265
      %v267 = vld [vmem:[#allocation2 + $0x30] sm:$0x1]
      %v268 = vsel %vm254, 0, %v267
      %269 = vst [vmem:[#allocation2 + $0x30] sm:$0x1] %v268
      %v270 = vld [vmem:[#allocation2 + $0x3c] sm:$0x1]
      %v271 = vsel %vm254, 0, %v270
      %272 = vst [vmem:[#allocation2 + $0x3c] sm:$0x1] %v271
      %v273 = vld [vmem:[#allocation2 + $0x48] sm:$0x1]
      %v274 = vsel %vm254, 0, %v273
      %275 = vst [vmem:[#allocation2 + $0x48] sm:$0x1] %v274
      %v276 = vld [vmem:[#allocation2 + $0x54] sm:$0x1]
      %v277 = vsel %vm254, 0, %v276
      %278 = vst [vmem:[#allocation2 + $0x54] sm:$0x1] %v277
      %v279 = vld [vmem:[#allocation2 + $0x60] sm:$0x1]
      %v280 = vsel %vm254, 0, %v279
      %281 = vst [vmem:[#allocation2 + $0x60] sm:$0x1] %v280
      %v282 = vld [vmem:[#allocation2 + $0x6c] sm:$0x1]
      %v283 = vsel %vm254, 0, %v282
      %284 = vst [vmem:[#allocation2 + $0x6c] sm:$0x1] %v283
      %v285 = vld [vmem:[#allocation2 + $0x78] sm:$0x1]
      %v286 = vsel %vm254, 0, %v285
      %287 = vst [vmem:[#allocation2 + $0x78] sm:$0x1] %v286
      %v288 = vld [vmem:[#allocation2 + $0x84] sm:$0x1]
      %v289 = vsel %vm254, 0, %v288
      %290 = vst [vmem:[#allocation2 + $0x84] sm:$0x1] %v289
      %vm291 = vsmask.f32 7938
      %vm292 = vmand %vm252, %vm291
      %v293 = vld [vmem:[#allocation2 + $0x8] sm:$0x1]
      %v294 = vsel %vm292, 0, %v293
      %295 = vst [vmem:[#allocation2 + $0x8] sm:$0x1] %v294
      %v296 = vld [vmem:[#allocation2 + $0x14] sm:$0x1]
      %v297 = vsel %vm292, 0, %v296
      %298 = vst [vmem:[#allocation2 + $0x14] sm:$0x1] %v297
      %v299 = vld [vmem:[#allocation2 + $0x20] sm:$0x1]
      %v300 = vsel %vm292, 0, %v299
      %301 = vst [vmem:[#allocation2 + $0x20] sm:$0x1] %v300
      %v302 = vld [vmem:[#allocation2 + $0x2c] sm:$0x1]
      %v303 = vsel %vm292, 0, %v302
      %304 = vst [vmem:[#allocation2 + $0x2c] sm:$0x1] %v303
      %v305 = vld [vmem:[#allocation2 + $0x38] sm:$0x1]
      %v306 = vsel %vm292, 0, %v305
      %307 = vst [vmem:[#allocation2 + $0x38] sm:$0x1] %v306
      %v308 = vld [vmem:[#allocation2 + $0x44] sm:$0x1]
      %v309 = vsel %vm292, 0, %v308
      %310 = vst [vmem:[#allocation2 + $0x44] sm:$0x1] %v309
      %v311 = vld [vmem:[#allocation2 + $0x50] sm:$0x1]
      %v312 = vsel %vm292, 0, %v311
      %313 = vst [vmem:[#allocation2 + $0x50] sm:$0x1] %v312
      %v314 = vld [vmem:[#allocation2 + $0x5c] sm:$0x1]
      %v315 = vsel %vm292, 0, %v314
      %316 = vst [vmem:[#allocation2 + $0x5c] sm:$0x1] %v315
      %v317 = vld [vmem:[#allocation2 + $0x68] sm:$0x1]
      %v318 = vsel %vm292, 0, %v317
      %319 = vst [vmem:[#allocation2 + $0x68] sm:$0x1] %v318
      %v320 = vld [vmem:[#allocation2 + $0x74] sm:$0x1]
      %v321 = vsel %vm292, 0, %v320
      %322 = vst [vmem:[#allocation2 + $0x74] sm:$0x1] %v321
      %v323 = vld [vmem:[#allocation2 + $0x80] sm:$0x1]
      %v324 = vsel %vm292, 0, %v323
      %325 = vst [vmem:[#allocation2 + $0x80] sm:$0x1] %v324
      %v326 = vld [vmem:[#allocation2 + $0x8c] sm:$0x1]
      %v327 = vsel %vm292, 0, %v326
      %328 = vst [vmem:[#allocation2 + $0x8c] sm:$0x1] %v327
      %s329 = smul.u32 %s251, 2
      %s330 = smul.addr %s329, 4
      %s331 = scalar_lea.vmem %s238, %s330
      %v332 = vld [vmem:[%s331] sm:$0xf]
      %v333 = vld [vmem:[%s331 + $0x4] sm:$0xf]
      %v334 = vld [vmem:[%s331 + $0x8] sm:$0xf]
      %v335 = vld [vmem:[%s331 + $0xc] sm:$0xf]
      %v336 = vld [vmem:[%s331 + $0x10] sm:$0xf]
      %v337 = vld [vmem:[%s331 + $0x14] sm:$0xf]
      %v338 = vld [vmem:[%s331 + $0x18] sm:$0xf]
      %v339 = vld [vmem:[%s331 + $0x1c] sm:$0xf]
      %v340 = vld [vmem:[%s331 + $0x20] sm:$0xf]
      %v341 = vld [vmem:[%s331 + $0x24] sm:$0xf]
      %v342 = vld [vmem:[%s331 + $0x28] sm:$0xf]
      %v343 = vld [vmem:[%s331 + $0x2c] sm:$0xf]
      %v344 = vld [vmem:[%s331 + $0x30] sm:$0xf]
      %v345 = vld [vmem:[%s331 + $0x34] sm:$0xf]
      %v346 = vld [vmem:[%s331 + $0x38] sm:$0xf]
      %v347 = vld [vmem:[%s331 + $0x3c] sm:$0xf]
      %vm348 = vsmask.f32 4368
      %vm349 = vmor %vm253, %vm348
      %v351 = vshrl.u32 %v332, 16
      %v353 = vrot.slane %v351, 7
      %v354 = vshll.u32 %v332, 16
      %v356 = vor.u32 %v353, %v354
      %v357 = vrot.slane %v353, 4
      %v359 = vshrl.u32 %v333, 16
      %v361 = vrot.slane %v359, 7
      %v362 = vshll.u32 %v333, 16
      %v364 = vor.u32 %v361, %v362
      %v365 = vsel %vm349, %v357, %v364
      %v366 = vrot.slane %v361, 4
      %v368 = vshrl.u32 %v334, 16
      %v370 = vrot.slane %v368, 7
      %v371 = vshll.u32 %v334, 16
      %v373 = vor.u32 %v370, %v371
      %v374 = vrot.slane %v370, 4
      %v376 = vshrl.u32 %v335, 16
      %v378 = vrot.slane %v376, 7
      %v379 = vshll.u32 %v335, 16
      %v381 = vor.u32 %v378, %v379
      %v382 = vsel %vm349, %v374, %v381
      %v383 = vrot.slane %v378, 4
      %v385 = vshrl.u32 %v336, 16
      %v387 = vrot.slane %v385, 7
      %v388 = vshll.u32 %v336, 16
      %v390 = vor.u32 %v387, %v388
      %v391 = vrot.slane %v387, 4
      %v393 = vshrl.u32 %v337, 16
      %v395 = vrot.slane %v393, 7
      %v396 = vshll.u32 %v337, 16
      %v398 = vor.u32 %v395, %v396
      %v399 = vsel %vm349, %v391, %v398
      %v400 = vrot.slane %v395, 4
      %v402 = vshrl.u32 %v338, 16
      %v404 = vrot.slane %v402, 7
      %v405 = vshll.u32 %v338, 16
      %v407 = vor.u32 %v404, %v405
      %v408 = vrot.slane %v404, 4
      %v410 = vshrl.u32 %v339, 16
      %v412 = vrot.slane %v410, 7
      %v413 = vshll.u32 %v339, 16
      %v415 = vor.u32 %v412, %v413
      %v416 = vsel %vm349, %v408, %v415
      %v417 = vrot.slane %v412, 4
      %v419 = vshrl.u32 %v340, 16
      %v421 = vrot.slane %v419, 7
      %v422 = vshll.u32 %v340, 16
      %v424 = vor.u32 %v421, %v422
      %v425 = vrot.slane %v421, 4
      %v427 = vshrl.u32 %v341, 16
      %v429 = vrot.slane %v427, 7
      %v430 = vshll.u32 %v341, 16
      %v432 = vor.u32 %v429, %v430
      %v433 = vsel %vm349, %v425, %v432
      %v434 = vrot.slane %v429, 4
      %v436 = vshrl.u32 %v342, 16
      %v438 = vrot.slane %v436, 7
      %v439 = vshll.u32 %v342, 16
      %v441 = vor.u32 %v438, %v439
      %v442 = vrot.slane %v438, 4
      %v444 = vshrl.u32 %v343, 16
      %v446 = vrot.slane %v444, 7
      %v447 = vshll.u32 %v343, 16
      %v449 = vor.u32 %v446, %v447
      %v450 = vsel %vm349, %v442, %v449
      %v451 = vrot.slane %v446, 4
      %v453 = vshrl.u32 %v344, 16
      %v455 = vrot.slane %v453, 7
      %v456 = vshll.u32 %v344, 16
      %v458 = vor.u32 %v455, %v456
      %v459 = vrot.slane %v455, 4
      %v461 = vshrl.u32 %v345, 16
      %v463 = vrot.slane %v461, 7
      %v464 = vshll.u32 %v345, 16
      %v466 = vor.u32 %v463, %v464
      %v467 = vsel %vm349, %v459, %v466
      %v468 = vrot.slane %v463, 4
      %v470 = vshrl.u32 %v346, 16
      %v472 = vrot.slane %v470, 7
      %v473 = vshll.u32 %v346, 16
      %v475 = vor.u32 %v472, %v473
      %v476 = vrot.slane %v472, 4
      %v478 = vshrl.u32 %v347, 16
      %v480 = vrot.slane %v478, 7
      %v481 = vshll.u32 %v347, 16
      %v483 = vor.u32 %v480, %v481
      %v484 = vsel %vm349, %v476, %v483
      %v485 = vrot.slane %v480, 4
      %s510 = scalar_lea.vmem [#allocation2], 24
      %vm511 = vcmask 27648
      %vm512 = vmand %vm511, %vm291
      %v513 = vld [vmem:[%s510] sm:$0xf]
      %v514 = vsel %vm512, %v356, %v513
      %515 = vst [vmem:[%s510] sm:$0xf] %v514
      %vm516 = vcmask 27648
      %517 = vst.msk [vmem:[%s510 + $0x4] sm:$0xf] %vm516, %v365
      %v518 = vld [vmem:[%s510 + $0x8] sm:$0x1]
      %v519 = vsel %vm254, %v366, %v518
      %520 = vst [vmem:[%s510 + $0x8] sm:$0x1] %v519
      %v521 = vld [vmem:[%s510 + $0xc] sm:$0xf]
      %v522 = vsel %vm512, %v373, %v521
      %523 = vst [vmem:[%s510 + $0xc] sm:$0xf] %v522
      %524 = vst.msk [vmem:[%s510 + $0x10] sm:$0xf] %vm516, %v382
      %v525 = vld [vmem:[%s510 + $0x14] sm:$0x1]
      %v526 = vsel %vm254, %v383, %v525
      %527 = vst [vmem:[%s510 + $0x14] sm:$0x1] %v526
      %v528 = vld [vmem:[%s510 + $0x18] sm:$0xf]
      %v529 = vsel %vm512, %v390, %v528
      %530 = vst [vmem:[%s510 + $0x18] sm:$0xf] %v529
      %531 = vst.msk [vmem:[%s510 + $0x1c] sm:$0xf] %vm516, %v399
      %v532 = vld [vmem:[%s510 + $0x20] sm:$0x1]
      %v533 = vsel %vm254, %v400, %v532
      %534 = vst [vmem:[%s510 + $0x20] sm:$0x1] %v533
      %v535 = vld [vmem:[%s510 + $0x24] sm:$0xf]
      %v536 = vsel %vm512, %v407, %v535
      %537 = vst [vmem:[%s510 + $0x24] sm:$0xf] %v536
      %538 = vst.msk [vmem:[%s510 + $0x28] sm:$0xf] %vm516, %v416
      %v539 = vld [vmem:[%s510 + $0x2c] sm:$0x1]
      %v540 = vsel %vm254, %v417, %v539
      %541 = vst [vmem:[%s510 + $0x2c] sm:$0x1] %v540
      %v542 = vld [vmem:[%s510 + $0x30] sm:$0xf]
      %v543 = vsel %vm512, %v424, %v542
      %544 = vst [vmem:[%s510 + $0x30] sm:$0xf] %v543
      %545 = vst.msk [vmem:[%s510 + $0x34] sm:$0xf] %vm516, %v433
      %v546 = vld [vmem:[%s510 + $0x38] sm:$0x1]
      %v547 = vsel %vm254, %v434, %v546
      %548 = vst [vmem:[%s510 + $0x38] sm:$0x1] %v547
      %v549 = vld [vmem:[%s510 + $0x3c] sm:$0xf]
      %v550 = vsel %vm512, %v441, %v549
      %551 = vst [vmem:[%s510 + $0x3c] sm:$0xf] %v550
      %552 = vst.msk [vmem:[%s510 + $0x40] sm:$0xf] %vm516, %v450
      %v553 = vld [vmem:[%s510 + $0x44] sm:$0x1]
      %v554 = vsel %vm254, %v451, %v553
      %555 = vst [vmem:[%s510 + $0x44] sm:$0x1] %v554
      %v556 = vld [vmem:[%s510 + $0x48] sm:$0xf]
      %v557 = vsel %vm512, %v458, %v556
      %558 = vst [vmem:[%s510 + $0x48] sm:$0xf] %v557
      %559 = vst.msk [vmem:[%s510 + $0x4c] sm:$0xf] %vm516, %v467
      %v560 = vld [vmem:[%s510 + $0x50] sm:$0x1]
      %v561 = vsel %vm254, %v468, %v560
      %562 = vst [vmem:[%s510 + $0x50] sm:$0x1] %v561
      %v563 = vld [vmem:[%s510 + $0x54] sm:$0xf]
      %v564 = vsel %vm512, %v475, %v563
      %565 = vst [vmem:[%s510 + $0x54] sm:$0xf] %v564
      %566 = vst.msk [vmem:[%s510 + $0x58] sm:$0xf] %vm516, %v484
      %v567 = vld [vmem:[%s510 + $0x5c] sm:$0x1]
      %v568 = vsel %vm254, %v485, %v567
      %569 = vst [vmem:[%s510 + $0x5c] sm:$0x1] %v568
      %p570 = scmp.gt.s32.totalorder %s21, 0
      // Predicated region
      $region41: #{tpu_custom_call.1} parent=39 // pred_check
        %p571 = pneg %p570
      $region42: #{tpu_custom_call.1} parent=39 // pred_check_branch
        %573 = sbr.rel (%p571) target = $region44
      $region43: #{tpu_custom_call.1} parent=39 // pred_region
        %s574 = ssub.s32 %s251, 2
        %s575 = smul.u32 %s574, 2
        %s576 = smul.addr %s575, 4
        %s577 = scalar_lea.vmem %s238, %s576
        %v578 = vld [vmem:[%s577] sm:$0xf]
        %v579 = vld [vmem:[%s577 + $0x4] sm:$0xf]
        %v580 = vld [vmem:[%s577 + $0x8] sm:$0xf]
        %v581 = vld [vmem:[%s577 + $0xc] sm:$0xf]
        %v583 = vshrl.u32 %v578, 16
        %v585 = vrot.slane %v583, 7
        %v586 = vshll.u32 %v578, 16
        %v588 = vor.u32 %v585, %v586
        %v589 = vrot.slane %v585, 4
        %v591 = vshrl.u32 %v579, 16
        %v593 = vrot.slane %v591, 7
        %v594 = vshll.u32 %v579, 16
        %v596 = vor.u32 %v593, %v594
        %v597 = vsel %vm349, %v589, %v596
        %v598 = vrot.slane %v593, 4
        %v600 = vshrl.u32 %v580, 16
        %v602 = vrot.slane %v600, 7
        %v603 = vshll.u32 %v580, 16
        %v605 = vor.u32 %v602, %v603
        %v606 = vrot.slane %v602, 4
        %v608 = vshrl.u32 %v581, 16
        %v610 = vrot.slane %v608, 7
        %v611 = vshll.u32 %v581, 16
        %v613 = vor.u32 %v610, %v611
        %v614 = vsel %vm349, %v606, %v613
        %v615 = vrot.slane %v610, 4
        %v622 = vld [vmem:[#allocation2] sm:$0xf]
        %v623 = vsel %vm512, %v588, %v622
        %624 = vst [vmem:[#allocation2] sm:$0xf] %v623
        %625 = vst.msk [vmem:[#allocation2 + $0x4] sm:$0xf] %vm516, %v597
        %v626 = vld [vmem:[#allocation2 + $0x8] sm:$0x1]
        %v627 = vsel %vm254, %v598, %v626
        %628 = vst [vmem:[#allocation2 + $0x8] sm:$0x1] %v627
        %v629 = vld [vmem:[#allocation2 + $0xc] sm:$0xf]
        %v630 = vsel %vm512, %v605, %v629
        %631 = vst [vmem:[#allocation2 + $0xc] sm:$0xf] %v630
        %632 = vst.msk [vmem:[#allocation2 + $0x10] sm:$0xf] %vm516, %v614
        %v633 = vld [vmem:[#allocation2 + $0x14] sm:$0x1]
        %v634 = vsel %vm254, %v615, %v633
        %635 = vst [vmem:[#allocation2 + $0x14] sm:$0x1] %v634
      $region44: #{tpu_custom_call.1} parent=39 // pred_fallthru
        _
      %p636 = scmp.eq.s32.totalorder %s21, 0
      // Predicated region
      $region45: #{tpu_custom_call.1} parent=39 // pred_check
        %p637 = pneg %p636
      $region46: #{tpu_custom_call.1} parent=39 // pred_check_branch
        %639 = sbr.rel (%p637) target = $region48
      $region47: #{tpu_custom_call.1} parent=39 // pred_region
        %640 = vst.msk [vmem:[#allocation2] sm:$0xf] %vm516, 0
        %641 = vst.msk [vmem:[#allocation2 + $0x4] sm:$0xf] %vm516, 0
        %vm642 = vcmask 24576
        %643 = vst.msk [vmem:[#allocation2 + $0x8] sm:$0x1] %vm642, 0
        %644 = vst.msk [vmem:[#allocation2 + $0xc] sm:$0xf] %vm516, 0
        %645 = vst.msk [vmem:[#allocation2 + $0x10] sm:$0xf] %vm516, 0
        %646 = vst.msk [vmem:[#allocation2 + $0x14] sm:$0x1] %vm642, 0
      $region48: #{tpu_custom_call.1} parent=39 // pred_fallthru
        _
      %p647 = scmp.lt.s32.totalorder %s21, 1
      // Predicated region
      $region49: #{tpu_custom_call.1} parent=39 // pred_check
        %p648 = pneg %p647
      $region50: #{tpu_custom_call.1} parent=39 // pred_check_branch
        %650 = sbr.rel (%p648) target = $region52
      $region51: #{tpu_custom_call.1} parent=39 // pred_region
        %s651 = sadd.s32 %s251, 8
        %s652 = smul.u32 %s651, 2
        %s653 = smul.addr %s652, 4
        %s654 = scalar_lea.vmem %s238, %s653
        %v655 = vld [vmem:[%s654] sm:$0xf]
        %v656 = vld [vmem:[%s654 + $0x4] sm:$0xf]
        %v657 = vld [vmem:[%s654 + $0x8] sm:$0xf]
        %v658 = vld [vmem:[%s654 + $0xc] sm:$0xf]
        %v660 = vshrl.u32 %v655, 16
        %v662 = vrot.slane %v660, 7
        %v663 = vshll.u32 %v655, 16
        %v665 = vor.u32 %v662, %v663
        %v666 = vrot.slane %v662, 4
        %v668 = vshrl.u32 %v656, 16
        %v670 = vrot.slane %v668, 7
        %v671 = vshll.u32 %v656, 16
        %v673 = vor.u32 %v670, %v671
        %v674 = vsel %vm349, %v666, %v673
        %v675 = vrot.slane %v670, 4
        %v677 = vshrl.u32 %v657, 16
        %v679 = vrot.slane %v677, 7
        %v680 = vshll.u32 %v657, 16
        %v682 = vor.u32 %v679, %v680
        %v683 = vrot.slane %v679, 4
        %v685 = vshrl.u32 %v658, 16
        %v687 = vrot.slane %v685, 7
        %v688 = vshll.u32 %v658, 16
        %v690 = vor.u32 %v687, %v688
        %v691 = vsel %vm349, %v683, %v690
        %v692 = vrot.slane %v687, 4
        %s699 = scalar_lea.vmem [#allocation2], 120
        %v700 = vld [vmem:[%s699] sm:$0xf]
        %v701 = vsel %vm512, %v665, %v700
        %702 = vst [vmem:[%s699] sm:$0xf] %v701
        %703 = vst.msk [vmem:[%s699 + $0x4] sm:$0xf] %vm516, %v674
        %v704 = vld [vmem:[%s699 + $0x8] sm:$0x1]
        %v705 = vsel %vm254, %v675, %v704
        %706 = vst [vmem:[%s699 + $0x8] sm:$0x1] %v705
        %v707 = vld [vmem:[%s699 + $0xc] sm:$0xf]
        %v708 = vsel %vm512, %v682, %v707
        %709 = vst [vmem:[%s699 + $0xc] sm:$0xf] %v708
        %710 = vst.msk [vmem:[%s699 + $0x10] sm:$0xf] %vm516, %v691
        %v711 = vld [vmem:[%s699 + $0x14] sm:$0x1]
        %v712 = vsel %vm254, %v692, %v711
        %713 = vst [vmem:[%s699 + $0x14] sm:$0x1] %v712
      $region52: #{tpu_custom_call.1} parent=39 // pred_fallthru
        _
      %p714 = scmp.eq.s32.totalorder %s21, 1
      // Predicated region
      $region53: #{tpu_custom_call.1} parent=39 // pred_check
        %p715 = pneg %p714
      $region54: #{tpu_custom_call.1} parent=39 // pred_check_branch
        %717 = sbr.rel (%p715) target = $region56
      $region55: #{tpu_custom_call.1} parent=39 // pred_region
        %s718 = scalar_lea.vmem [#allocation2], 120
        %719 = vst.msk [vmem:[%s718] sm:$0xf] %vm516, 0
        %720 = vst.msk [vmem:[%s718 + $0x4] sm:$0xf] %vm516, 0
        %vm721 = vcmask 24576
        %722 = vst.msk [vmem:[%s718 + $0x8] sm:$0x1] %vm721, 0
        %723 = vst.msk [vmem:[%s718 + $0xc] sm:$0xf] %vm516, 0
        %724 = vst.msk [vmem:[%s718 + $0x10] sm:$0xf] %vm516, 0
        %725 = vst.msk [vmem:[%s718 + $0x14] sm:$0x1] %vm721, 0
      $region56: #{tpu_custom_call.1} parent=39 // pred_fallthru
        _
      %v726 = vld [vmem:[#allocation2] sm:$0xf]
      %v727 = vld [vmem:[#allocation2 + $0x4] sm:$0xf]
      %v728 = vld [vmem:[#allocation2 + $0x8] sm:$0x1]
      %v729 = vld [vmem:[#allocation2 + $0xc] sm:$0xf]
      %v730 = vld [vmem:[#allocation2 + $0x10] sm:$0xf]
      %v731 = vld [vmem:[#allocation2 + $0x14] sm:$0x1]
      %v732 = vld [vmem:[#allocation2 + $0x18] sm:$0xf]
      %v733 = vld [vmem:[#allocation2 + $0x1c] sm:$0xf]
      %v734 = vld [vmem:[#allocation2 + $0x20] sm:$0x1]
      %v735 = vld [vmem:[#allocation2 + $0x24] sm:$0xf]
      %v736 = vld [vmem:[#allocation2 + $0x28] sm:$0xf]
      %v737 = vld [vmem:[#allocation2 + $0x2c] sm:$0x1]
      %v738 = vld [vmem:[#allocation2 + $0x30] sm:$0xf]
      %v739 = vld [vmem:[#allocation2 + $0x34] sm:$0xf]
      %v740 = vld [vmem:[#allocation2 + $0x38] sm:$0x1]
      %v741 = vld [vmem:[#allocation2 + $0x3c] sm:$0xf]
      %v742 = vld [vmem:[#allocation2 + $0x40] sm:$0xf]
      %v743 = vld [vmem:[#allocation2 + $0x44] sm:$0x1]
      %v744 = vld [vmem:[#allocation2 + $0x48] sm:$0xf]
      %v745 = vld [vmem:[#allocation2 + $0x4c] sm:$0xf]
      %v746 = vld [vmem:[#allocation2 + $0x50] sm:$0x1]
      %v747 = vld [vmem:[#allocation2 + $0x54] sm:$0xf]
      %v748 = vld [vmem:[#allocation2 + $0x58] sm:$0xf]
      %v749 = vld [vmem:[#allocation2 + $0x5c] sm:$0x1]
      %v750 = vld [vmem:[#allocation2 + $0x60] sm:$0xf]
      %v751 = vld [vmem:[#allocation2 + $0x64] sm:$0xf]
      %v752 = vld [vmem:[#allocation2 + $0x68] sm:$0x1]
      %v753 = vld [vmem:[#allocation2 + $0x6c] sm:$0xf]
      %v754 = vld [vmem:[#allocation2 + $0x70] sm:$0xf]
      %v755 = vld [vmem:[#allocation2 + $0x74] sm:$0x1]
      %v776 = vunpack.c.l.b16 %v726
      %v777 = vunpack.c.l.b16 %v727
      %v778 = vunpack.c.l.b16 %v729
      %v779 = vunpack.c.l.b16 %v730
      %v780 = vunpack.c.l.b16 %v732
      %v781 = vunpack.c.l.b16 %v733
      %v782 = vunpack.c.l.b16 %v735
      %v783 = vunpack.c.l.b16 %v736
      %v784 = vunpack.c.l.b16 %v738
      %v785 = vunpack.c.l.b16 %v739
      %v786 = vunpack.c.l.b16 %v741
      %v787 = vunpack.c.l.b16 %v742
      %v788 = vunpack.c.l.b16 %v744
      %v789 = vunpack.c.l.b16 %v745
      %v790 = vunpack.c.l.b16 %v747
      %v791 = vunpack.c.l.b16 %v748
      %v792 = vunpack.c.l.b16 %v750
      %v793 = vunpack.c.l.b16 %v751
      %v794 = vunpack.c.l.b16 %v753
      %v795 = vunpack.c.l.b16 %v754
      %v796 = vpack.c.b16 %v777, %v776
      %v797 = vpack.c.b16 %v779, %v778
      %v798 = vpack.c.b16 %v781, %v780
      %v799 = vpack.c.b16 %v783, %v782
      %v800 = vpack.c.b16 %v785, %v784
      %v801 = vpack.c.b16 %v787, %v786
      %v802 = vpack.c.b16 %v789, %v788
      %v803 = vpack.c.b16 %v791, %v790
      %v804 = vpack.c.b16 %v793, %v792
      %v805 = vpack.c.b16 %v795, %v794
      %v816 = vunpack.c.l.b16 %v728
      %v817 = vunpack.c.l.b16 %v731
      %v818 = vunpack.c.l.b16 %v734
      %v819 = vunpack.c.l.b16 %v737
      %v820 = vunpack.c.l.b16 %v740
      %v821 = vunpack.c.l.b16 %v743
      %v822 = vunpack.c.l.b16 %v746
      %v823 = vunpack.c.l.b16 %v749
      %v824 = vunpack.c.l.b16 %v752
      %v825 = vunpack.c.l.b16 %v755
      %v826 = vpack.c.b16 %v816, %v816
      %v827 = vpack.c.b16 %v817, %v817
      %v828 = vpack.c.b16 %v818, %v818
      %v829 = vpack.c.b16 %v819, %v819
      %v830 = vpack.c.b16 %v820, %v820
      %v831 = vpack.c.b16 %v821, %v821
      %v832 = vpack.c.b16 %v822, %v822
      %v833 = vpack.c.b16 %v823, %v823
      %v834 = vpack.c.b16 %v824, %v824
      %v835 = vpack.c.b16 %v825, %v825
      %vm836 = vsmask.f32 7424
      %v838 = vshrl.u32 %v796, 16
      %v840 = vshll.u32 %v796, 16
      %v842 = vrot.slane %v840, 1
      %v843 = vor.u32 %v838, %v842
      %v845 = vshll.u32 %v826, 16
      %v847 = vrot.slane %v845, 1
      %v848 = vsel %vm836, %v843, %v847
      %v850 = vshrl.u32 %v797, 16
      %v852 = vshll.u32 %v797, 16
      %v854 = vrot.slane %v852, 1
      %v855 = vor.u32 %v850, %v854
      %v857 = vshll.u32 %v827, 16
      %v859 = vrot.slane %v857, 1
      %v860 = vsel %vm836, %v855, %v859
      %v862 = vshrl.u32 %v798, 16
      %v864 = vshll.u32 %v798, 16
      %v866 = vrot.slane %v864, 1
      %v867 = vor.u32 %v862, %v866
      %v869 = vshll.u32 %v828, 16
      %v871 = vrot.slane %v869, 1
      %v872 = vsel %vm836, %v867, %v871
      %v874 = vshrl.u32 %v799, 16
      %v876 = vshll.u32 %v799, 16
      %v878 = vrot.slane %v876, 1
      %v879 = vor.u32 %v874, %v878
      %v881 = vshll.u32 %v829, 16
      %v883 = vrot.slane %v881, 1
      %v884 = vsel %vm836, %v879, %v883
      %v886 = vshrl.u32 %v800, 16
      %v888 = vshll.u32 %v800, 16
      %v890 = vrot.slane %v888, 1
      %v891 = vor.u32 %v886, %v890
      %v893 = vshll.u32 %v830, 16
      %v895 = vrot.slane %v893, 1
      %v896 = vsel %vm836, %v891, %v895
      %v898 = vshrl.u32 %v801, 16
      %v900 = vshll.u32 %v801, 16
      %v902 = vrot.slane %v900, 1
      %v903 = vor.u32 %v898, %v902
      %v905 = vshll.u32 %v831, 16
      %v907 = vrot.slane %v905, 1
      %v908 = vsel %vm836, %v903, %v907
      %v910 = vshrl.u32 %v802, 16
      %v912 = vshll.u32 %v802, 16
      %v914 = vrot.slane %v912, 1
      %v915 = vor.u32 %v910, %v914
      %v917 = vshll.u32 %v832, 16
      %v919 = vrot.slane %v917, 1
      %v920 = vsel %vm836, %v915, %v919
      %v922 = vshrl.u32 %v803, 16
      %v924 = vshll.u32 %v803, 16
      %v926 = vrot.slane %v924, 1
      %v927 = vor.u32 %v922, %v926
      %v929 = vshll.u32 %v833, 16
      %v931 = vrot.slane %v929, 1
      %v932 = vsel %vm836, %v927, %v931
      %v934 = vshrl.u32 %v804, 16
      %v936 = vshll.u32 %v804, 16
      %v938 = vrot.slane %v936, 1
      %v939 = vor.u32 %v934, %v938
      %v941 = vshll.u32 %v834, 16
      %v943 = vrot.slane %v941, 1
      %v944 = vsel %vm836, %v939, %v943
      %v946 = vshrl.u32 %v805, 16
      %v948 = vshll.u32 %v805, 16
      %v950 = vrot.slane %v948, 1
      %v951 = vor.u32 %v946, %v950
      %v953 = vshll.u32 %v835, 16
      %v955 = vrot.slane %v953, 1
      %v956 = vsel %vm836, %v951, %v955
      %957 = vrot.lane.b32.xlu0 %v848, 4
      %v958 = vpop.permute.xlu0 %957
      %959 = vrot.lane.b32.xlu0 %v860, 4
      %v960 = vpop.permute.xlu0 %959
      %961 = vrot.lane.b32.xlu0 %v872, 4
      %v962 = vpop.permute.xlu0 %961
      %963 = vrot.lane.b32.xlu0 %v884, 4
      %v964 = vpop.permute.xlu0 %963
      %965 = vrot.lane.b32.xlu0 %v896, 4
      %v966 = vpop.permute.xlu0 %965
      %967 = vrot.lane.b32.xlu0 %v908, 4
      %v968 = vpop.permute.xlu0 %967
      %969 = vrot.lane.b32.xlu0 %v920, 4
      %v970 = vpop.permute.xlu0 %969
      %971 = vrot.lane.b32.xlu0 %v932, 4
      %v972 = vpop.permute.xlu0 %971
      %973 = vrot.lane.b32.xlu0 %v944, 4
      %v974 = vpop.permute.xlu0 %973
      %975 = vrot.lane.b32.xlu0 %v956, 4
      %v976 = vpop.permute.xlu0 %975
      %vm977 = vcmask 1046528
      %v978 = vrot.slane %v796, 1
      %v979 = vrot.slane %v826, 1
      %v980 = vsel %vm977, %v978, %v979
      %v981 = vrot.slane %v797, 1
      %v982 = vrot.slane %v827, 1
      %v983 = vsel %vm977, %v981, %v982
      %v984 = vrot.slane %v798, 1
      %v985 = vrot.slane %v828, 1
      %v986 = vsel %vm977, %v984, %v985
      %v987 = vrot.slane %v799, 1
      %v988 = vrot.slane %v829, 1
      %v989 = vsel %vm977, %v987, %v988
      %v990 = vrot.slane %v800, 1
      %v991 = vrot.slane %v830, 1
      %v992 = vsel %vm977, %v990, %v991
      %v993 = vrot.slane %v801, 1
      %v994 = vrot.slane %v831, 1
      %v995 = vsel %vm977, %v993, %v994
      %v996 = vrot.slane %v802, 1
      %v997 = vrot.slane %v832, 1
      %v998 = vsel %vm977, %v996, %v997
      %v999 = vrot.slane %v803, 1
      %v1000 = vrot.slane %v833, 1
      %v1001 = vsel %vm977, %v999, %v1000
      %v1002 = vrot.slane %v804, 1
      %v1003 = vrot.slane %v834, 1
      %v1004 = vsel %vm977, %v1002, %v1003
      %v1005 = vrot.slane %v805, 1
      %v1006 = vrot.slane %v835, 1
      %v1007 = vsel %vm977, %v1005, %v1006
      %1008 = vrot.lane.b32.xlu0 %v980, 8
      %v1009 = vpop.permute.xlu0 %1008
      %1010 = vrot.lane.b32.xlu0 %v983, 8
      %v1011 = vpop.permute.xlu0 %1010
      %1012 = vrot.lane.b32.xlu0 %v986, 8
      %v1013 = vpop.permute.xlu0 %1012
      %1014 = vrot.lane.b32.xlu0 %v989, 8
      %v1015 = vpop.permute.xlu0 %1014
      %1016 = vrot.lane.b32.xlu0 %v992, 8
      %v1017 = vpop.permute.xlu0 %1016
      %1018 = vrot.lane.b32.xlu0 %v995, 8
      %v1019 = vpop.permute.xlu0 %1018
      %1020 = vrot.lane.b32.xlu0 %v998, 8
      %v1021 = vpop.permute.xlu0 %1020
      %1022 = vrot.lane.b32.xlu0 %v1001, 8
      %v1023 = vpop.permute.xlu0 %1022
      %1024 = vrot.lane.b32.xlu0 %v1004, 8
      %v1025 = vpop.permute.xlu0 %1024
      %1026 = vrot.lane.b32.xlu0 %v1007, 8
      %v1027 = vpop.permute.xlu0 %1026
      %vm1028 = vcmask 31744
      %v1030 = vsel %vm1028, %v796, %v958
      %v1032 = vsel %vm1028, %v797, %v960
      %v1034 = vsel %vm1028, %v798, %v962
      %v1036 = vsel %vm1028, %v799, %v964
      %v1038 = vsel %vm1028, %v800, %v966
      %v1040 = vsel %vm1028, %v801, %v968
      %v1042 = vsel %vm1028, %v802, %v970
      %v1044 = vsel %vm1028, %v803, %v972
      %v1046 = vsel %vm1028, %v804, %v974
      %v1048 = vsel %vm1028, %v805, %v976
      %vm1049 = vcmask 64512
      %v1051 = vsel %vm1049, %v1030, %v1009
      %v1053 = vsel %vm1049, %v1032, %v1011
      %v1055 = vsel %vm1049, %v1034, %v1013
      %v1057 = vsel %vm1049, %v1036, %v1015
      %v1059 = vsel %vm1049, %v1038, %v1017
      %v1061 = vsel %vm1049, %v1040, %v1019
      %v1063 = vsel %vm1049, %v1042, %v1021
      %v1065 = vsel %vm1049, %v1044, %v1023
      %v1067 = vsel %vm1049, %v1046, %v1025
      %v1069 = vsel %vm1049, %v1048, %v1027
      %v1070 = vld [vmem:[%s1] sm:$0xf]
      %v1071 = vld [vmem:[%s1 + $0x4] sm:$0x3]
      %s1072 = scalar_lea.vmem [#allocation2], 12
      %v1073 = vld [vmem:[%s1072] sm:$0xf]
      %v1074 = vld [vmem:[%s1072 + $0x4] sm:$0xf]
      %v1075 = vld [vmem:[%s1072 + $0x8] sm:$0x1]
      %v1076 = vld [vmem:[%s1072 + $0xc] sm:$0xf]
      %v1077 = vld [vmem:[%s1072 + $0x10] sm:$0xf]
      %v1078 = vld [vmem:[%s1072 + $0x14] sm:$0x1]
      %v1079 = vld [vmem:[%s1072 + $0x18] sm:$0xf]
      %v1080 = vld [vmem:[%s1072 + $0x1c] sm:$0xf]
      %v1081 = vld [vmem:[%s1072 + $0x20] sm:$0x1]
      %v1082 = vld [vmem:[%s1072 + $0x24] sm:$0xf]
      %v1083 = vld [vmem:[%s1072 + $0x28] sm:$0xf]
      %v1084 = vld [vmem:[%s1072 + $0x2c] sm:$0x1]
      %v1085 = vld [vmem:[%s1072 + $0x30] sm:$0xf]
      %v1086 = vld [vmem:[%s1072 + $0x34] sm:$0xf]
      %v1087 = vld [vmem:[%s1072 + $0x38] sm:$0x1]
      %v1088 = vld [vmem:[%s1072 + $0x3c] sm:$0xf]
      %v1089 = vld [vmem:[%s1072 + $0x40] sm:$0xf]
      %v1090 = vld [vmem:[%s1072 + $0x44] sm:$0x1]
      %v1091 = vld [vmem:[%s1072 + $0x48] sm:$0xf]
      %v1092 = vld [vmem:[%s1072 + $0x4c] sm:$0xf]
      %v1093 = vld [vmem:[%s1072 + $0x50] sm:$0x1]
      %v1094 = vld [vmem:[%s1072 + $0x54] sm:$0xf]
      %v1095 = vld [vmem:[%s1072 + $0x58] sm:$0xf]
      %v1096 = vld [vmem:[%s1072 + $0x5c] sm:$0x1]
      %v1097 = vld [vmem:[%s1072 + $0x60] sm:$0xf]
      %v1098 = vld [vmem:[%s1072 + $0x64] sm:$0xf]
      %v1099 = vld [vmem:[%s1072 + $0x68] sm:$0x1]
      %v1100 = vld [vmem:[%s1072 + $0x6c] sm:$0xf]
      %v1101 = vld [vmem:[%s1072 + $0x70] sm:$0xf]
      %v1102 = vld [vmem:[%s1072 + $0x74] sm:$0x1]
      %v1123 = vunpack.c.l.b16 %v1073
      %v1124 = vunpack.c.l.b16 %v1074
      %v1125 = vunpack.c.l.b16 %v1076
      %v1126 = vunpack.c.l.b16 %v1077
      %v1127 = vunpack.c.l.b16 %v1079
      %v1128 = vunpack.c.l.b16 %v1080
      %v1129 = vunpack.c.l.b16 %v1082
      %v1130 = vunpack.c.l.b16 %v1083
      %v1131 = vunpack.c.l.b16 %v1085
      %v1132 = vunpack.c.l.b16 %v1086
      %v1133 = vunpack.c.l.b16 %v1088
      %v1134 = vunpack.c.l.b16 %v1089
      %v1135 = vunpack.c.l.b16 %v1091
      %v1136 = vunpack.c.l.b16 %v1092
      %v1137 = vunpack.c.l.b16 %v1094
      %v1138 = vunpack.c.l.b16 %v1095
      %v1139 = vunpack.c.l.b16 %v1097
      %v1140 = vunpack.c.l.b16 %v1098
      %v1141 = vunpack.c.l.b16 %v1100
      %v1142 = vunpack.c.l.b16 %v1101
      %v1143 = vpack.c.b16 %v1124, %v1123
      %v1144 = vpack.c.b16 %v1126, %v1125
      %v1145 = vpack.c.b16 %v1128, %v1127
      %v1146 = vpack.c.b16 %v1130, %v1129
      %v1147 = vpack.c.b16 %v1132, %v1131
      %v1148 = vpack.c.b16 %v1134, %v1133
      %v1149 = vpack.c.b16 %v1136, %v1135
      %v1150 = vpack.c.b16 %v1138, %v1137
      %v1151 = vpack.c.b16 %v1140, %v1139
      %v1152 = vpack.c.b16 %v1142, %v1141
      %v1163 = vunpack.c.l.b16 %v1075
      %v1164 = vunpack.c.l.b16 %v1078
      %v1165 = vunpack.c.l.b16 %v1081
      %v1166 = vunpack.c.l.b16 %v1084
      %v1167 = vunpack.c.l.b16 %v1087
      %v1168 = vunpack.c.l.b16 %v1090
      %v1169 = vunpack.c.l.b16 %v1093
      %v1170 = vunpack.c.l.b16 %v1096
      %v1171 = vunpack.c.l.b16 %v1099
      %v1172 = vunpack.c.l.b16 %v1102
      %v1173 = vpack.c.b16 %v1163, %v1163
      %v1174 = vpack.c.b16 %v1164, %v1164
      %v1175 = vpack.c.b16 %v1165, %v1165
      %v1176 = vpack.c.b16 %v1166, %v1166
      %v1177 = vpack.c.b16 %v1167, %v1167
      %v1178 = vpack.c.b16 %v1168, %v1168
      %v1179 = vpack.c.b16 %v1169, %v1169
      %v1180 = vpack.c.b16 %v1170, %v1170
      %v1181 = vpack.c.b16 %v1171, %v1171
      %v1182 = vpack.c.b16 %v1172, %v1172
      %v1184 = vshrl.u32 %v1143, 16
      %v1186 = vshll.u32 %v1143, 16
      %v1188 = vrot.slane %v1186, 1
      %v1189 = vor.u32 %v1184, %v1188
      %v1191 = vshll.u32 %v1173, 16
      %v1193 = vrot.slane %v1191, 1
      %v1194 = vsel %vm836, %v1189, %v1193
      %v1196 = vshrl.u32 %v1144, 16
      %v1198 = vshll.u32 %v1144, 16
      %v1200 = vrot.slane %v1198, 1
      %v1201 = vor.u32 %v1196, %v1200
      %v1203 = vshll.u32 %v1174, 16
      %v1205 = vrot.slane %v1203, 1
      %v1206 = vsel %vm836, %v1201, %v1205
      %v1208 = vshrl.u32 %v1145, 16
      %v1210 = vshll.u32 %v1145, 16
      %v1212 = vrot.slane %v1210, 1
      %v1213 = vor.u32 %v1208, %v1212
      %v1215 = vshll.u32 %v1175, 16
      %v1217 = vrot.slane %v1215, 1
      %v1218 = vsel %vm836, %v1213, %v1217
      %v1220 = vshrl.u32 %v1146, 16
      %v1222 = vshll.u32 %v1146, 16
      %v1224 = vrot.slane %v1222, 1
      %v1225 = vor.u32 %v1220, %v1224
      %v1227 = vshll.u32 %v1176, 16
      %v1229 = vrot.slane %v1227, 1
      %v1230 = vsel %vm836, %v1225, %v1229
      %v1232 = vshrl.u32 %v1147, 16
      %v1234 = vshll.u32 %v1147, 16
      %v1236 = vrot.slane %v1234, 1
      %v1237 = vor.u32 %v1232, %v1236
      %v1239 = vshll.u32 %v1177, 16
      %v1241 = vrot.slane %v1239, 1
      %v1242 = vsel %vm836, %v1237, %v1241
      %v1244 = vshrl.u32 %v1148, 16
      %v1246 = vshll.u32 %v1148, 16
      %v1248 = vrot.slane %v1246, 1
      %v1249 = vor.u32 %v1244, %v1248
      %v1251 = vshll.u32 %v1178, 16
      %v1253 = vrot.slane %v1251, 1
      %v1254 = vsel %vm836, %v1249, %v1253
      %v1256 = vshrl.u32 %v1149, 16
      %v1258 = vshll.u32 %v1149, 16
      %v1260 = vrot.slane %v1258, 1
      %v1261 = vor.u32 %v1256, %v1260
      %v1263 = vshll.u32 %v1179, 16
      %v1265 = vrot.slane %v1263, 1
      %v1266 = vsel %vm836, %v1261, %v1265
      %v1268 = vshrl.u32 %v1150, 16
      %v1270 = vshll.u32 %v1150, 16
      %v1272 = vrot.slane %v1270, 1
      %v1273 = vor.u32 %v1268, %v1272
      %v1275 = vshll.u32 %v1180, 16
      %v1277 = vrot.slane %v1275, 1
      %v1278 = vsel %vm836, %v1273, %v1277
      %v1280 = vshrl.u32 %v1151, 16
      %v1282 = vshll.u32 %v1151, 16
      %v1284 = vrot.slane %v1282, 1
      %v1285 = vor.u32 %v1280, %v1284
      %v1287 = vshll.u32 %v1181, 16
      %v1289 = vrot.slane %v1287, 1
      %v1290 = vsel %vm836, %v1285, %v1289
      %v1292 = vshrl.u32 %v1152, 16
      %v1294 = vshll.u32 %v1152, 16
      %v1296 = vrot.slane %v1294, 1
      %v1297 = vor.u32 %v1292, %v1296
      %v1299 = vshll.u32 %v1182, 16
      %v1301 = vrot.slane %v1299, 1
      %v1302 = vsel %vm836, %v1297, %v1301
      %1303 = vrot.lane.b32.xlu0 %v1194, 4
      %v1304 = vpop.permute.xlu0 %1303
      %1305 = vrot.lane.b32.xlu0 %v1206, 4
      %v1306 = vpop.permute.xlu0 %1305
      %1307 = vrot.lane.b32.xlu0 %v1218, 4
      %v1308 = vpop.permute.xlu0 %1307
      %1309 = vrot.lane.b32.xlu0 %v1230, 4
      %v1310 = vpop.permute.xlu0 %1309
      %1311 = vrot.lane.b32.xlu0 %v1242, 4
      %v1312 = vpop.permute.xlu0 %1311
      %1313 = vrot.lane.b32.xlu0 %v1254, 4
      %v1314 = vpop.permute.xlu0 %1313
      %1315 = vrot.lane.b32.xlu0 %v1266, 4
      %v1316 = vpop.permute.xlu0 %1315
      %1317 = vrot.lane.b32.xlu0 %v1278, 4
      %v1318 = vpop.permute.xlu0 %1317
      %1319 = vrot.lane.b32.xlu0 %v1290, 4
      %v1320 = vpop.permute.xlu0 %1319
      %1321 = vrot.lane.b32.xlu0 %v1302, 4
      %v1322 = vpop.permute.xlu0 %1321
      %v1323 = vrot.slane %v1143, 1
      %v1324 = vrot.slane %v1173, 1
      %v1325 = vsel %vm977, %v1323, %v1324
      %v1326 = vrot.slane %v1144, 1
      %v1327 = vrot.slane %v1174, 1
      %v1328 = vsel %vm977, %v1326, %v1327
      %v1329 = vrot.slane %v1145, 1
      %v1330 = vrot.slane %v1175, 1
      %v1331 = vsel %vm977, %v1329, %v1330
      %v1332 = vrot.slane %v1146, 1
      %v1333 = vrot.slane %v1176, 1
      %v1334 = vsel %vm977, %v1332, %v1333
      %v1335 = vrot.slane %v1147, 1
      %v1336 = vrot.slane %v1177, 1
      %v1337 = vsel %vm977, %v1335, %v1336
      %v1338 = vrot.slane %v1148, 1
      %v1339 = vrot.slane %v1178, 1
      %v1340 = vsel %vm977, %v1338, %v1339
      %v1341 = vrot.slane %v1149, 1
      %v1342 = vrot.slane %v1179, 1
      %v1343 = vsel %vm977, %v1341, %v1342
      %v1344 = vrot.slane %v1150, 1
      %v1345 = vrot.slane %v1180, 1
      %v1346 = vsel %vm977, %v1344, %v1345
      %v1347 = vrot.slane %v1151, 1
      %v1348 = vrot.slane %v1181, 1
      %v1349 = vsel %vm977, %v1347, %v1348
      %v1350 = vrot.slane %v1152, 1
      %v1351 = vrot.slane %v1182, 1
      %v1352 = vsel %vm977, %v1350, %v1351
      %1353 = vrot.lane.b32.xlu0 %v1325, 8
      %v1354 = vpop.permute.xlu0 %1353
      %1355 = vrot.lane.b32.xlu0 %v1328, 8
      %v1356 = vpop.permute.xlu0 %1355
      %1357 = vrot.lane.b32.xlu0 %v1331, 8
      %v1358 = vpop.permute.xlu0 %1357
      %1359 = vrot.lane.b32.xlu0 %v1334, 8
      %v1360 = vpop.permute.xlu0 %1359
      %1361 = vrot.lane.b32.xlu0 %v1337, 8
      %v1362 = vpop.permute.xlu0 %1361
      %1363 = vrot.lane.b32.xlu0 %v1340, 8
      %v1364 = vpop.permute.xlu0 %1363
      %1365 = vrot.lane.b32.xlu0 %v1343, 8
      %v1366 = vpop.permute.xlu0 %1365
      %1367 = vrot.lane.b32.xlu0 %v1346, 8
      %v1368 = vpop.permute.xlu0 %1367
      %1369 = vrot.lane.b32.xlu0 %v1349, 8
      %v1370 = vpop.permute.xlu0 %1369
      %1371 = vrot.lane.b32.xlu0 %v1352, 8
      %v1372 = vpop.permute.xlu0 %1371
      %v1374 = vsel %vm1028, %v1143, %v1304
      %v1376 = vsel %vm1028, %v1144, %v1306
      %v1378 = vsel %vm1028, %v1145, %v1308
      %v1380 = vsel %vm1028, %v1146, %v1310
      %v1382 = vsel %vm1028, %v1147, %v1312
      %v1384 = vsel %vm1028, %v1148, %v1314
      %v1386 = vsel %vm1028, %v1149, %v1316
      %v1388 = vsel %vm1028, %v1150, %v1318
      %v1390 = vsel %vm1028, %v1151, %v1320
      %v1392 = vsel %vm1028, %v1152, %v1322
      %v1394 = vsel %vm1049, %v1374, %v1354
      %v1396 = vsel %vm1049, %v1376, %v1356
      %v1398 = vsel %vm1049, %v1378, %v1358
      %v1400 = vsel %vm1049, %v1380, %v1360
      %v1402 = vsel %vm1049, %v1382, %v1362
      %v1404 = vsel %vm1049, %v1384, %v1364
      %v1406 = vsel %vm1049, %v1386, %v1366
      %v1408 = vsel %vm1049, %v1388, %v1368
      %v1410 = vsel %vm1049, %v1390, %v1370
      %v1412 = vsel %vm1049, %v1392, %v1372
      %s1413 = scalar_lea.vmem %s1, 8
      %v1414 = vld [vmem:[%s1413] sm:$0xf]
      %v1415 = vld [vmem:[%s1413 + $0x4] sm:$0x3]
      %v1418 = vunpack.c.l.b16 %v1414
      %v1419 = vunpack.c.l.b16 %v1415
      %v1420 = vpack.c.b16 %v1419, %v1418
      %vm1421 = vcmask 97280
      %v1422 = vsel %vm1421, %v1394, 0
      %v1424 = vsel %vm1421, %v1396, 0
      %v1426 = vsel %vm1421, %v1398, 0
      %v1428 = vsel %vm1421, %v1400, 0
      %v1430 = vsel %vm1421, %v1402, 0
      %v1432 = vsel %vm1421, %v1404, 0
      %v1434 = vsel %vm1421, %v1406, 0
      %v1436 = vsel %vm1421, %v1408, 0
      %v1438 = vsel %vm1421, %v1410, 0
      %v1440 = vsel %vm1421, %v1412, 0
      %vm1442 = vcmask 1045504
      %v1444 = vsel %vm1442, %v1420, 0
      %1446 = vmatprep.subr.bf16.mxu0 0
      %1447 = vmatpush1.bf16.msra.mxu0 %v1444
      %1448 = vmatprep.subr.bf16.mxu0 0
      %1449 = vmatpush1.bf16.msra.mxu0 0
      %1450 = vmatprep.subr.bf16.mxu0 0
      %1451 = vmatpush1.bf16.msra.mxu0 0
      %1452 = vmatprep.subr.bf16.mxu0 0
      %1453 = vmatpush1.bf16.msra.mxu0 0
      %1454 = vmatprep.subr.bf16.mxu0 0
      %1455 = vmatpush1.bf16.msra.mxu0 0
      %1456 = vmatprep.subr.bf16.mxu0 0
      %1457 = vmatpush1.bf16.msra.mxu0 0
      %1458 = vmatprep.subr.bf16.mxu0 0
      %1459 = vmatpush1.bf16.msra.mxu0 0
      %1460 = vmatprep.subr.bf16.mxu0 0
      %1461 = vmatpush1.bf16.msra.mxu0 0
      %1462 = vmatprep.subr.bf16.mxu0 0
      %1463 = vmatpush1.bf16.msra.mxu0 0
      %1464 = vmatprep.subr.bf16.mxu0 0
      %1465 = vmatpush1.bf16.msra.mxu0 0
      %1466 = vmatprep.subr.bf16.mxu0 0
      %1467 = vmatpush1.bf16.msra.mxu0 0
      %1468 = vmatprep.subr.bf16.mxu0 0
      %1469 = vmatpush1.bf16.msra.mxu0 0
      %1470 = vmatprep.subr.bf16.mxu0 0
      %1471 = vmatpush1.bf16.msra.mxu0 0
      %1472 = vmatprep.subr.bf16.mxu0 0
      %1473 = vmatpush1.bf16.msra.mxu0 0
      %1474 = vmatprep.subr.bf16.mxu0 0
      %1475 = vmatpush1.bf16.msra.mxu0 0
      %1476 = vmatprep.subr.bf16.mxu0 0
      %1477 = vmatpush1.bf16.msra.mxu0 0
      %1478 = vmatprep.mubr.bf16.mxu0 0
      %1479 = vmatmul.mubr.bf16.gmra.mrb[0].mxu0 %v1422
      %v1480 = vpop.f32.mrb[0].mxu0
      %v1481 = vadd.f32 0.0, %v1480
      %v1482 = vpop.f32.mrb[0].mxu0
      %v1483 = vpop.f32.mrb[0].mxu0
      %v1484 = vadd.f32 0.0, %v1483
      %v1485 = vpop.f32.mrb[0].mxu0
      %1486 = vmatprep.mubr.bf16.mxu0 0
      %1487 = vmatmul.mubr.bf16.gmra.mrb[0].mxu0 %v1424
      %v1488 = vpop.f32.mrb[0].mxu0
      %v1489 = vadd.f32 0.0, %v1488
      %v1490 = vpop.f32.mrb[0].mxu0
      %v1491 = vpop.f32.mrb[0].mxu0
      %v1492 = vadd.f32 0.0, %v1491
      %v1493 = vpop.f32.mrb[0].mxu0
      %1494 = vmatprep.mubr.bf16.mxu0 0
      %1495 = vmatmul.mubr.bf16.gmra.mrb[0].mxu0 %v1426
      %v1496 = vpop.f32.mrb[0].mxu0
      %v1497 = vadd.f32 0.0, %v1496
      %v1498 = vpop.f32.mrb[0].mxu0
      %v1499 = vpop.f32.mrb[0].mxu0
      %v1500 = vadd.f32 0.0, %v1499
      %v1501 = vpop.f32.mrb[0].mxu0
      %1502 = vmatprep.mubr.bf16.mxu0 0
      %1503 = vmatmul.mubr.bf16.gmra.mrb[0].mxu0 %v1428
      %v1504 = vpop.f32.mrb[0].mxu0
      %v1505 = vadd.f32 0.0, %v1504
      %v1506 = vpop.f32.mrb[0].mxu0
      %v1507 = vpop.f32.mrb[0].mxu0
      %v1508 = vadd.f32 0.0, %v1507
      %v1509 = vpop.f32.mrb[0].mxu0
      %1510 = vmatprep.mubr.bf16.mxu0 0
      %1511 = vmatmul.mubr.bf16.gmra.mrb[0].mxu0 %v1430
      %v1512 = vpop.f32.mrb[0].mxu0
      %v1513 = vadd.f32 0.0, %v1512
      %v1514 = vpop.f32.mrb[0].mxu0
      %v1515 = vpop.f32.mrb[0].mxu0
      %v1516 = vadd.f32 0.0, %v1515
      %v1517 = vpop.f32.mrb[0].mxu0
      %1518 = vmatprep.mubr.bf16.mxu0 0
      %1519 = vmatmul.mubr.bf16.gmra.mrb[0].mxu0 %v1432
      %v1520 = vpop.f32.mrb[0].mxu0
      %v1521 = vadd.f32 0.0, %v1520
      %v1522 = vpop.f32.mrb[0].mxu0
      %v1523 = vpop.f32.mrb[0].mxu0
      %v1524 = vadd.f32 0.0, %v1523
      %v1525 = vpop.f32.mrb[0].mxu0
      %1526 = vmatprep.mubr.bf16.mxu0 0
      %1527 = vmatmul.mubr.bf16.gmra.mrb[0].mxu0 %v1434
      %v1528 = vpop.f32.mrb[0].mxu0
      %v1529 = vadd.f32 0.0, %v1528
      %v1530 = vpop.f32.mrb[0].mxu0
      %v1531 = vpop.f32.mrb[0].mxu0
      %v1532 = vadd.f32 0.0, %v1531
      %v1533 = vpop.f32.mrb[0].mxu0
      %1534 = vmatprep.mubr.bf16.mxu0 0
      %1535 = vmatmul.mubr.bf16.gmra.mrb[0].mxu0 %v1436
      %v1536 = vpop.f32.mrb[0].mxu0
      %v1537 = vadd.f32 0.0, %v1536
      %v1538 = vpop.f32.mrb[0].mxu0
      %v1539 = vpop.f32.mrb[0].mxu0
      %v1540 = vadd.f32 0.0, %v1539
      %v1541 = vpop.f32.mrb[0].mxu0
      %1542 = vmatprep.mubr.bf16.mxu0 0
      %1543 = vmatmul.mubr.bf16.gmra.mrb[0].mxu0 %v1438
      %v1544 = vpop.f32.mrb[0].mxu0
      %v1545 = vadd.f32 0.0, %v1544
      %v1546 = vpop.f32.mrb[0].mxu0
      %v1547 = vpop.f32.mrb[0].mxu0
      %v1548 = vadd.f32 0.0, %v1547
      %v1549 = vpop.f32.mrb[0].mxu0
      %1550 = vmatprep.mubr.bf16.mxu0 0
      %1551 = vmatmul.mubr.bf16.gmra.mrb[0].mxu0 %v1440
      %v1552 = vpop.f32.mrb[0].mxu0
      %v1553 = vadd.f32 0.0, %v1552
      %v1554 = vpop.f32.mrb[0].mxu0
      %v1555 = vpop.f32.mrb[0].mxu0
      %v1556 = vadd.f32 0.0, %v1555
      %v1557 = vpop.f32.mrb[0].mxu0
      %1558 = vdwg.mxu0
      %v1561 = vunpack.c.l.b16 %v1070
      %v1562 = vunpack.c.l.b16 %v1071
      %v1563 = vpack.c.b16 %v1562, %v1561
      %v1564 = vsel %vm1421, %v1051, 0
      %v1566 = vsel %vm1421, %v1053, 0
      %v1568 = vsel %vm1421, %v1055, 0
      %v1570 = vsel %vm1421, %v1057, 0
      %v1572 = vsel %vm1421, %v1059, 0
      %v1574 = vsel %vm1421, %v1061, 0
      %v1576 = vsel %vm1421, %v1063, 0
      %v1578 = vsel %vm1421, %v1065, 0
      %v1580 = vsel %vm1421, %v1067, 0
      %v1582 = vsel %vm1421, %v1069, 0
      %v1585 = vsel %vm1442, %v1563, 0
      %1587 = vmatprep.subr.bf16.mxu0 0
      %1588 = vmatpush1.bf16.msra.mxu0 %v1585
      %1589 = vmatprep.subr.bf16.mxu0 0
      %1590 = vmatpush1.bf16.msra.mxu0 0
      %1591 = vmatprep.subr.bf16.mxu0 0
      %1592 = vmatpush1.bf16.msra.mxu0 0
      %1593 = vmatprep.subr.bf16.mxu0 0
      %1594 = vmatpush1.bf16.msra.mxu0 0
      %1595 = vmatprep.subr.bf16.mxu0 0
      %1596 = vmatpush1.bf16.msra.mxu0 0
      %1597 = vmatprep.subr.bf16.mxu0 0
      %1598 = vmatpush1.bf16.msra.mxu0 0
      %1599 = vmatprep.subr.bf16.mxu0 0
      %1600 = vmatpush1.bf16.msra.mxu0 0
      %1601 = vmatprep.subr.bf16.mxu0 0
      %1602 = vmatpush1.bf16.msra.mxu0 0
      %1603 = vmatprep.subr.bf16.mxu0 0
      %1604 = vmatpush1.bf16.msra.mxu0 0
      %1605 = vmatprep.subr.bf16.mxu0 0
      %1606 = vmatpush1.bf16.msra.mxu0 0
      %1607 = vmatprep.subr.bf16.mxu0 0
      %1608 = vmatpush1.bf16.msra.mxu0 0
      %1609 = vmatprep.subr.bf16.mxu0 0
      %1610 = vmatpush1.bf16.msra.mxu0 0
      %1611 = vmatprep.subr.bf16.mxu0 0
      %1612 = vmatpush1.bf16.msra.mxu0 0
      %1613 = vmatprep.subr.bf16.mxu0 0
      %1614 = vmatpush1.bf16.msra.mxu0 0
      %1615 = vmatprep.subr.bf16.mxu0 0
      %1616 = vmatpush1.bf16.msra.mxu0 0
      %1617 = vmatprep.subr.bf16.mxu0 0
      %1618 = vmatpush1.bf16.msra.mxu0 0
      %1619 = vmatprep.mubr.bf16.mxu0 0
      %1620 = vmatmul.mubr.bf16.gmra.mrb[0].mxu0 %v1564
      %v1621 = vpop.f32.mrb[0].mxu0
      %v1622 = vadd.f32 %v1481, %v1621
      %v1623 = vpop.f32.mrb[0].mxu0
      %v1624 = vpop.f32.mrb[0].mxu0
      %v1625 = vadd.f32 %v1484, %v1624
      %v1626 = vpop.f32.mrb[0].mxu0
      %1627 = vmatprep.mubr.bf16.mxu0 0
      %1628 = vmatmul.mubr.bf16.gmra.mrb[0].mxu0 %v1566
      %v1629 = vpop.f32.mrb[0].mxu0
      %v1630 = vadd.f32 %v1489, %v1629
      %v1631 = vpop.f32.mrb[0].mxu0
      %v1632 = vpop.f32.mrb[0].mxu0
      %v1633 = vadd.f32 %v1492, %v1632
      %v1634 = vpop.f32.mrb[0].mxu0
      %1635 = vmatprep.mubr.bf16.mxu0 0
      %1636 = vmatmul.mubr.bf16.gmra.mrb[0].mxu0 %v1568
      %v1637 = vpop.f32.mrb[0].mxu0
      %v1638 = vadd.f32 %v1497, %v1637
      %v1639 = vpop.f32.mrb[0].mxu0
      %v1640 = vpop.f32.mrb[0].mxu0
      %v1641 = vadd.f32 %v1500, %v1640
      %v1642 = vpop.f32.mrb[0].mxu0
      %1643 = vmatprep.mubr.bf16.mxu0 0
      %1644 = vmatmul.mubr.bf16.gmra.mrb[0].mxu0 %v1570
      %v1645 = vpop.f32.mrb[0].mxu0
      %v1646 = vadd.f32 %v1505, %v1645
      %v1647 = vpop.f32.mrb[0].mxu0
      %v1648 = vpop.f32.mrb[0].mxu0
      %v1649 = vadd.f32 %v1508, %v1648
      %v1650 = vpop.f32.mrb[0].mxu0
      %1651 = vmatprep.mubr.bf16.mxu0 0
      %1652 = vmatmul.mubr.bf16.gmra.mrb[0].mxu0 %v1572
      %v1653 = vpop.f32.mrb[0].mxu0
      %v1654 = vadd.f32 %v1513, %v1653
      %v1655 = vpop.f32.mrb[0].mxu0
      %v1656 = vpop.f32.mrb[0].mxu0
      %v1657 = vadd.f32 %v1516, %v1656
      %v1658 = vpop.f32.mrb[0].mxu0
      %1659 = vmatprep.mubr.bf16.mxu0 0
      %1660 = vmatmul.mubr.bf16.gmra.mrb[0].mxu0 %v1574
      %v1661 = vpop.f32.mrb[0].mxu0
      %v1662 = vadd.f32 %v1521, %v1661
      %v1663 = vpop.f32.mrb[0].mxu0
      %v1664 = vpop.f32.mrb[0].mxu0
      %v1665 = vadd.f32 %v1524, %v1664
      %v1666 = vpop.f32.mrb[0].mxu0
      %1667 = vmatprep.mubr.bf16.mxu0 0
      %1668 = vmatmul.mubr.bf16.gmra.mrb[0].mxu0 %v1576
      %v1669 = vpop.f32.mrb[0].mxu0
      %v1670 = vadd.f32 %v1529, %v1669
      %v1671 = vpop.f32.mrb[0].mxu0
      %v1672 = vpop.f32.mrb[0].mxu0
      %v1673 = vadd.f32 %v1532, %v1672
      %v1674 = vpop.f32.mrb[0].mxu0
      %1675 = vmatprep.mubr.bf16.mxu0 0
      %1676 = vmatmul.mubr.bf16.gmra.mrb[0].mxu0 %v1578
      %v1677 = vpop.f32.mrb[0].mxu0
      %v1678 = vadd.f32 %v1537, %v1677
      %v1679 = vpop.f32.mrb[0].mxu0
      %v1680 = vpop.f32.mrb[0].mxu0
      %v1681 = vadd.f32 %v1540, %v1680
      %v1682 = vpop.f32.mrb[0].mxu0
      %1683 = vmatprep.mubr.bf16.mxu0 0
      %1684 = vmatmul.mubr.bf16.gmra.mrb[0].mxu0 %v1580
      %v1685 = vpop.f32.mrb[0].mxu0
      %v1686 = vadd.f32 %v1545, %v1685
      %v1687 = vpop.f32.mrb[0].mxu0
      %v1688 = vpop.f32.mrb[0].mxu0
      %v1689 = vadd.f32 %v1548, %v1688
      %v1690 = vpop.f32.mrb[0].mxu0
      %1691 = vmatprep.mubr.bf16.mxu0 0
      %1692 = vmatmul.mubr.bf16.gmra.mrb[0].mxu0 %v1582
      %v1693 = vpop.f32.mrb[0].mxu0
      %v1694 = vadd.f32 %v1553, %v1693
      %v1695 = vpop.f32.mrb[0].mxu0
      %v1696 = vpop.f32.mrb[0].mxu0
      %v1697 = vadd.f32 %v1556, %v1696
      %v1698 = vpop.f32.mrb[0].mxu0
      %1699 = vdwg.mxu0
      %v1700 = vld [vmem:[%s510] sm:$0xf]
      %v1701 = vld [vmem:[%s510 + $0x4] sm:$0xf]
      %v1702 = vld [vmem:[%s510 + $0x8] sm:$0x1]
      %v1703 = vld [vmem:[%s510 + $0xc] sm:$0xf]
      %v1704 = vld [vmem:[%s510 + $0x10] sm:$0xf]
      %v1705 = vld [vmem:[%s510 + $0x14] sm:$0x1]
      %v1706 = vld [vmem:[%s510 + $0x18] sm:$0xf]
      %v1707 = vld [vmem:[%s510 + $0x1c] sm:$0xf]
      %v1708 = vld [vmem:[%s510 + $0x20] sm:$0x1]
      %v1709 = vld [vmem:[%s510 + $0x24] sm:$0xf]
      %v1710 = vld [vmem:[%s510 + $0x28] sm:$0xf]
      %v1711 = vld [vmem:[%s510 + $0x2c] sm:$0x1]
      %v1712 = vld [vmem:[%s510 + $0x30] sm:$0xf]
      %v1713 = vld [vmem:[%s510 + $0x34] sm:$0xf]
      %v1714 = vld [vmem:[%s510 + $0x38] sm:$0x1]
      %v1715 = vld [vmem:[%s510 + $0x3c] sm:$0xf]
      %v1716 = vld [vmem:[%s510 + $0x40] sm:$0xf]
      %v1717 = vld [vmem:[%s510 + $0x44] sm:$0x1]
      %v1718 = vld [vmem:[%s510 + $0x48] sm:$0xf]
      %v1719 = vld [vmem:[%s510 + $0x4c] sm:$0xf]
      %v1720 = vld [vmem:[%s510 + $0x50] sm:$0x1]
      %v1721 = vld [vmem:[%s510 + $0x54] sm:$0xf]
      %v1722 = vld [vmem:[%s510 + $0x58] sm:$0xf]
      %v1723 = vld [vmem:[%s510 + $0x5c] sm:$0x1]
      %v1724 = vld [vmem:[%s510 + $0x60] sm:$0xf]
      %v1725 = vld [vmem:[%s510 + $0x64] sm:$0xf]
      %v1726 = vld [vmem:[%s510 + $0x68] sm:$0x1]
      %v1727 = vld [vmem:[%s510 + $0x6c] sm:$0xf]
      %v1728 = vld [vmem:[%s510 + $0x70] sm:$0xf]
      %v1729 = vld [vmem:[%s510 + $0x74] sm:$0x1]
      %v1750 = vunpack.c.l.b16 %v1700
      %v1751 = vunpack.c.l.b16 %v1701
      %v1752 = vunpack.c.l.b16 %v1703
      %v1753 = vunpack.c.l.b16 %v1704
      %v1754 = vunpack.c.l.b16 %v1706
      %v1755 = vunpack.c.l.b16 %v1707
      %v1756 = vunpack.c.l.b16 %v1709
      %v1757 = vunpack.c.l.b16 %v1710
      %v1758 = vunpack.c.l.b16 %v1712
      %v1759 = vunpack.c.l.b16 %v1713
      %v1760 = vunpack.c.l.b16 %v1715
      %v1761 = vunpack.c.l.b16 %v1716
      %v1762 = vunpack.c.l.b16 %v1718
      %v1763 = vunpack.c.l.b16 %v1719
      %v1764 = vunpack.c.l.b16 %v1721
      %v1765 = vunpack.c.l.b16 %v1722
      %v1766 = vunpack.c.l.b16 %v1724
      %v1767 = vunpack.c.l.b16 %v1725
      %v1768 = vunpack.c.l.b16 %v1727
      %v1769 = vunpack.c.l.b16 %v1728
      %v1770 = vpack.c.b16 %v1751, %v1750
      %v1771 = vpack.c.b16 %v1753, %v1752
      %v1772 = vpack.c.b16 %v1755, %v1754
      %v1773 = vpack.c.b16 %v1757, %v1756
      %v1774 = vpack.c.b16 %v1759, %v1758
      %v1775 = vpack.c.b16 %v1761, %v1760
      %v1776 = vpack.c.b16 %v1763, %v1762
      %v1777 = vpack.c.b16 %v1765, %v1764
      %v1778 = vpack.c.b16 %v1767, %v1766
      %v1779 = vpack.c.b16 %v1769, %v1768
      %v1790 = vunpack.c.l.b16 %v1702
      %v1791 = vunpack.c.l.b16 %v1705
      %v1792 = vunpack.c.l.b16 %v1708
      %v1793 = vunpack.c.l.b16 %v1711
      %v1794 = vunpack.c.l.b16 %v1714
      %v1795 = vunpack.c.l.b16 %v1717
      %v1796 = vunpack.c.l.b16 %v1720
      %v1797 = vunpack.c.l.b16 %v1723
      %v1798 = vunpack.c.l.b16 %v1726
      %v1799 = vunpack.c.l.b16 %v1729
      %v1800 = vpack.c.b16 %v1790, %v1790
      %v1801 = vpack.c.b16 %v1791, %v1791
      %v1802 = vpack.c.b16 %v1792, %v1792
      %v1803 = vpack.c.b16 %v1793, %v1793
      %v1804 = vpack.c.b16 %v1794, %v1794
      %v1805 = vpack.c.b16 %v1795, %v1795
      %v1806 = vpack.c.b16 %v1796, %v1796
      %v1807 = vpack.c.b16 %v1797, %v1797
      %v1808 = vpack.c.b16 %v1798, %v1798
      %v1809 = vpack.c.b16 %v1799, %v1799
      %v1811 = vshrl.u32 %v1770, 16
      %v1813 = vshll.u32 %v1770, 16
      %v1815 = vrot.slane %v1813, 1
      %v1816 = vor.u32 %v1811, %v1815
      %v1818 = vshll.u32 %v1800, 16
      %v1820 = vrot.slane %v1818, 1
      %v1821 = vsel %vm836, %v1816, %v1820
      %v1823 = vshrl.u32 %v1771, 16
      %v1825 = vshll.u32 %v1771, 16
      %v1827 = vrot.slane %v1825, 1
      %v1828 = vor.u32 %v1823, %v1827
      %v1830 = vshll.u32 %v1801, 16
      %v1832 = vrot.slane %v1830, 1
      %v1833 = vsel %vm836, %v1828, %v1832
      %v1835 = vshrl.u32 %v1772, 16
      %v1837 = vshll.u32 %v1772, 16
      %v1839 = vrot.slane %v1837, 1
      %v1840 = vor.u32 %v1835, %v1839
      %v1842 = vshll.u32 %v1802, 16
      %v1844 = vrot.slane %v1842, 1
      %v1845 = vsel %vm836, %v1840, %v1844
      %v1847 = vshrl.u32 %v1773, 16
      %v1849 = vshll.u32 %v1773, 16
      %v1851 = vrot.slane %v1849, 1
      %v1852 = vor.u32 %v1847, %v1851
      %v1854 = vshll.u32 %v1803, 16
      %v1856 = vrot.slane %v1854, 1
      %v1857 = vsel %vm836, %v1852, %v1856
      %v1859 = vshrl.u32 %v1774, 16
      %v1861 = vshll.u32 %v1774, 16
      %v1863 = vrot.slane %v1861, 1
      %v1864 = vor.u32 %v1859, %v1863
      %v1866 = vshll.u32 %v1804, 16
      %v1868 = vrot.slane %v1866, 1
      %v1869 = vsel %vm836, %v1864, %v1868
      %v1871 = vshrl.u32 %v1775, 16
      %v1873 = vshll.u32 %v1775, 16
      %v1875 = vrot.slane %v1873, 1
      %v1876 = vor.u32 %v1871, %v1875
      %v1878 = vshll.u32 %v1805, 16
      %v1880 = vrot.slane %v1878, 1
      %v1881 = vsel %vm836, %v1876, %v1880
      %v1883 = vshrl.u32 %v1776, 16
      %v1885 = vshll.u32 %v1776, 16
      %v1887 = vrot.slane %v1885, 1
      %v1888 = vor.u32 %v1883, %v1887
      %v1890 = vshll.u32 %v1806, 16
      %v1892 = vrot.slane %v1890, 1
      %v1893 = vsel %vm836, %v1888, %v1892
      %v1895 = vshrl.u32 %v1777, 16
      %v1897 = vshll.u32 %v1777, 16
      %v1899 = vrot.slane %v1897, 1
      %v1900 = vor.u32 %v1895, %v1899
      %v1902 = vshll.u32 %v1807, 16
      %v1904 = vrot.slane %v1902, 1
      %v1905 = vsel %vm836, %v1900, %v1904
      %v1907 = vshrl.u32 %v1778, 16
      %v1909 = vshll.u32 %v1778, 16
      %v1911 = vrot.slane %v1909, 1
      %v1912 = vor.u32 %v1907, %v1911
      %v1914 = vshll.u32 %v1808, 16
      %v1916 = vrot.slane %v1914, 1
      %v1917 = vsel %vm836, %v1912, %v1916
      %v1919 = vshrl.u32 %v1779, 16
      %v1921 = vshll.u32 %v1779, 16
      %v1923 = vrot.slane %v1921, 1
      %v1924 = vor.u32 %v1919, %v1923
      %v1926 = vshll.u32 %v1809, 16
      %v1928 = vrot.slane %v1926, 1
      %v1929 = vsel %vm836, %v1924, %v1928
      %1930 = vrot.lane.b32.xlu0 %v1821, 4
      %v1931 = vpop.permute.xlu0 %1930
      %1932 = vrot.lane.b32.xlu0 %v1833, 4
      %v1933 = vpop.permute.xlu0 %1932
      %1934 = vrot.lane.b32.xlu0 %v1845, 4
      %v1935 = vpop.permute.xlu0 %1934
      %1936 = vrot.lane.b32.xlu0 %v1857, 4
      %v1937 = vpop.permute.xlu0 %1936
      %1938 = vrot.lane.b32.xlu0 %v1869, 4
      %v1939 = vpop.permute.xlu0 %1938
      %1940 = vrot.lane.b32.xlu0 %v1881, 4
      %v1941 = vpop.permute.xlu0 %1940
      %1942 = vrot.lane.b32.xlu0 %v1893, 4
      %v1943 = vpop.permute.xlu0 %1942
      %1944 = vrot.lane.b32.xlu0 %v1905, 4
      %v1945 = vpop.permute.xlu0 %1944
      %1946 = vrot.lane.b32.xlu0 %v1917, 4
      %v1947 = vpop.permute.xlu0 %1946
      %1948 = vrot.lane.b32.xlu0 %v1929, 4
      %v1949 = vpop.permute.xlu0 %1948
      %v1950 = vrot.slane %v1770, 1
      %v1951 = vrot.slane %v1800, 1
      %v1952 = vsel %vm977, %v1950, %v1951
      %v1953 = vrot.slane %v1771, 1
      %v1954 = vrot.slane %v1801, 1
      %v1955 = vsel %vm977, %v1953, %v1954
      %v1956 = vrot.slane %v1772, 1
      %v1957 = vrot.slane %v1802, 1
      %v1958 = vsel %vm977, %v1956, %v1957
      %v1959 = vrot.slane %v1773, 1
      %v1960 = vrot.slane %v1803, 1
      %v1961 = vsel %vm977, %v1959, %v1960
      %v1962 = vrot.slane %v1774, 1
      %v1963 = vrot.slane %v1804, 1
      %v1964 = vsel %vm977, %v1962, %v1963
      %v1965 = vrot.slane %v1775, 1
      %v1966 = vrot.slane %v1805, 1
      %v1967 = vsel %vm977, %v1965, %v1966
      %v1968 = vrot.slane %v1776, 1
      %v1969 = vrot.slane %v1806, 1
      %v1970 = vsel %vm977, %v1968, %v1969
      %v1971 = vrot.slane %v1777, 1
      %v1972 = vrot.slane %v1807, 1
      %v1973 = vsel %vm977, %v1971, %v1972
      %v1974 = vrot.slane %v1778, 1
      %v1975 = vrot.slane %v1808, 1
      %v1976 = vsel %vm977, %v1974, %v1975
      %v1977 = vrot.slane %v1779, 1
      %v1978 = vrot.slane %v1809, 1
      %v1979 = vsel %vm977, %v1977, %v1978
      %1980 = vrot.lane.b32.xlu0 %v1952, 8
      %v1981 = vpop.permute.xlu0 %1980
      %1982 = vrot.lane.b32.xlu0 %v1955, 8
      %v1983 = vpop.permute.xlu0 %1982
      %1984 = vrot.lane.b32.xlu0 %v1958, 8
      %v1985 = vpop.permute.xlu0 %1984
      %1986 = vrot.lane.b32.xlu0 %v1961, 8
      %v1987 = vpop.permute.xlu0 %1986
      %1988 = vrot.lane.b32.xlu0 %v1964, 8
      %v1989 = vpop.permute.xlu0 %1988
      %1990 = vrot.lane.b32.xlu0 %v1967, 8
      %v1991 = vpop.permute.xlu0 %1990
      %1992 = vrot.lane.b32.xlu0 %v1970, 8
      %v1993 = vpop.permute.xlu0 %1992
      %1994 = vrot.lane.b32.xlu0 %v1973, 8
      %v1995 = vpop.permute.xlu0 %1994
      %1996 = vrot.lane.b32.xlu0 %v1976, 8
      %v1997 = vpop.permute.xlu0 %1996
      %1998 = vrot.lane.b32.xlu0 %v1979, 8
      %v1999 = vpop.permute.xlu0 %1998
      %v2001 = vsel %vm1028, %v1770, %v1931
      %v2003 = vsel %vm1028, %v1771, %v1933
      %v2005 = vsel %vm1028, %v1772, %v1935
      %v2007 = vsel %vm1028, %v1773, %v1937
      %v2009 = vsel %vm1028, %v1774, %v1939
      %v2011 = vsel %vm1028, %v1775, %v1941
      %v2013 = vsel %vm1028, %v1776, %v1943
      %v2015 = vsel %vm1028, %v1777, %v1945
      %v2017 = vsel %vm1028, %v1778, %v1947
      %v2019 = vsel %vm1028, %v1779, %v1949
      %v2021 = vsel %vm1049, %v2001, %v1981
      %v2023 = vsel %vm1049, %v2003, %v1983
      %v2025 = vsel %vm1049, %v2005, %v1985
      %v2027 = vsel %vm1049, %v2007, %v1987
      %v2029 = vsel %vm1049, %v2009, %v1989
      %v2031 = vsel %vm1049, %v2011, %v1991
      %v2033 = vsel %vm1049, %v2013, %v1993
      %v2035 = vsel %vm1049, %v2015, %v1995
      %v2037 = vsel %vm1049, %v2017, %v1997
      %v2039 = vsel %vm1049, %v2019, %v1999
      %s2040 = scalar_lea.vmem %s1, 16
      %v2041 = vld [vmem:[%s2040] sm:$0xf]
      %v2042 = vld [vmem:[%s2040 + $0x4] sm:$0x3]
      %v2045 = vunpack.c.l.b16 %v2041
      %v2046 = vunpack.c.l.b16 %v2042
      %v2047 = vpack.c.b16 %v2046, %v2045
      %v2048 = vsel %vm1421, %v2021, 0
      %v2050 = vsel %vm1421, %v2023, 0
      %v2052 = vsel %vm1421, %v2025, 0
      %v2054 = vsel %vm1421, %v2027, 0
      %v2056 = vsel %vm1421, %v2029, 0
      %v2058 = vsel %vm1421, %v2031, 0
      %v2060 = vsel %vm1421, %v2033, 0
      %v2062 = vsel %vm1421, %v2035, 0
      %v2064 = vsel %vm1421, %v2037, 0
      %v2066 = vsel %vm1421, %v2039, 0
      %v2069 = vsel %vm1442, %v2047, 0
      %2071 = vmatprep.subr.bf16.mxu0 0
      %2072 = vmatpush1.bf16.msra.mxu0 %v2069
      %2073 = vmatprep.subr.bf16.mxu0 0
      %2074 = vmatpush1.bf16.msra.mxu0 0
      %2075 = vmatprep.subr.bf16.mxu0 0
      %2076 = vmatpush1.bf16.msra.mxu0 0
      %2077 = vmatprep.subr.bf16.mxu0 0
      %2078 = vmatpush1.bf16.msra.mxu0 0
      %2079 = vmatprep.subr.bf16.mxu0 0
      %2080 = vmatpush1.bf16.msra.mxu0 0
      %2081 = vmatprep.subr.bf16.mxu0 0
      %2082 = vmatpush1.bf16.msra.mxu0 0
      %2083 = vmatprep.subr.bf16.mxu0 0
      %2084 = vmatpush1.bf16.msra.mxu0 0
      %2085 = vmatprep.subr.bf16.mxu0 0
      %2086 = vmatpush1.bf16.msra.mxu0 0
      %2087 = vmatprep.subr.bf16.mxu0 0
      %2088 = vmatpush1.bf16.msra.mxu0 0
      %2089 = vmatprep.subr.bf16.mxu0 0
      %2090 = vmatpush1.bf16.msra.mxu0 0
      %2091 = vmatprep.subr.bf16.mxu0 0
      %2092 = vmatpush1.bf16.msra.mxu0 0
      %2093 = vmatprep.subr.bf16.mxu0 0
      %2094 = vmatpush1.bf16.msra.mxu0 0
      %2095 = vmatprep.subr.bf16.mxu0 0
      %2096 = vmatpush1.bf16.msra.mxu0 0
      %2097 = vmatprep.subr.bf16.mxu0 0
      %2098 = vmatpush1.bf16.msra.mxu0 0
      %2099 = vmatprep.subr.bf16.mxu0 0
      %2100 = vmatpush1.bf16.msra.mxu0 0
      %2101 = vmatprep.subr.bf16.mxu0 0
      %2102 = vmatpush1.bf16.msra.mxu0 0
      %2103 = vmatprep.mubr.bf16.mxu0 0
      %2104 = vmatmul.mubr.bf16.gmra.mrb[0].mxu0 %v2048
      %v2105 = vpop.f32.mrb[0].mxu0
      %v2106 = vadd.f32 0.0, %v2105
      %v2107 = vpop.f32.mrb[0].mxu0
      %v2108 = vpop.f32.mrb[0].mxu0
      %v2109 = vadd.f32 0.0, %v2108
      %v2110 = vpop.f32.mrb[0].mxu0
      %2111 = vmatprep.mubr.bf16.mxu0 0
      %2112 = vmatmul.mubr.bf16.gmra.mrb[0].mxu0 %v2050
      %v2113 = vpop.f32.mrb[0].mxu0
      %v2114 = vadd.f32 0.0, %v2113
      %v2115 = vpop.f32.mrb[0].mxu0
      %v2116 = vpop.f32.mrb[0].mxu0
      %v2117 = vadd.f32 0.0, %v2116
      %v2118 = vpop.f32.mrb[0].mxu0
      %2119 = vmatprep.mubr.bf16.mxu0 0
      %2120 = vmatmul.mubr.bf16.gmra.mrb[0].mxu0 %v2052
      %v2121 = vpop.f32.mrb[0].mxu0
      %v2122 = vadd.f32 0.0, %v2121
      %v2123 = vpop.f32.mrb[0].mxu0
      %v2124 = vpop.f32.mrb[0].mxu0
      %v2125 = vadd.f32 0.0, %v2124
      %v2126 = vpop.f32.mrb[0].mxu0
      %2127 = vmatprep.mubr.bf16.mxu0 0
      %2128 = vmatmul.mubr.bf16.gmra.mrb[0].mxu0 %v2054
      %v2129 = vpop.f32.mrb[0].mxu0
      %v2130 = vadd.f32 0.0, %v2129
      %v2131 = vpop.f32.mrb[0].mxu0
      %v2132 = vpop.f32.mrb[0].mxu0
      %v2133 = vadd.f32 0.0, %v2132
      %v2134 = vpop.f32.mrb[0].mxu0
      %2135 = vmatprep.mubr.bf16.mxu0 0
      %2136 = vmatmul.mubr.bf16.gmra.mrb[0].mxu0 %v2056
      %v2137 = vpop.f32.mrb[0].mxu0
      %v2138 = vadd.f32 0.0, %v2137
      %v2139 = vpop.f32.mrb[0].mxu0
      %v2140 = vpop.f32.mrb[0].mxu0
      %v2141 = vadd.f32 0.0, %v2140
      %v2142 = vpop.f32.mrb[0].mxu0
      %2143 = vmatprep.mubr.bf16.mxu0 0
      %2144 = vmatmul.mubr.bf16.gmra.mrb[0].mxu0 %v2058
      %v2145 = vpop.f32.mrb[0].mxu0
      %v2146 = vadd.f32 0.0, %v2145
      %v2147 = vpop.f32.mrb[0].mxu0
      %v2148 = vpop.f32.mrb[0].mxu0
      %v2149 = vadd.f32 0.0, %v2148
      %v2150 = vpop.f32.mrb[0].mxu0
      %2151 = vmatprep.mubr.bf16.mxu0 0
      %2152 = vmatmul.mubr.bf16.gmra.mrb[0].mxu0 %v2060
      %v2153 = vpop.f32.mrb[0].mxu0
      %v2154 = vadd.f32 0.0, %v2153
      %v2155 = vpop.f32.mrb[0].mxu0
      %v2156 = vpop.f32.mrb[0].mxu0
      %v2157 = vadd.f32 0.0, %v2156
      %v2158 = vpop.f32.mrb[0].mxu0
      %2159 = vmatprep.mubr.bf16.mxu0 0
      %2160 = vmatmul.mubr.bf16.gmra.mrb[0].mxu0 %v2062
      %v2161 = vpop.f32.mrb[0].mxu0
      %v2162 = vadd.f32 0.0, %v2161
      %v2163 = vpop.f32.mrb[0].mxu0
      %v2164 = vpop.f32.mrb[0].mxu0
      %v2165 = vadd.f32 0.0, %v2164
      %v2166 = vpop.f32.mrb[0].mxu0
      %2167 = vmatprep.mubr.bf16.mxu0 0
      %2168 = vmatmul.mubr.bf16.gmra.mrb[0].mxu0 %v2064
      %v2169 = vpop.f32.mrb[0].mxu0
      %v2170 = vadd.f32 0.0, %v2169
      %v2171 = vpop.f32.mrb[0].mxu0
      %v2172 = vpop.f32.mrb[0].mxu0
      %v2173 = vadd.f32 0.0, %v2172
      %v2174 = vpop.f32.mrb[0].mxu0
      %2175 = vmatprep.mubr.bf16.mxu0 0
      %2176 = vmatmul.mubr.bf16.gmra.mrb[0].mxu0 %v2066
      %v2177 = vpop.f32.mrb[0].mxu0
      %v2178 = vadd.f32 0.0, %v2177
      %v2179 = vpop.f32.mrb[0].mxu0
      %v2180 = vpop.f32.mrb[0].mxu0
      %v2181 = vadd.f32 0.0, %v2180
      %v2182 = vpop.f32.mrb[0].mxu0
      %2183 = vdwg.mxu0
      %v2184 = vadd.f32 %v1622, %v2106
      %v2185 = vadd.f32 %v1625, %v2109
      %v2186 = vadd.f32 %v1630, %v2114
      %v2187 = vadd.f32 %v1633, %v2117
      %v2188 = vadd.f32 %v1638, %v2122
      %v2189 = vadd.f32 %v1641, %v2125
      %v2190 = vadd.f32 %v1646, %v2130
      %v2191 = vadd.f32 %v1649, %v2133
      %v2192 = vadd.f32 %v1654, %v2138
      %v2193 = vadd.f32 %v1657, %v2141
      %v2194 = vadd.f32 %v1662, %v2146
      %v2195 = vadd.f32 %v1665, %v2149
      %v2196 = vadd.f32 %v1670, %v2154
      %v2197 = vadd.f32 %v1673, %v2157
      %v2198 = vadd.f32 %v1678, %v2162
      %v2199 = vadd.f32 %v1681, %v2165
      %v2200 = vadd.f32 %v1686, %v2170
      %v2201 = vadd.f32 %v1689, %v2173
      %v2202 = vadd.f32 %v1694, %v2178
      %v2203 = vadd.f32 %v1697, %v2181
      %v2204 = vld [vmem:[%s3] sm:$0x1]
      %v2206 = vlaneseq
      %v2207 = vshrl.u32 %v2206, 7
      %v2208 = vsub.s32 0, %v2207
      %v2209 = vrot.slane %v2204, %v2208
      %v2211 = vadd.f32 %v2184, %v2209
      %v2212 = vadd.f32 %v2185, %v2209
      %v2213 = vadd.f32 %v2186, %v2209
      %v2214 = vadd.f32 %v2187, %v2209
      %v2215 = vadd.f32 %v2188, %v2209
      %v2216 = vadd.f32 %v2189, %v2209
      %v2217 = vadd.f32 %v2190, %v2209
      %v2218 = vadd.f32 %v2191, %v2209
      %v2219 = vadd.f32 %v2192, %v2209
      %v2220 = vadd.f32 %v2193, %v2209
      %v2221 = vadd.f32 %v2194, %v2209
      %v2222 = vadd.f32 %v2195, %v2209
      %v2223 = vadd.f32 %v2196, %v2209
      %v2224 = vadd.f32 %v2197, %v2209
      %v2225 = vadd.f32 %v2198, %v2209
      %v2226 = vadd.f32 %v2199, %v2209
      %v2227 = vadd.f32 %v2200, %v2209
      %v2228 = vadd.f32 %v2201, %v2209
      %v2229 = vadd.f32 %v2202, %v2209
      %v2230 = vadd.f32 %v2203, %v2209
      %v2231 = vmax.f32 %v2211, 0.0
      %v2232 = vmax.f32 %v2212, 0.0
      %v2233 = vmax.f32 %v2213, 0.0
      %v2234 = vmax.f32 %v2214, 0.0
      %v2235 = vmax.f32 %v2215, 0.0
      %v2236 = vmax.f32 %v2216, 0.0
      %v2237 = vmax.f32 %v2217, 0.0
      %v2238 = vmax.f32 %v2218, 0.0
      %v2239 = vmax.f32 %v2219, 0.0
      %v2240 = vmax.f32 %v2220, 0.0
      %v2241 = vmax.f32 %v2221, 0.0
      %v2242 = vmax.f32 %v2222, 0.0
      %v2243 = vmax.f32 %v2223, 0.0
      %v2244 = vmax.f32 %v2224, 0.0
      %v2245 = vmax.f32 %v2225, 0.0
      %v2246 = vmax.f32 %v2226, 0.0
      %v2247 = vmax.f32 %v2227, 0.0
      %v2248 = vmax.f32 %v2228, 0.0
      %v2249 = vmax.f32 %v2229, 0.0
      %v2250 = vmax.f32 %v2230, 0.0
      %v2251 = vld [vmem:[#allocation3] sm:$0x1]
      %v2252 = vsel %vm254, 0, %v2251
      %2253 = vst [vmem:[#allocation3] sm:$0x1] %v2252
      %v2254 = vld [vmem:[#allocation3 + $0xc] sm:$0x1]
      %v2255 = vsel %vm254, 0, %v2254
      %2256 = vst [vmem:[#allocation3 + $0xc] sm:$0x1] %v2255
      %v2257 = vld [vmem:[#allocation3 + $0x18] sm:$0x1]
      %v2258 = vsel %vm254, 0, %v2257
      %2259 = vst [vmem:[#allocation3 + $0x18] sm:$0x1] %v2258
      %v2260 = vld [vmem:[#allocation3 + $0x24] sm:$0x1]
      %v2261 = vsel %vm254, 0, %v2260
      %2262 = vst [vmem:[#allocation3 + $0x24] sm:$0x1] %v2261
      %v2263 = vld [vmem:[#allocation3 + $0x30] sm:$0x1]
      %v2264 = vsel %vm254, 0, %v2263
      %2265 = vst [vmem:[#allocation3 + $0x30] sm:$0x1] %v2264
      %v2266 = vld [vmem:[#allocation3 + $0x3c] sm:$0x1]
      %v2267 = vsel %vm254, 0, %v2266
      %2268 = vst [vmem:[#allocation3 + $0x3c] sm:$0x1] %v2267
      %v2269 = vld [vmem:[#allocation3 + $0x48] sm:$0x1]
      %v2270 = vsel %vm254, 0, %v2269
      %2271 = vst [vmem:[#allocation3 + $0x48] sm:$0x1] %v2270
      %v2272 = vld [vmem:[#allocation3 + $0x54] sm:$0x1]
      %v2273 = vsel %vm254, 0, %v2272
      %2274 = vst [vmem:[#allocation3 + $0x54] sm:$0x1] %v2273
      %v2275 = vld [vmem:[#allocation3 + $0x60] sm:$0x1]
      %v2276 = vsel %vm254, 0, %v2275
      %2277 = vst [vmem:[#allocation3 + $0x60] sm:$0x1] %v2276
      %v2278 = vld [vmem:[#allocation3 + $0x6c] sm:$0x1]
      %v2279 = vsel %vm254, 0, %v2278
      %2280 = vst [vmem:[#allocation3 + $0x6c] sm:$0x1] %v2279
      %v2281 = vld [vmem:[#allocation3 + $0x8] sm:$0x1]
      %v2282 = vsel %vm292, 0, %v2281
      %2283 = vst [vmem:[#allocation3 + $0x8] sm:$0x1] %v2282
      %v2284 = vld [vmem:[#allocation3 + $0x14] sm:$0x1]
      %v2285 = vsel %vm292, 0, %v2284
      %2286 = vst [vmem:[#allocation3 + $0x14] sm:$0x1] %v2285
      %v2287 = vld [vmem:[#allocation3 + $0x20] sm:$0x1]
      %v2288 = vsel %vm292, 0, %v2287
      %2289 = vst [vmem:[#allocation3 + $0x20] sm:$0x1] %v2288
      %v2290 = vld [vmem:[#allocation3 + $0x2c] sm:$0x1]
      %v2291 = vsel %vm292, 0, %v2290
      %2292 = vst [vmem:[#allocation3 + $0x2c] sm:$0x1] %v2291
      %v2293 = vld [vmem:[#allocation3 + $0x38] sm:$0x1]
      %v2294 = vsel %vm292, 0, %v2293
      %2295 = vst [vmem:[#allocation3 + $0x38] sm:$0x1] %v2294
      %v2296 = vld [vmem:[#allocation3 + $0x44] sm:$0x1]
      %v2297 = vsel %vm292, 0, %v2296
      %2298 = vst [vmem:[#allocation3 + $0x44] sm:$0x1] %v2297
      %v2299 = vld [vmem:[#allocation3 + $0x50] sm:$0x1]
      %v2300 = vsel %vm292, 0, %v2299
      %2301 = vst [vmem:[#allocation3 + $0x50] sm:$0x1] %v2300
      %v2302 = vld [vmem:[#allocation3 + $0x5c] sm:$0x1]
      %v2303 = vsel %vm292, 0, %v2302
      %2304 = vst [vmem:[#allocation3 + $0x5c] sm:$0x1] %v2303
      %v2305 = vld [vmem:[#allocation3 + $0x68] sm:$0x1]
      %v2306 = vsel %vm292, 0, %v2305
      %2307 = vst [vmem:[#allocation3 + $0x68] sm:$0x1] %v2306
      %v2308 = vld [vmem:[#allocation3 + $0x74] sm:$0x1]
      %v2309 = vsel %vm292, 0, %v2308
      %2310 = vst [vmem:[#allocation3 + $0x74] sm:$0x1] %v2309
      %v2311 = vpack.c.bf16 %v2232, %v2231
      %v2312 = vpack.c.bf16 %v2234, %v2233
      %v2313 = vpack.c.bf16 %v2236, %v2235
      %v2314 = vpack.c.bf16 %v2238, %v2237
      %v2315 = vpack.c.bf16 %v2240, %v2239
      %v2316 = vpack.c.bf16 %v2242, %v2241
      %v2317 = vpack.c.bf16 %v2244, %v2243
      %v2318 = vpack.c.bf16 %v2246, %v2245
      %v2319 = vpack.c.bf16 %v2248, %v2247
      %v2320 = vpack.c.bf16 %v2250, %v2249
      %v2331 = vunpack.c.l.b16 %v2311
      %v2332 = vunpack.c.h.b16 %v2311
      %v2333 = vunpack.c.l.b16 %v2312
      %v2334 = vunpack.c.h.b16 %v2312
      %v2335 = vunpack.c.l.b16 %v2313
      %v2336 = vunpack.c.h.b16 %v2313
      %v2337 = vunpack.c.l.b16 %v2314
      %v2338 = vunpack.c.h.b16 %v2314
      %v2339 = vunpack.c.l.b16 %v2315
      %v2340 = vunpack.c.h.b16 %v2315
      %v2341 = vunpack.c.l.b16 %v2316
      %v2342 = vunpack.c.h.b16 %v2316
      %v2343 = vunpack.c.l.b16 %v2317
      %v2344 = vunpack.c.h.b16 %v2317
      %v2345 = vunpack.c.l.b16 %v2318
      %v2346 = vunpack.c.h.b16 %v2318
      %v2347 = vunpack.c.l.b16 %v2319
      %v2348 = vunpack.c.h.b16 %v2319
      %v2349 = vunpack.c.l.b16 %v2320
      %v2350 = vunpack.c.h.b16 %v2320
      %v2351 = vpack.c.b16 %v2331, %v2331
      %v2352 = vpack.c.b16 %v2332, %v2332
      %v2353 = vpack.c.b16 %v2333, %v2333
      %v2354 = vpack.c.b16 %v2334, %v2334
      %v2355 = vpack.c.b16 %v2335, %v2335
      %v2356 = vpack.c.b16 %v2336, %v2336
      %v2357 = vpack.c.b16 %v2337, %v2337
      %v2358 = vpack.c.b16 %v2338, %v2338
      %v2359 = vpack.c.b16 %v2339, %v2339
      %v2360 = vpack.c.b16 %v2340, %v2340
      %v2361 = vpack.c.b16 %v2341, %v2341
      %v2362 = vpack.c.b16 %v2342, %v2342
      %v2363 = vpack.c.b16 %v2343, %v2343
      %v2364 = vpack.c.b16 %v2344, %v2344
      %v2365 = vpack.c.b16 %v2345, %v2345
      %v2366 = vpack.c.b16 %v2346, %v2346
      %v2367 = vpack.c.b16 %v2347, %v2347
      %v2368 = vpack.c.b16 %v2348, %v2348
      %v2369 = vpack.c.b16 %v2349, %v2349
      %v2370 = vpack.c.b16 %v2350, %v2350
      %v2372 = vshrl.u32 %v2351, 16
      %v2374 = vrot.slane %v2372, 7
      %v2375 = vshll.u32 %v2351, 16
      %v2377 = vor.u32 %v2374, %v2375
      %v2378 = vrot.slane %v2374, 4
      %v2380 = vshrl.u32 %v2352, 16
      %v2382 = vrot.slane %v2380, 7
      %v2383 = vshll.u32 %v2352, 16
      %v2385 = vor.u32 %v2382, %v2383
      %v2386 = vsel %vm349, %v2378, %v2385
      %v2387 = vrot.slane %v2382, 4
      %v2389 = vshrl.u32 %v2353, 16
      %v2391 = vrot.slane %v2389, 7
      %v2392 = vshll.u32 %v2353, 16
      %v2394 = vor.u32 %v2391, %v2392
      %v2395 = vrot.slane %v2391, 4
      %v2397 = vshrl.u32 %v2354, 16
      %v2399 = vrot.slane %v2397, 7
      %v2400 = vshll.u32 %v2354, 16
      %v2402 = vor.u32 %v2399, %v2400
      %v2403 = vsel %vm349, %v2395, %v2402
      %v2404 = vrot.slane %v2399, 4
      %v2406 = vshrl.u32 %v2355, 16
      %v2408 = vrot.slane %v2406, 7
      %v2409 = vshll.u32 %v2355, 16
      %v2411 = vor.u32 %v2408, %v2409
      %v2412 = vrot.slane %v2408, 4
      %v2414 = vshrl.u32 %v2356, 16
      %v2416 = vrot.slane %v2414, 7
      %v2417 = vshll.u32 %v2356, 16
      %v2419 = vor.u32 %v2416, %v2417
      %v2420 = vsel %vm349, %v2412, %v2419
      %v2421 = vrot.slane %v2416, 4
      %v2423 = vshrl.u32 %v2357, 16
      %v2425 = vrot.slane %v2423, 7
      %v2426 = vshll.u32 %v2357, 16
      %v2428 = vor.u32 %v2425, %v2426
      %v2429 = vrot.slane %v2425, 4
      %v2431 = vshrl.u32 %v2358, 16
      %v2433 = vrot.slane %v2431, 7
      %v2434 = vshll.u32 %v2358, 16
      %v2436 = vor.u32 %v2433, %v2434
      %v2437 = vsel %vm349, %v2429, %v2436
      %v2438 = vrot.slane %v2433, 4
      %v2440 = vshrl.u32 %v2359, 16
      %v2442 = vrot.slane %v2440, 7
      %v2443 = vshll.u32 %v2359, 16
      %v2445 = vor.u32 %v2442, %v2443
      %v2446 = vrot.slane %v2442, 4
      %v2448 = vshrl.u32 %v2360, 16
      %v2450 = vrot.slane %v2448, 7
      %v2451 = vshll.u32 %v2360, 16
      %v2453 = vor.u32 %v2450, %v2451
      %v2454 = vsel %vm349, %v2446, %v2453
      %v2455 = vrot.slane %v2450, 4
      %v2457 = vshrl.u32 %v2361, 16
      %v2459 = vrot.slane %v2457, 7
      %v2460 = vshll.u32 %v2361, 16
      %v2462 = vor.u32 %v2459, %v2460
      %v2463 = vrot.slane %v2459, 4
      %v2465 = vshrl.u32 %v2362, 16
      %v2467 = vrot.slane %v2465, 7
      %v2468 = vshll.u32 %v2362, 16
      %v2470 = vor.u32 %v2467, %v2468
      %v2471 = vsel %vm349, %v2463, %v2470
      %v2472 = vrot.slane %v2467, 4
      %v2474 = vshrl.u32 %v2363, 16
      %v2476 = vrot.slane %v2474, 7
      %v2477 = vshll.u32 %v2363, 16
      %v2479 = vor.u32 %v2476, %v2477
      %v2480 = vrot.slane %v2476, 4
      %v2482 = vshrl.u32 %v2364, 16
      %v2484 = vrot.slane %v2482, 7
      %v2485 = vshll.u32 %v2364, 16
      %v2487 = vor.u32 %v2484, %v2485
      %v2488 = vsel %vm349, %v2480, %v2487
      %v2489 = vrot.slane %v2484, 4
      %v2491 = vshrl.u32 %v2365, 16
      %v2493 = vrot.slane %v2491, 7
      %v2494 = vshll.u32 %v2365, 16
      %v2496 = vor.u32 %v2493, %v2494
      %v2497 = vrot.slane %v2493, 4
      %v2499 = vshrl.u32 %v2366, 16
      %v2501 = vrot.slane %v2499, 7
      %v2502 = vshll.u32 %v2366, 16
      %v2504 = vor.u32 %v2501, %v2502
      %v2505 = vsel %vm349, %v2497, %v2504
      %v2506 = vrot.slane %v2501, 4
      %v2508 = vshrl.u32 %v2367, 16
      %v2510 = vrot.slane %v2508, 7
      %v2511 = vshll.u32 %v2367, 16
      %v2513 = vor.u32 %v2510, %v2511
      %v2514 = vrot.slane %v2510, 4
      %v2516 = vshrl.u32 %v2368, 16
      %v2518 = vrot.slane %v2516, 7
      %v2519 = vshll.u32 %v2368, 16
      %v2521 = vor.u32 %v2518, %v2519
      %v2522 = vsel %vm349, %v2514, %v2521
      %v2523 = vrot.slane %v2518, 4
      %v2525 = vshrl.u32 %v2369, 16
      %v2527 = vrot.slane %v2525, 7
      %v2528 = vshll.u32 %v2369, 16
      %v2530 = vor.u32 %v2527, %v2528
      %v2531 = vrot.slane %v2527, 4
      %v2533 = vshrl.u32 %v2370, 16
      %v2535 = vrot.slane %v2533, 7
      %v2536 = vshll.u32 %v2370, 16
      %v2538 = vor.u32 %v2535, %v2536
      %v2539 = vsel %vm349, %v2531, %v2538
      %v2540 = vrot.slane %v2535, 4
      %v2571 = vld [vmem:[#allocation3] sm:$0xf]
      %v2572 = vsel %vm512, %v2377, %v2571
      %2573 = vst [vmem:[#allocation3] sm:$0xf] %v2572
      %2574 = vst.msk [vmem:[#allocation3 + $0x4] sm:$0xf] %vm516, %v2386
      %v2575 = vld [vmem:[#allocation3 + $0x8] sm:$0x1]
      %v2576 = vsel %vm254, %v2387, %v2575
      %2577 = vst [vmem:[#allocation3 + $0x8] sm:$0x1] %v2576
      %v2578 = vld [vmem:[#allocation3 + $0xc] sm:$0xf]
      %v2579 = vsel %vm512, %v2394, %v2578
      %2580 = vst [vmem:[#allocation3 + $0xc] sm:$0xf] %v2579
      %2581 = vst.msk [vmem:[#allocation3 + $0x10] sm:$0xf] %vm516, %v2403
      %v2582 = vld [vmem:[#allocation3 + $0x14] sm:$0x1]
      %v2583 = vsel %vm254, %v2404, %v2582
      %2584 = vst [vmem:[#allocation3 + $0x14] sm:$0x1] %v2583
      %v2585 = vld [vmem:[#allocation3 + $0x18] sm:$0xf]
      %v2586 = vsel %vm512, %v2411, %v2585
      %2587 = vst [vmem:[#allocation3 + $0x18] sm:$0xf] %v2586
      %2588 = vst.msk [vmem:[#allocation3 + $0x1c] sm:$0xf] %vm516, %v2420
      %v2589 = vld [vmem:[#allocation3 + $0x20] sm:$0x1]
      %v2590 = vsel %vm254, %v2421, %v2589
      %2591 = vst [vmem:[#allocation3 + $0x20] sm:$0x1] %v2590
      %v2592 = vld [vmem:[#allocation3 + $0x24] sm:$0xf]
      %v2593 = vsel %vm512, %v2428, %v2592
      %2594 = vst [vmem:[#allocation3 + $0x24] sm:$0xf] %v2593
      %2595 = vst.msk [vmem:[#allocation3 + $0x28] sm:$0xf] %vm516, %v2437
      %v2596 = vld [vmem:[#allocation3 + $0x2c] sm:$0x1]
      %v2597 = vsel %vm254, %v2438, %v2596
      %2598 = vst [vmem:[#allocation3 + $0x2c] sm:$0x1] %v2597
      %v2599 = vld [vmem:[#allocation3 + $0x30] sm:$0xf]
      %v2600 = vsel %vm512, %v2445, %v2599
      %2601 = vst [vmem:[#allocation3 + $0x30] sm:$0xf] %v2600
      %2602 = vst.msk [vmem:[#allocation3 + $0x34] sm:$0xf] %vm516, %v2454
      %v2603 = vld [vmem:[#allocation3 + $0x38] sm:$0x1]
      %v2604 = vsel %vm254, %v2455, %v2603
      %2605 = vst [vmem:[#allocation3 + $0x38] sm:$0x1] %v2604
      %v2606 = vld [vmem:[#allocation3 + $0x3c] sm:$0xf]
      %v2607 = vsel %vm512, %v2462, %v2606
      %2608 = vst [vmem:[#allocation3 + $0x3c] sm:$0xf] %v2607
      %2609 = vst.msk [vmem:[#allocation3 + $0x40] sm:$0xf] %vm516, %v2471
      %v2610 = vld [vmem:[#allocation3 + $0x44] sm:$0x1]
      %v2611 = vsel %vm254, %v2472, %v2610
      %2612 = vst [vmem:[#allocation3 + $0x44] sm:$0x1] %v2611
      %v2613 = vld [vmem:[#allocation3 + $0x48] sm:$0xf]
      %v2614 = vsel %vm512, %v2479, %v2613
      %2615 = vst [vmem:[#allocation3 + $0x48] sm:$0xf] %v2614
      %2616 = vst.msk [vmem:[#allocation3 + $0x4c] sm:$0xf] %vm516, %v2488
      %v2617 = vld [vmem:[#allocation3 + $0x50] sm:$0x1]
      %v2618 = vsel %vm254, %v2489, %v2617
      %2619 = vst [vmem:[#allocation3 + $0x50] sm:$0x1] %v2618
      %v2620 = vld [vmem:[#allocation3 + $0x54] sm:$0xf]
      %v2621 = vsel %vm512, %v2496, %v2620
      %2622 = vst [vmem:[#allocation3 + $0x54] sm:$0xf] %v2621
      %2623 = vst.msk [vmem:[#allocation3 + $0x58] sm:$0xf] %vm516, %v2505
      %v2624 = vld [vmem:[#allocation3 + $0x5c] sm:$0x1]
      %v2625 = vsel %vm254, %v2506, %v2624
      %2626 = vst [vmem:[#allocation3 + $0x5c] sm:$0x1] %v2625
      %v2627 = vld [vmem:[#allocation3 + $0x60] sm:$0xf]
      %v2628 = vsel %vm512, %v2513, %v2627
      %2629 = vst [vmem:[#allocation3 + $0x60] sm:$0xf] %v2628
      %2630 = vst.msk [vmem:[#allocation3 + $0x64] sm:$0xf] %vm516, %v2522
      %v2631 = vld [vmem:[#allocation3 + $0x68] sm:$0x1]
      %v2632 = vsel %vm254, %v2523, %v2631
      %2633 = vst [vmem:[#allocation3 + $0x68] sm:$0x1] %v2632
      %v2634 = vld [vmem:[#allocation3 + $0x6c] sm:$0xf]
      %v2635 = vsel %vm512, %v2530, %v2634
      %2636 = vst [vmem:[#allocation3 + $0x6c] sm:$0xf] %v2635
      %2637 = vst.msk [vmem:[#allocation3 + $0x70] sm:$0xf] %vm516, %v2539
      %v2638 = vld [vmem:[#allocation3 + $0x74] sm:$0x1]
      %v2639 = vsel %vm254, %v2540, %v2638
      %2640 = vst [vmem:[#allocation3 + $0x74] sm:$0x1] %v2639
      // Predicated region
      $region57: #{tpu_custom_call.1} parent=39 // pred_check
        %p2641 = pneg %p636
      $region58: #{tpu_custom_call.1} parent=39 // pred_check_branch
        %2643 = sbr.rel (%p2641) target = $region60
      $region59: #{tpu_custom_call.1} parent=39 // pred_region
        %2644 = vst.msk [vmem:[#allocation3] sm:$0xf] %vm516, 0
        %2645 = vst.msk [vmem:[#allocation3 + $0x4] sm:$0xf] %vm516, 0
        %vm2646 = vcmask 24576
        %2647 = vst.msk [vmem:[#allocation3 + $0x8] sm:$0x1] %vm2646, 0
      $region60: #{tpu_custom_call.1} parent=39 // pred_fallthru
        _
      // Predicated region
      $region61: #{tpu_custom_call.1} parent=39 // pred_check
        %p2648 = pneg %p714
      $region62: #{tpu_custom_call.1} parent=39 // pred_check_branch
        %2650 = sbr.rel (%p2648) target = $region64
      $region63: #{tpu_custom_call.1} parent=39 // pred_region
        %s2651 = scalar_lea.vmem [#allocation3], 108
        %2652 = vst.msk [vmem:[%s2651] sm:$0xf] %vm516, 0
        %2653 = vst.msk [vmem:[%s2651 + $0x4] sm:$0xf] %vm516, 0
        %vm2654 = vcmask 24576
        %2655 = vst.msk [vmem:[%s2651 + $0x8] sm:$0x1] %vm2654, 0
      $region64: #{tpu_custom_call.1} parent=39 // pred_fallthru
        _
      %v2656 = vld [vmem:[#allocation3] sm:$0xf]
      %v2657 = vld [vmem:[#allocation3 + $0x4] sm:$0xf]
      %v2658 = vld [vmem:[#allocation3 + $0x8] sm:$0x1]
      %v2659 = vld [vmem:[#allocation3 + $0xc] sm:$0xf]
      %v2660 = vld [vmem:[#allocation3 + $0x10] sm:$0xf]
      %v2661 = vld [vmem:[#allocation3 + $0x14] sm:$0x1]
      %v2662 = vld [vmem:[#allocation3 + $0x18] sm:$0xf]
      %v2663 = vld [vmem:[#allocation3 + $0x1c] sm:$0xf]
      %v2664 = vld [vmem:[#allocation3 + $0x20] sm:$0x1]
      %v2665 = vld [vmem:[#allocation3 + $0x24] sm:$0xf]
      %v2666 = vld [vmem:[#allocation3 + $0x28] sm:$0xf]
      %v2667 = vld [vmem:[#allocation3 + $0x2c] sm:$0x1]
      %v2668 = vld [vmem:[#allocation3 + $0x30] sm:$0xf]
      %v2669 = vld [vmem:[#allocation3 + $0x34] sm:$0xf]
      %v2670 = vld [vmem:[#allocation3 + $0x38] sm:$0x1]
      %v2671 = vld [vmem:[#allocation3 + $0x3c] sm:$0xf]
      %v2672 = vld [vmem:[#allocation3 + $0x40] sm:$0xf]
      %v2673 = vld [vmem:[#allocation3 + $0x44] sm:$0x1]
      %v2674 = vld [vmem:[#allocation3 + $0x48] sm:$0xf]
      %v2675 = vld [vmem:[#allocation3 + $0x4c] sm:$0xf]
      %v2676 = vld [vmem:[#allocation3 + $0x50] sm:$0x1]
      %v2677 = vld [vmem:[#allocation3 + $0x54] sm:$0xf]
      %v2678 = vld [vmem:[#allocation3 + $0x58] sm:$0xf]
      %v2679 = vld [vmem:[#allocation3 + $0x5c] sm:$0x1]
      %v2696 = vunpack.c.l.b16 %v2656
      %v2697 = vunpack.c.l.b16 %v2657
      %v2698 = vunpack.c.l.b16 %v2659
      %v2699 = vunpack.c.l.b16 %v2660
      %v2700 = vunpack.c.l.b16 %v2662
      %v2701 = vunpack.c.l.b16 %v2663
      %v2702 = vunpack.c.l.b16 %v2665
      %v2703 = vunpack.c.l.b16 %v2666
      %v2704 = vunpack.c.l.b16 %v2668
      %v2705 = vunpack.c.l.b16 %v2669
      %v2706 = vunpack.c.l.b16 %v2671
      %v2707 = vunpack.c.l.b16 %v2672
      %v2708 = vunpack.c.l.b16 %v2674
      %v2709 = vunpack.c.l.b16 %v2675
      %v2710 = vunpack.c.l.b16 %v2677
      %v2711 = vunpack.c.l.b16 %v2678
      %v2712 = vpack.c.b16 %v2697, %v2696
      %v2713 = vpack.c.b16 %v2699, %v2698
      %v2714 = vpack.c.b16 %v2701, %v2700
      %v2715 = vpack.c.b16 %v2703, %v2702
      %v2716 = vpack.c.b16 %v2705, %v2704
      %v2717 = vpack.c.b16 %v2707, %v2706
      %v2718 = vpack.c.b16 %v2709, %v2708
      %v2719 = vpack.c.b16 %v2711, %v2710
      %v2728 = vunpack.c.l.b16 %v2658
      %v2729 = vunpack.c.l.b16 %v2661
      %v2730 = vunpack.c.l.b16 %v2664
      %v2731 = vunpack.c.l.b16 %v2667
      %v2732 = vunpack.c.l.b16 %v2670
      %v2733 = vunpack.c.l.b16 %v2673
      %v2734 = vunpack.c.l.b16 %v2676
      %v2735 = vunpack.c.l.b16 %v2679
      %v2736 = vpack.c.b16 %v2728, %v2728
      %v2737 = vpack.c.b16 %v2729, %v2729
      %v2738 = vpack.c.b16 %v2730, %v2730
      %v2739 = vpack.c.b16 %v2731, %v2731
      %v2740 = vpack.c.b16 %v2732, %v2732
      %v2741 = vpack.c.b16 %v2733, %v2733
      %v2742 = vpack.c.b16 %v2734, %v2734
      %v2743 = vpack.c.b16 %v2735, %v2735
      %v2745 = vshrl.u32 %v2712, 16
      %v2747 = vshll.u32 %v2712, 16
      %v2749 = vrot.slane %v2747, 1
      %v2750 = vor.u32 %v2745, %v2749
      %v2752 = vshll.u32 %v2736, 16
      %v2754 = vrot.slane %v2752, 1
      %v2755 = vsel %vm836, %v2750, %v2754
      %v2757 = vshrl.u32 %v2713, 16
      %v2759 = vshll.u32 %v2713, 16
      %v2761 = vrot.slane %v2759, 1
      %v2762 = vor.u32 %v2757, %v2761
      %v2764 = vshll.u32 %v2737, 16
      %v2766 = vrot.slane %v2764, 1
      %v2767 = vsel %vm836, %v2762, %v2766
      %v2769 = vshrl.u32 %v2714, 16
      %v2771 = vshll.u32 %v2714, 16
      %v2773 = vrot.slane %v2771, 1
      %v2774 = vor.u32 %v2769, %v2773
      %v2776 = vshll.u32 %v2738, 16
      %v2778 = vrot.slane %v2776, 1
      %v2779 = vsel %vm836, %v2774, %v2778
      %v2781 = vshrl.u32 %v2715, 16
      %v2783 = vshll.u32 %v2715, 16
      %v2785 = vrot.slane %v2783, 1
      %v2786 = vor.u32 %v2781, %v2785
      %v2788 = vshll.u32 %v2739, 16
      %v2790 = vrot.slane %v2788, 1
      %v2791 = vsel %vm836, %v2786, %v2790
      %v2793 = vshrl.u32 %v2716, 16
      %v2795 = vshll.u32 %v2716, 16
      %v2797 = vrot.slane %v2795, 1
      %v2798 = vor.u32 %v2793, %v2797
      %v2800 = vshll.u32 %v2740, 16
      %v2802 = vrot.slane %v2800, 1
      %v2803 = vsel %vm836, %v2798, %v2802
      %v2805 = vshrl.u32 %v2717, 16
      %v2807 = vshll.u32 %v2717, 16
      %v2809 = vrot.slane %v2807, 1
      %v2810 = vor.u32 %v2805, %v2809
      %v2812 = vshll.u32 %v2741, 16
      %v2814 = vrot.slane %v2812, 1
      %v2815 = vsel %vm836, %v2810, %v2814
      %v2817 = vshrl.u32 %v2718, 16
      %v2819 = vshll.u32 %v2718, 16
      %v2821 = vrot.slane %v2819, 1
      %v2822 = vor.u32 %v2817, %v2821
      %v2824 = vshll.u32 %v2742, 16
      %v2826 = vrot.slane %v2824, 1
      %v2827 = vsel %vm836, %v2822, %v2826
      %v2829 = vshrl.u32 %v2719, 16
      %v2831 = vshll.u32 %v2719, 16
      %v2833 = vrot.slane %v2831, 1
      %v2834 = vor.u32 %v2829, %v2833
      %v2836 = vshll.u32 %v2743, 16
      %v2838 = vrot.slane %v2836, 1
      %v2839 = vsel %vm836, %v2834, %v2838
      %2840 = vrot.lane.b32.xlu0 %v2755, 4
      %v2841 = vpop.permute.xlu0 %2840
      %2842 = vrot.lane.b32.xlu0 %v2767, 4
      %v2843 = vpop.permute.xlu0 %2842
      %2844 = vrot.lane.b32.xlu0 %v2779, 4
      %v2845 = vpop.permute.xlu0 %2844
      %2846 = vrot.lane.b32.xlu0 %v2791, 4
      %v2847 = vpop.permute.xlu0 %2846
      %2848 = vrot.lane.b32.xlu0 %v2803, 4
      %v2849 = vpop.permute.xlu0 %2848
      %2850 = vrot.lane.b32.xlu0 %v2815, 4
      %v2851 = vpop.permute.xlu0 %2850
      %2852 = vrot.lane.b32.xlu0 %v2827, 4
      %v2853 = vpop.permute.xlu0 %2852
      %2854 = vrot.lane.b32.xlu0 %v2839, 4
      %v2855 = vpop.permute.xlu0 %2854
      %v2856 = vrot.slane %v2712, 1
      %v2857 = vrot.slane %v2736, 1
      %v2858 = vsel %vm977, %v2856, %v2857
      %v2859 = vrot.slane %v2713, 1
      %v2860 = vrot.slane %v2737, 1
      %v2861 = vsel %vm977, %v2859, %v2860
      %v2862 = vrot.slane %v2714, 1
      %v2863 = vrot.slane %v2738, 1
      %v2864 = vsel %vm977, %v2862, %v2863
      %v2865 = vrot.slane %v2715, 1
      %v2866 = vrot.slane %v2739, 1
      %v2867 = vsel %vm977, %v2865, %v2866
      %v2868 = vrot.slane %v2716, 1
      %v2869 = vrot.slane %v2740, 1
      %v2870 = vsel %vm977, %v2868, %v2869
      %v2871 = vrot.slane %v2717, 1
      %v2872 = vrot.slane %v2741, 1
      %v2873 = vsel %vm977, %v2871, %v2872
      %v2874 = vrot.slane %v2718, 1
      %v2875 = vrot.slane %v2742, 1
      %v2876 = vsel %vm977, %v2874, %v2875
      %v2877 = vrot.slane %v2719, 1
      %v2878 = vrot.slane %v2743, 1
      %v2879 = vsel %vm977, %v2877, %v2878
      %2880 = vrot.lane.b32.xlu0 %v2858, 8
      %v2881 = vpop.permute.xlu0 %2880
      %2882 = vrot.lane.b32.xlu0 %v2861, 8
      %v2883 = vpop.permute.xlu0 %2882
      %2884 = vrot.lane.b32.xlu0 %v2864, 8
      %v2885 = vpop.permute.xlu0 %2884
      %2886 = vrot.lane.b32.xlu0 %v2867, 8
      %v2887 = vpop.permute.xlu0 %2886
      %2888 = vrot.lane.b32.xlu0 %v2870, 8
      %v2889 = vpop.permute.xlu0 %2888
      %2890 = vrot.lane.b32.xlu0 %v2873, 8
      %v2891 = vpop.permute.xlu0 %2890
      %2892 = vrot.lane.b32.xlu0 %v2876, 8
      %v2893 = vpop.permute.xlu0 %2892
      %2894 = vrot.lane.b32.xlu0 %v2879, 8
      %v2895 = vpop.permute.xlu0 %2894
      %v2897 = vsel %vm1028, %v2712, %v2841
      %v2899 = vsel %vm1028, %v2713, %v2843
      %v2901 = vsel %vm1028, %v2714, %v2845
      %v2903 = vsel %vm1028, %v2715, %v2847
      %v2905 = vsel %vm1028, %v2716, %v2849
      %v2907 = vsel %vm1028, %v2717, %v2851
      %v2909 = vsel %vm1028, %v2718, %v2853
      %v2911 = vsel %vm1028, %v2719, %v2855
      %v2913 = vsel %vm1049, %v2897, %v2881
      %v2915 = vsel %vm1049, %v2899, %v2883
      %v2917 = vsel %vm1049, %v2901, %v2885
      %v2919 = vsel %vm1049, %v2903, %v2887
      %v2921 = vsel %vm1049, %v2905, %v2889
      %v2923 = vsel %vm1049, %v2907, %v2891
      %v2925 = vsel %vm1049, %v2909, %v2893
      %v2927 = vsel %vm1049, %v2911, %v2895
      %v2928 = vld [vmem:[%s2] sm:$0xf]
      %v2929 = vld [vmem:[%s2 + $0x4] sm:$0x3]
      %s2930 = scalar_lea.vmem [#allocation3], 12
      %v2931 = vld [vmem:[%s2930] sm:$0xf]
      %v2932 = vld [vmem:[%s2930 + $0x4] sm:$0xf]
      %v2933 = vld [vmem:[%s2930 + $0x8] sm:$0x1]
      %v2934 = vld [vmem:[%s2930 + $0xc] sm:$0xf]
      %v2935 = vld [vmem:[%s2930 + $0x10] sm:$0xf]
      %v2936 = vld [vmem:[%s2930 + $0x14] sm:$0x1]
      %v2937 = vld [vmem:[%s2930 + $0x18] sm:$0xf]
      %v2938 = vld [vmem:[%s2930 + $0x1c] sm:$0xf]
      %v2939 = vld [vmem:[%s2930 + $0x20] sm:$0x1]
      %v2940 = vld [vmem:[%s2930 + $0x24] sm:$0xf]
      %v2941 = vld [vmem:[%s2930 + $0x28] sm:$0xf]
      %v2942 = vld [vmem:[%s2930 + $0x2c] sm:$0x1]
      %v2943 = vld [vmem:[%s2930 + $0x30] sm:$0xf]
      %v2944 = vld [vmem:[%s2930 + $0x34] sm:$0xf]
      %v2945 = vld [vmem:[%s2930 + $0x38] sm:$0x1]
      %v2946 = vld [vmem:[%s2930 + $0x3c] sm:$0xf]
      %v2947 = vld [vmem:[%s2930 + $0x40] sm:$0xf]
      %v2948 = vld [vmem:[%s2930 + $0x44] sm:$0x1]
      %v2949 = vld [vmem:[%s2930 + $0x48] sm:$0xf]
      %v2950 = vld [vmem:[%s2930 + $0x4c] sm:$0xf]
      %v2951 = vld [vmem:[%s2930 + $0x50] sm:$0x1]
      %v2952 = vld [vmem:[%s2930 + $0x54] sm:$0xf]
      %v2953 = vld [vmem:[%s2930 + $0x58] sm:$0xf]
      %v2954 = vld [vmem:[%s2930 + $0x5c] sm:$0x1]
      %v2971 = vunpack.c.l.b16 %v2931
      %v2972 = vunpack.c.l.b16 %v2932
      %v2973 = vunpack.c.l.b16 %v2934
      %v2974 = vunpack.c.l.b16 %v2935
      %v2975 = vunpack.c.l.b16 %v2937
      %v2976 = vunpack.c.l.b16 %v2938
      %v2977 = vunpack.c.l.b16 %v2940
      %v2978 = vunpack.c.l.b16 %v2941
      %v2979 = vunpack.c.l.b16 %v2943
      %v2980 = vunpack.c.l.b16 %v2944
      %v2981 = vunpack.c.l.b16 %v2946
      %v2982 = vunpack.c.l.b16 %v2947
      %v2983 = vunpack.c.l.b16 %v2949
      %v2984 = vunpack.c.l.b16 %v2950
      %v2985 = vunpack.c.l.b16 %v2952
      %v2986 = vunpack.c.l.b16 %v2953
      %v2987 = vpack.c.b16 %v2972, %v2971
      %v2988 = vpack.c.b16 %v2974, %v2973
      %v2989 = vpack.c.b16 %v2976, %v2975
      %v2990 = vpack.c.b16 %v2978, %v2977
      %v2991 = vpack.c.b16 %v2980, %v2979
      %v2992 = vpack.c.b16 %v2982, %v2981
      %v2993 = vpack.c.b16 %v2984, %v2983
      %v2994 = vpack.c.b16 %v2986, %v2985
      %v3003 = vunpack.c.l.b16 %v2933
      %v3004 = vunpack.c.l.b16 %v2936
      %v3005 = vunpack.c.l.b16 %v2939
      %v3006 = vunpack.c.l.b16 %v2942
      %v3007 = vunpack.c.l.b16 %v2945
      %v3008 = vunpack.c.l.b16 %v2948
      %v3009 = vunpack.c.l.b16 %v2951
      %v3010 = vunpack.c.l.b16 %v2954
      %v3011 = vpack.c.b16 %v3003, %v3003
      %v3012 = vpack.c.b16 %v3004, %v3004
      %v3013 = vpack.c.b16 %v3005, %v3005
      %v3014 = vpack.c.b16 %v3006, %v3006
      %v3015 = vpack.c.b16 %v3007, %v3007
      %v3016 = vpack.c.b16 %v3008, %v3008
      %v3017 = vpack.c.b16 %v3009, %v3009
      %v3018 = vpack.c.b16 %v3010, %v3010
      %v3020 = vshrl.u32 %v2987, 16
      %v3022 = vshll.u32 %v2987, 16
      %v3024 = vrot.slane %v3022, 1
      %v3025 = vor.u32 %v3020, %v3024
      %v3027 = vshll.u32 %v3011, 16
      %v3029 = vrot.slane %v3027, 1
      %v3030 = vsel %vm836, %v3025, %v3029
      %v3032 = vshrl.u32 %v2988, 16
      %v3034 = vshll.u32 %v2988, 16
      %v3036 = vrot.slane %v3034, 1
      %v3037 = vor.u32 %v3032, %v3036
      %v3039 = vshll.u32 %v3012, 16
      %v3041 = vrot.slane %v3039, 1
      %v3042 = vsel %vm836, %v3037, %v3041
      %v3044 = vshrl.u32 %v2989, 16
      %v3046 = vshll.u32 %v2989, 16
      %v3048 = vrot.slane %v3046, 1
      %v3049 = vor.u32 %v3044, %v3048
      %v3051 = vshll.u32 %v3013, 16
      %v3053 = vrot.slane %v3051, 1
      %v3054 = vsel %vm836, %v3049, %v3053
      %v3056 = vshrl.u32 %v2990, 16
      %v3058 = vshll.u32 %v2990, 16
      %v3060 = vrot.slane %v3058, 1
      %v3061 = vor.u32 %v3056, %v3060
      %v3063 = vshll.u32 %v3014, 16
      %v3065 = vrot.slane %v3063, 1
      %v3066 = vsel %vm836, %v3061, %v3065
      %v3068 = vshrl.u32 %v2991, 16
      %v3070 = vshll.u32 %v2991, 16
      %v3072 = vrot.slane %v3070, 1
      %v3073 = vor.u32 %v3068, %v3072
      %v3075 = vshll.u32 %v3015, 16
      %v3077 = vrot.slane %v3075, 1
      %v3078 = vsel %vm836, %v3073, %v3077
      %v3080 = vshrl.u32 %v2992, 16
      %v3082 = vshll.u32 %v2992, 16
      %v3084 = vrot.slane %v3082, 1
      %v3085 = vor.u32 %v3080, %v3084
      %v3087 = vshll.u32 %v3016, 16
      %v3089 = vrot.slane %v3087, 1
      %v3090 = vsel %vm836, %v3085, %v3089
      %v3092 = vshrl.u32 %v2993, 16
      %v3094 = vshll.u32 %v2993, 16
      %v3096 = vrot.slane %v3094, 1
      %v3097 = vor.u32 %v3092, %v3096
      %v3099 = vshll.u32 %v3017, 16
      %v3101 = vrot.slane %v3099, 1
      %v3102 = vsel %vm836, %v3097, %v3101
      %v3104 = vshrl.u32 %v2994, 16
      %v3106 = vshll.u32 %v2994, 16
      %v3108 = vrot.slane %v3106, 1
      %v3109 = vor.u32 %v3104, %v3108
      %v3111 = vshll.u32 %v3018, 16
      %v3113 = vrot.slane %v3111, 1
      %v3114 = vsel %vm836, %v3109, %v3113
      %3115 = vrot.lane.b32.xlu0 %v3030, 4
      %v3116 = vpop.permute.xlu0 %3115
      %3117 = vrot.lane.b32.xlu0 %v3042, 4
      %v3118 = vpop.permute.xlu0 %3117
      %3119 = vrot.lane.b32.xlu0 %v3054, 4
      %v3120 = vpop.permute.xlu0 %3119
      %3121 = vrot.lane.b32.xlu0 %v3066, 4
      %v3122 = vpop.permute.xlu0 %3121
      %3123 = vrot.lane.b32.xlu0 %v3078, 4
      %v3124 = vpop.permute.xlu0 %3123
      %3125 = vrot.lane.b32.xlu0 %v3090, 4
      %v3126 = vpop.permute.xlu0 %3125
      %3127 = vrot.lane.b32.xlu0 %v3102, 4
      %v3128 = vpop.permute.xlu0 %3127
      %3129 = vrot.lane.b32.xlu0 %v3114, 4
      %v3130 = vpop.permute.xlu0 %3129
      %v3131 = vrot.slane %v2987, 1
      %v3132 = vrot.slane %v3011, 1
      %v3133 = vsel %vm977, %v3131, %v3132
      %v3134 = vrot.slane %v2988, 1
      %v3135 = vrot.slane %v3012, 1
      %v3136 = vsel %vm977, %v3134, %v3135
      %v3137 = vrot.slane %v2989, 1
      %v3138 = vrot.slane %v3013, 1
      %v3139 = vsel %vm977, %v3137, %v3138
      %v3140 = vrot.slane %v2990, 1
      %v3141 = vrot.slane %v3014, 1
      %v3142 = vsel %vm977, %v3140, %v3141
      %v3143 = vrot.slane %v2991, 1
      %v3144 = vrot.slane %v3015, 1
      %v3145 = vsel %vm977, %v3143, %v3144
      %v3146 = vrot.slane %v2992, 1
      %v3147 = vrot.slane %v3016, 1
      %v3148 = vsel %vm977, %v3146, %v3147
      %v3149 = vrot.slane %v2993, 1
      %v3150 = vrot.slane %v3017, 1
      %v3151 = vsel %vm977, %v3149, %v3150
      %v3152 = vrot.slane %v2994, 1
      %v3153 = vrot.slane %v3018, 1
      %v3154 = vsel %vm977, %v3152, %v3153
      %3155 = vrot.lane.b32.xlu0 %v3133, 8
      %v3156 = vpop.permute.xlu0 %3155
      %3157 = vrot.lane.b32.xlu0 %v3136, 8
      %v3158 = vpop.permute.xlu0 %3157
      %3159 = vrot.lane.b32.xlu0 %v3139, 8
      %v3160 = vpop.permute.xlu0 %3159
      %3161 = vrot.lane.b32.xlu0 %v3142, 8
      %v3162 = vpop.permute.xlu0 %3161
      %3163 = vrot.lane.b32.xlu0 %v3145, 8
      %v3164 = vpop.permute.xlu0 %3163
      %3165 = vrot.lane.b32.xlu0 %v3148, 8
      %v3166 = vpop.permute.xlu0 %3165
      %3167 = vrot.lane.b32.xlu0 %v3151, 8
      %v3168 = vpop.permute.xlu0 %3167
      %3169 = vrot.lane.b32.xlu0 %v3154, 8
      %v3170 = vpop.permute.xlu0 %3169
      %v3172 = vsel %vm1028, %v2987, %v3116
      %v3174 = vsel %vm1028, %v2988, %v3118
      %v3176 = vsel %vm1028, %v2989, %v3120
      %v3178 = vsel %vm1028, %v2990, %v3122
      %v3180 = vsel %vm1028, %v2991, %v3124
      %v3182 = vsel %vm1028, %v2992, %v3126
      %v3184 = vsel %vm1028, %v2993, %v3128
      %v3186 = vsel %vm1028, %v2994, %v3130
      %v3188 = vsel %vm1049, %v3172, %v3156
      %v3190 = vsel %vm1049, %v3174, %v3158
      %v3192 = vsel %vm1049, %v3176, %v3160
      %v3194 = vsel %vm1049, %v3178, %v3162
      %v3196 = vsel %vm1049, %v3180, %v3164
      %v3198 = vsel %vm1049, %v3182, %v3166
      %v3200 = vsel %vm1049, %v3184, %v3168
      %v3202 = vsel %vm1049, %v3186, %v3170
      %s3203 = scalar_lea.vmem %s2, 8
      %v3204 = vld [vmem:[%s3203] sm:$0xf]
      %v3205 = vld [vmem:[%s3203 + $0x4] sm:$0x3]
      %v3208 = vunpack.c.l.b16 %v3204
      %v3209 = vunpack.c.l.b16 %v3205
      %v3210 = vpack.c.b16 %v3209, %v3208
      %v3211 = vsel %vm1421, %v3188, 0
      %v3213 = vsel %vm1421, %v3190, 0
      %v3215 = vsel %vm1421, %v3192, 0
      %v3217 = vsel %vm1421, %v3194, 0
      %v3219 = vsel %vm1421, %v3196, 0
      %v3221 = vsel %vm1421, %v3198, 0
      %v3223 = vsel %vm1421, %v3200, 0
      %v3225 = vsel %vm1421, %v3202, 0
      %v3228 = vsel %vm1442, %v3210, 0
      %3230 = vmatprep.subr.bf16.mxu0 0
      %3231 = vmatpush1.bf16.msra.mxu0 %v3228
      %3232 = vmatprep.subr.bf16.mxu0 0
      %3233 = vmatpush1.bf16.msra.mxu0 0
      %3234 = vmatprep.subr.bf16.mxu0 0
      %3235 = vmatpush1.bf16.msra.mxu0 0
      %3236 = vmatprep.subr.bf16.mxu0 0
      %3237 = vmatpush1.bf16.msra.mxu0 0
      %3238 = vmatprep.subr.bf16.mxu0 0
      %3239 = vmatpush1.bf16.msra.mxu0 0
      %3240 = vmatprep.subr.bf16.mxu0 0
      %3241 = vmatpush1.bf16.msra.mxu0 0
      %3242 = vmatprep.subr.bf16.mxu0 0
      %3243 = vmatpush1.bf16.msra.mxu0 0
      %3244 = vmatprep.subr.bf16.mxu0 0
      %3245 = vmatpush1.bf16.msra.mxu0 0
      %3246 = vmatprep.subr.bf16.mxu0 0
      %3247 = vmatpush1.bf16.msra.mxu0 0
      %3248 = vmatprep.subr.bf16.mxu0 0
      %3249 = vmatpush1.bf16.msra.mxu0 0
      %3250 = vmatprep.subr.bf16.mxu0 0
      %3251 = vmatpush1.bf16.msra.mxu0 0
      %3252 = vmatprep.subr.bf16.mxu0 0
      %3253 = vmatpush1.bf16.msra.mxu0 0
      %3254 = vmatprep.subr.bf16.mxu0 0
      %3255 = vmatpush1.bf16.msra.mxu0 0
      %3256 = vmatprep.subr.bf16.mxu0 0
      %3257 = vmatpush1.bf16.msra.mxu0 0
      %3258 = vmatprep.subr.bf16.mxu0 0
      %3259 = vmatpush1.bf16.msra.mxu0 0
      %3260 = vmatprep.subr.bf16.mxu0 0
      %3261 = vmatpush1.bf16.msra.mxu0 0
      %3262 = vmatprep.mubr.bf16.mxu0 0
      %3263 = vmatmul.mubr.bf16.gmra.mrb[0].mxu0 %v3211
      %v3264 = vpop.f32.mrb[0].mxu0
      %v3265 = vadd.f32 0.0, %v3264
      %v3266 = vpop.f32.mrb[0].mxu0
      %v3267 = vpop.f32.mrb[0].mxu0
      %v3268 = vadd.f32 0.0, %v3267
      %v3269 = vpop.f32.mrb[0].mxu0
      %3270 = vmatprep.mubr.bf16.mxu0 0
      %3271 = vmatmul.mubr.bf16.gmra.mrb[0].mxu0 %v3213
      %v3272 = vpop.f32.mrb[0].mxu0
      %v3273 = vadd.f32 0.0, %v3272
      %v3274 = vpop.f32.mrb[0].mxu0
      %v3275 = vpop.f32.mrb[0].mxu0
      %v3276 = vadd.f32 0.0, %v3275
      %v3277 = vpop.f32.mrb[0].mxu0
      %3278 = vmatprep.mubr.bf16.mxu0 0
      %3279 = vmatmul.mubr.bf16.gmra.mrb[0].mxu0 %v3215
      %v3280 = vpop.f32.mrb[0].mxu0
      %v3281 = vadd.f32 0.0, %v3280
      %v3282 = vpop.f32.mrb[0].mxu0
      %v3283 = vpop.f32.mrb[0].mxu0
      %v3284 = vadd.f32 0.0, %v3283
      %v3285 = vpop.f32.mrb[0].mxu0
      %3286 = vmatprep.mubr.bf16.mxu0 0
      %3287 = vmatmul.mubr.bf16.gmra.mrb[0].mxu0 %v3217
      %v3288 = vpop.f32.mrb[0].mxu0
      %v3289 = vadd.f32 0.0, %v3288
      %v3290 = vpop.f32.mrb[0].mxu0
      %v3291 = vpop.f32.mrb[0].mxu0
      %v3292 = vadd.f32 0.0, %v3291
      %v3293 = vpop.f32.mrb[0].mxu0
      %3294 = vmatprep.mubr.bf16.mxu0 0
      %3295 = vmatmul.mubr.bf16.gmra.mrb[0].mxu0 %v3219
      %v3296 = vpop.f32.mrb[0].mxu0
      %v3297 = vadd.f32 0.0, %v3296
      %v3298 = vpop.f32.mrb[0].mxu0
      %v3299 = vpop.f32.mrb[0].mxu0
      %v3300 = vadd.f32 0.0, %v3299
      %v3301 = vpop.f32.mrb[0].mxu0
      %3302 = vmatprep.mubr.bf16.mxu0 0
      %3303 = vmatmul.mubr.bf16.gmra.mrb[0].mxu0 %v3221
      %v3304 = vpop.f32.mrb[0].mxu0
      %v3305 = vadd.f32 0.0, %v3304
      %v3306 = vpop.f32.mrb[0].mxu0
      %v3307 = vpop.f32.mrb[0].mxu0
      %v3308 = vadd.f32 0.0, %v3307
      %v3309 = vpop.f32.mrb[0].mxu0
      %3310 = vmatprep.mubr.bf16.mxu0 0
      %3311 = vmatmul.mubr.bf16.gmra.mrb[0].mxu0 %v3223
      %v3312 = vpop.f32.mrb[0].mxu0
      %v3313 = vadd.f32 0.0, %v3312
      %v3314 = vpop.f32.mrb[0].mxu0
      %v3315 = vpop.f32.mrb[0].mxu0
      %v3316 = vadd.f32 0.0, %v3315
      %v3317 = vpop.f32.mrb[0].mxu0
      %3318 = vmatprep.mubr.bf16.mxu0 0
      %3319 = vmatmul.mubr.bf16.gmra.mrb[0].mxu0 %v3225
      %v3320 = vpop.f32.mrb[0].mxu0
      %v3321 = vadd.f32 0.0, %v3320
      %v3322 = vpop.f32.mrb[0].mxu0
      %v3323 = vpop.f32.mrb[0].mxu0
      %v3324 = vadd.f32 0.0, %v3323
      %v3325 = vpop.f32.mrb[0].mxu0
      %3326 = vdwg.mxu0
      %v3329 = vunpack.c.l.b16 %v2928
      %v3330 = vunpack.c.l.b16 %v2929
      %v3331 = vpack.c.b16 %v3330, %v3329
      %v3332 = vsel %vm1421, %v2913, 0
      %v3334 = vsel %vm1421, %v2915, 0
      %v3336 = vsel %vm1421, %v2917, 0
      %v3338 = vsel %vm1421, %v2919, 0
      %v3340 = vsel %vm1421, %v2921, 0
      %v3342 = vsel %vm1421, %v2923, 0
      %v3344 = vsel %vm1421, %v2925, 0
      %v3346 = vsel %vm1421, %v2927, 0
      %v3349 = vsel %vm1442, %v3331, 0
      %3351 = vmatprep.subr.bf16.mxu0 0
      %3352 = vmatpush1.bf16.msra.mxu0 %v3349
      %3353 = vmatprep.subr.bf16.mxu0 0
      %3354 = vmatpush1.bf16.msra.mxu0 0
      %3355 = vmatprep.subr.bf16.mxu0 0
      %3356 = vmatpush1.bf16.msra.mxu0 0
      %3357 = vmatprep.subr.bf16.mxu0 0
      %3358 = vmatpush1.bf16.msra.mxu0 0
      %3359 = vmatprep.subr.bf16.mxu0 0
      %3360 = vmatpush1.bf16.msra.mxu0 0
      %3361 = vmatprep.subr.bf16.mxu0 0
      %3362 = vmatpush1.bf16.msra.mxu0 0
      %3363 = vmatprep.subr.bf16.mxu0 0
      %3364 = vmatpush1.bf16.msra.mxu0 0
      %3365 = vmatprep.subr.bf16.mxu0 0
      %3366 = vmatpush1.bf16.msra.mxu0 0
      %3367 = vmatprep.subr.bf16.mxu0 0
      %3368 = vmatpush1.bf16.msra.mxu0 0
      %3369 = vmatprep.subr.bf16.mxu0 0
      %3370 = vmatpush1.bf16.msra.mxu0 0
      %3371 = vmatprep.subr.bf16.mxu0 0
      %3372 = vmatpush1.bf16.msra.mxu0 0
      %3373 = vmatprep.subr.bf16.mxu0 0
      %3374 = vmatpush1.bf16.msra.mxu0 0
      %3375 = vmatprep.subr.bf16.mxu0 0
      %3376 = vmatpush1.bf16.msra.mxu0 0
      %3377 = vmatprep.subr.bf16.mxu0 0
      %3378 = vmatpush1.bf16.msra.mxu0 0
      %3379 = vmatprep.subr.bf16.mxu0 0
      %3380 = vmatpush1.bf16.msra.mxu0 0
      %3381 = vmatprep.subr.bf16.mxu0 0
      %3382 = vmatpush1.bf16.msra.mxu0 0
      %3383 = vmatprep.mubr.bf16.mxu0 0
      %3384 = vmatmul.mubr.bf16.gmra.mrb[0].mxu0 %v3332
      %v3385 = vpop.f32.mrb[0].mxu0
      %v3386 = vadd.f32 %v3265, %v3385
      %v3387 = vpop.f32.mrb[0].mxu0
      %v3388 = vpop.f32.mrb[0].mxu0
      %v3389 = vadd.f32 %v3268, %v3388
      %v3390 = vpop.f32.mrb[0].mxu0
      %3391 = vmatprep.mubr.bf16.mxu0 0
      %3392 = vmatmul.mubr.bf16.gmra.mrb[0].mxu0 %v3334
      %v3393 = vpop.f32.mrb[0].mxu0
      %v3394 = vadd.f32 %v3273, %v3393
      %v3395 = vpop.f32.mrb[0].mxu0
      %v3396 = vpop.f32.mrb[0].mxu0
      %v3397 = vadd.f32 %v3276, %v3396
      %v3398 = vpop.f32.mrb[0].mxu0
      %3399 = vmatprep.mubr.bf16.mxu0 0
      %3400 = vmatmul.mubr.bf16.gmra.mrb[0].mxu0 %v3336
      %v3401 = vpop.f32.mrb[0].mxu0
      %v3402 = vadd.f32 %v3281, %v3401
      %v3403 = vpop.f32.mrb[0].mxu0
      %v3404 = vpop.f32.mrb[0].mxu0
      %v3405 = vadd.f32 %v3284, %v3404
      %v3406 = vpop.f32.mrb[0].mxu0
      %3407 = vmatprep.mubr.bf16.mxu0 0
      %3408 = vmatmul.mubr.bf16.gmra.mrb[0].mxu0 %v3338
      %v3409 = vpop.f32.mrb[0].mxu0
      %v3410 = vadd.f32 %v3289, %v3409
      %v3411 = vpop.f32.mrb[0].mxu0
      %v3412 = vpop.f32.mrb[0].mxu0
      %v3413 = vadd.f32 %v3292, %v3412
      %v3414 = vpop.f32.mrb[0].mxu0
      %3415 = vmatprep.mubr.bf16.mxu0 0
      %3416 = vmatmul.mubr.bf16.gmra.mrb[0].mxu0 %v3340
      %v3417 = vpop.f32.mrb[0].mxu0
      %v3418 = vadd.f32 %v3297, %v3417
      %v3419 = vpop.f32.mrb[0].mxu0
      %v3420 = vpop.f32.mrb[0].mxu0
      %v3421 = vadd.f32 %v3300, %v3420
      %v3422 = vpop.f32.mrb[0].mxu0
      %3423 = vmatprep.mubr.bf16.mxu0 0
      %3424 = vmatmul.mubr.bf16.gmra.mrb[0].mxu0 %v3342
      %v3425 = vpop.f32.mrb[0].mxu0
      %v3426 = vadd.f32 %v3305, %v3425
      %v3427 = vpop.f32.mrb[0].mxu0
      %v3428 = vpop.f32.mrb[0].mxu0
      %v3429 = vadd.f32 %v3308, %v3428
      %v3430 = vpop.f32.mrb[0].mxu0
      %3431 = vmatprep.mubr.bf16.mxu0 0
      %3432 = vmatmul.mubr.bf16.gmra.mrb[0].mxu0 %v3344
      %v3433 = vpop.f32.mrb[0].mxu0
      %v3434 = vadd.f32 %v3313, %v3433
      %v3435 = vpop.f32.mrb[0].mxu0
      %v3436 = vpop.f32.mrb[0].mxu0
      %v3437 = vadd.f32 %v3316, %v3436
      %v3438 = vpop.f32.mrb[0].mxu0
      %3439 = vmatprep.mubr.bf16.mxu0 0
      %3440 = vmatmul.mubr.bf16.gmra.mrb[0].mxu0 %v3346
      %v3441 = vpop.f32.mrb[0].mxu0
      %v3442 = vadd.f32 %v3321, %v3441
      %v3443 = vpop.f32.mrb[0].mxu0
      %v3444 = vpop.f32.mrb[0].mxu0
      %v3445 = vadd.f32 %v3324, %v3444
      %v3446 = vpop.f32.mrb[0].mxu0
      %3447 = vdwg.mxu0
      %s3448 = scalar_lea.vmem [#allocation3], 24
      %v3449 = vld [vmem:[%s3448] sm:$0xf]
      %v3450 = vld [vmem:[%s3448 + $0x4] sm:$0xf]
      %v3451 = vld [vmem:[%s3448 + $0x8] sm:$0x1]
      %v3452 = vld [vmem:[%s3448 + $0xc] sm:$0xf]
      %v3453 = vld [vmem:[%s3448 + $0x10] sm:$0xf]
      %v3454 = vld [vmem:[%s3448 + $0x14] sm:$0x1]
      %v3455 = vld [vmem:[%s3448 + $0x18] sm:$0xf]
      %v3456 = vld [vmem:[%s3448 + $0x1c] sm:$0xf]
      %v3457 = vld [vmem:[%s3448 + $0x20] sm:$0x1]
      %v3458 = vld [vmem:[%s3448 + $0x24] sm:$0xf]
      %v3459 = vld [vmem:[%s3448 + $0x28] sm:$0xf]
      %v3460 = vld [vmem:[%s3448 + $0x2c] sm:$0x1]
      %v3461 = vld [vmem:[%s3448 + $0x30] sm:$0xf]
      %v3462 = vld [vmem:[%s3448 + $0x34] sm:$0xf]
      %v3463 = vld [vmem:[%s3448 + $0x38] sm:$0x1]
      %v3464 = vld [vmem:[%s3448 + $0x3c] sm:$0xf]
      %v3465 = vld [vmem:[%s3448 + $0x40] sm:$0xf]
      %v3466 = vld [vmem:[%s3448 + $0x44] sm:$0x1]
      %v3467 = vld [vmem:[%s3448 + $0x48] sm:$0xf]
      %v3468 = vld [vmem:[%s3448 + $0x4c] sm:$0xf]
      %v3469 = vld [vmem:[%s3448 + $0x50] sm:$0x1]
      %v3470 = vld [vmem:[%s3448 + $0x54] sm:$0xf]
      %v3471 = vld [vmem:[%s3448 + $0x58] sm:$0xf]
      %v3472 = vld [vmem:[%s3448 + $0x5c] sm:$0x1]
      %v3489 = vunpack.c.l.b16 %v3449
      %v3490 = vunpack.c.l.b16 %v3450
      %v3491 = vunpack.c.l.b16 %v3452
      %v3492 = vunpack.c.l.b16 %v3453
      %v3493 = vunpack.c.l.b16 %v3455
      %v3494 = vunpack.c.l.b16 %v3456
      %v3495 = vunpack.c.l.b16 %v3458
      %v3496 = vunpack.c.l.b16 %v3459
      %v3497 = vunpack.c.l.b16 %v3461
      %v3498 = vunpack.c.l.b16 %v3462
      %v3499 = vunpack.c.l.b16 %v3464
      %v3500 = vunpack.c.l.b16 %v3465
      %v3501 = vunpack.c.l.b16 %v3467
      %v3502 = vunpack.c.l.b16 %v3468
      %v3503 = vunpack.c.l.b16 %v3470
      %v3504 = vunpack.c.l.b16 %v3471
      %v3505 = vpack.c.b16 %v3490, %v3489
      %v3506 = vpack.c.b16 %v3492, %v3491
      %v3507 = vpack.c.b16 %v3494, %v3493
      %v3508 = vpack.c.b16 %v3496, %v3495
      %v3509 = vpack.c.b16 %v3498, %v3497
      %v3510 = vpack.c.b16 %v3500, %v3499
      %v3511 = vpack.c.b16 %v3502, %v3501
      %v3512 = vpack.c.b16 %v3504, %v3503
      %v3521 = vunpack.c.l.b16 %v3451
      %v3522 = vunpack.c.l.b16 %v3454
      %v3523 = vunpack.c.l.b16 %v3457
      %v3524 = vunpack.c.l.b16 %v3460
      %v3525 = vunpack.c.l.b16 %v3463
      %v3526 = vunpack.c.l.b16 %v3466
      %v3527 = vunpack.c.l.b16 %v3469
      %v3528 = vunpack.c.l.b16 %v3472
      %v3529 = vpack.c.b16 %v3521, %v3521
      %v3530 = vpack.c.b16 %v3522, %v3522
      %v3531 = vpack.c.b16 %v3523, %v3523
      %v3532 = vpack.c.b16 %v3524, %v3524
      %v3533 = vpack.c.b16 %v3525, %v3525
      %v3534 = vpack.c.b16 %v3526, %v3526
      %v3535 = vpack.c.b16 %v3527, %v3527
      %v3536 = vpack.c.b16 %v3528, %v3528
      %v3538 = vshrl.u32 %v3505, 16
      %v3540 = vshll.u32 %v3505, 16
      %v3542 = vrot.slane %v3540, 1
      %v3543 = vor.u32 %v3538, %v3542
      %v3545 = vshll.u32 %v3529, 16
      %v3547 = vrot.slane %v3545, 1
      %v3548 = vsel %vm836, %v3543, %v3547
      %v3550 = vshrl.u32 %v3506, 16
      %v3552 = vshll.u32 %v3506, 16
      %v3554 = vrot.slane %v3552, 1
      %v3555 = vor.u32 %v3550, %v3554
      %v3557 = vshll.u32 %v3530, 16
      %v3559 = vrot.slane %v3557, 1
      %v3560 = vsel %vm836, %v3555, %v3559
      %v3562 = vshrl.u32 %v3507, 16
      %v3564 = vshll.u32 %v3507, 16
      %v3566 = vrot.slane %v3564, 1
      %v3567 = vor.u32 %v3562, %v3566
      %v3569 = vshll.u32 %v3531, 16
      %v3571 = vrot.slane %v3569, 1
      %v3572 = vsel %vm836, %v3567, %v3571
      %v3574 = vshrl.u32 %v3508, 16
      %v3576 = vshll.u32 %v3508, 16
      %v3578 = vrot.slane %v3576, 1
      %v3579 = vor.u32 %v3574, %v3578
      %v3581 = vshll.u32 %v3532, 16
      %v3583 = vrot.slane %v3581, 1
      %v3584 = vsel %vm836, %v3579, %v3583
      %v3586 = vshrl.u32 %v3509, 16
      %v3588 = vshll.u32 %v3509, 16
      %v3590 = vrot.slane %v3588, 1
      %v3591 = vor.u32 %v3586, %v3590
      %v3593 = vshll.u32 %v3533, 16
      %v3595 = vrot.slane %v3593, 1
      %v3596 = vsel %vm836, %v3591, %v3595
      %v3598 = vshrl.u32 %v3510, 16
      %v3600 = vshll.u32 %v3510, 16
      %v3602 = vrot.slane %v3600, 1
      %v3603 = vor.u32 %v3598, %v3602
      %v3605 = vshll.u32 %v3534, 16
      %v3607 = vrot.slane %v3605, 1
      %v3608 = vsel %vm836, %v3603, %v3607
      %v3610 = vshrl.u32 %v3511, 16
      %v3612 = vshll.u32 %v3511, 16
      %v3614 = vrot.slane %v3612, 1
      %v3615 = vor.u32 %v3610, %v3614
      %v3617 = vshll.u32 %v3535, 16
      %v3619 = vrot.slane %v3617, 1
      %v3620 = vsel %vm836, %v3615, %v3619
      %v3622 = vshrl.u32 %v3512, 16
      %v3624 = vshll.u32 %v3512, 16
      %v3626 = vrot.slane %v3624, 1
      %v3627 = vor.u32 %v3622, %v3626
      %v3629 = vshll.u32 %v3536, 16
      %v3631 = vrot.slane %v3629, 1
      %v3632 = vsel %vm836, %v3627, %v3631
      %3633 = vrot.lane.b32.xlu0 %v3548, 4
      %v3634 = vpop.permute.xlu0 %3633
      %3635 = vrot.lane.b32.xlu0 %v3560, 4
      %v3636 = vpop.permute.xlu0 %3635
      %3637 = vrot.lane.b32.xlu0 %v3572, 4
      %v3638 = vpop.permute.xlu0 %3637
      %3639 = vrot.lane.b32.xlu0 %v3584, 4
      %v3640 = vpop.permute.xlu0 %3639
      %3641 = vrot.lane.b32.xlu0 %v3596, 4
      %v3642 = vpop.permute.xlu0 %3641
      %3643 = vrot.lane.b32.xlu0 %v3608, 4
      %v3644 = vpop.permute.xlu0 %3643
      %3645 = vrot.lane.b32.xlu0 %v3620, 4
      %v3646 = vpop.permute.xlu0 %3645
      %3647 = vrot.lane.b32.xlu0 %v3632, 4
      %v3648 = vpop.permute.xlu0 %3647
      %v3649 = vrot.slane %v3505, 1
      %v3650 = vrot.slane %v3529, 1
      %v3651 = vsel %vm977, %v3649, %v3650
      %v3652 = vrot.slane %v3506, 1
      %v3653 = vrot.slane %v3530, 1
      %v3654 = vsel %vm977, %v3652, %v3653
      %v3655 = vrot.slane %v3507, 1
      %v3656 = vrot.slane %v3531, 1
      %v3657 = vsel %vm977, %v3655, %v3656
      %v3658 = vrot.slane %v3508, 1
      %v3659 = vrot.slane %v3532, 1
      %v3660 = vsel %vm977, %v3658, %v3659
      %v3661 = vrot.slane %v3509, 1
      %v3662 = vrot.slane %v3533, 1
      %v3663 = vsel %vm977, %v3661, %v3662
      %v3664 = vrot.slane %v3510, 1
      %v3665 = vrot.slane %v3534, 1
      %v3666 = vsel %vm977, %v3664, %v3665
      %v3667 = vrot.slane %v3511, 1
      %v3668 = vrot.slane %v3535, 1
      %v3669 = vsel %vm977, %v3667, %v3668
      %v3670 = vrot.slane %v3512, 1
      %v3671 = vrot.slane %v3536, 1
      %v3672 = vsel %vm977, %v3670, %v3671
      %3673 = vrot.lane.b32.xlu0 %v3651, 8
      %v3674 = vpop.permute.xlu0 %3673
      %3675 = vrot.lane.b32.xlu0 %v3654, 8
      %v3676 = vpop.permute.xlu0 %3675
      %3677 = vrot.lane.b32.xlu0 %v3657, 8
      %v3678 = vpop.permute.xlu0 %3677
      %3679 = vrot.lane.b32.xlu0 %v3660, 8
      %v3680 = vpop.permute.xlu0 %3679
      %3681 = vrot.lane.b32.xlu0 %v3663, 8
      %v3682 = vpop.permute.xlu0 %3681
      %3683 = vrot.lane.b32.xlu0 %v3666, 8
      %v3684 = vpop.permute.xlu0 %3683
      %3685 = vrot.lane.b32.xlu0 %v3669, 8
      %v3686 = vpop.permute.xlu0 %3685
      %3687 = vrot.lane.b32.xlu0 %v3672, 8
      %v3688 = vpop.permute.xlu0 %3687
      %v3690 = vsel %vm1028, %v3505, %v3634
      %v3692 = vsel %vm1028, %v3506, %v3636
      %v3694 = vsel %vm1028, %v3507, %v3638
      %v3696 = vsel %vm1028, %v3508, %v3640
      %v3698 = vsel %vm1028, %v3509, %v3642
      %v3700 = vsel %vm1028, %v3510, %v3644
      %v3702 = vsel %vm1028, %v3511, %v3646
      %v3704 = vsel %vm1028, %v3512, %v3648
      %v3706 = vsel %vm1049, %v3690, %v3674
      %v3708 = vsel %vm1049, %v3692, %v3676
      %v3710 = vsel %vm1049, %v3694, %v3678
      %v3712 = vsel %vm1049, %v3696, %v3680
      %v3714 = vsel %vm1049, %v3698, %v3682
      %v3716 = vsel %vm1049, %v3700, %v3684
      %v3718 = vsel %vm1049, %v3702, %v3686
      %v3720 = vsel %vm1049, %v3704, %v3688
      %s3721 = scalar_lea.vmem %s2, 16
      %v3722 = vld [vmem:[%s3721] sm:$0xf]
      %v3723 = vld [vmem:[%s3721 + $0x4] sm:$0x3]
      %v3726 = vunpack.c.l.b16 %v3722
      %v3727 = vunpack.c.l.b16 %v3723
      %v3728 = vpack.c.b16 %v3727, %v3726
      %v3729 = vsel %vm1421, %v3706, 0
      %v3731 = vsel %vm1421, %v3708, 0
      %v3733 = vsel %vm1421, %v3710, 0
      %v3735 = vsel %vm1421, %v3712, 0
      %v3737 = vsel %vm1421, %v3714, 0
      %v3739 = vsel %vm1421, %v3716, 0
      %v3741 = vsel %vm1421, %v3718, 0
      %v3743 = vsel %vm1421, %v3720, 0
      %v3746 = vsel %vm1442, %v3728, 0
      %3748 = vmatprep.subr.bf16.mxu0 0
      %3749 = vmatpush1.bf16.msra.mxu0 %v3746
      %3750 = vmatprep.subr.bf16.mxu0 0
      %3751 = vmatpush1.bf16.msra.mxu0 0
      %3752 = vmatprep.subr.bf16.mxu0 0
      %3753 = vmatpush1.bf16.msra.mxu0 0
      %3754 = vmatprep.subr.bf16.mxu0 0
      %3755 = vmatpush1.bf16.msra.mxu0 0
      %3756 = vmatprep.subr.bf16.mxu0 0
      %3757 = vmatpush1.bf16.msra.mxu0 0
      %3758 = vmatprep.subr.bf16.mxu0 0
      %3759 = vmatpush1.bf16.msra.mxu0 0
      %3760 = vmatprep.subr.bf16.mxu0 0
      %3761 = vmatpush1.bf16.msra.mxu0 0
      %3762 = vmatprep.subr.bf16.mxu0 0
      %3763 = vmatpush1.bf16.msra.mxu0 0
      %3764 = vmatprep.subr.bf16.mxu0 0
      %3765 = vmatpush1.bf16.msra.mxu0 0
      %3766 = vmatprep.subr.bf16.mxu0 0
      %3767 = vmatpush1.bf16.msra.mxu0 0
      %3768 = vmatprep.subr.bf16.mxu0 0
      %3769 = vmatpush1.bf16.msra.mxu0 0
      %3770 = vmatprep.subr.bf16.mxu0 0
      %3771 = vmatpush1.bf16.msra.mxu0 0
      %3772 = vmatprep.subr.bf16.mxu0 0
      %3773 = vmatpush1.bf16.msra.mxu0 0
      %3774 = vmatprep.subr.bf16.mxu0 0
      %3775 = vmatpush1.bf16.msra.mxu0 0
      %3776 = vmatprep.subr.bf16.mxu0 0
      %3777 = vmatpush1.bf16.msra.mxu0 0
      %3778 = vmatprep.subr.bf16.mxu0 0
      %3779 = vmatpush1.bf16.msra.mxu0 0
      %3780 = vmatprep.mubr.bf16.mxu0 0
      %3781 = vmatmul.mubr.bf16.gmra.mrb[0].mxu0 %v3729
      %v3782 = vpop.f32.mrb[0].mxu0
      %v3783 = vadd.f32 0.0, %v3782
      %v3784 = vpop.f32.mrb[0].mxu0
      %v3785 = vpop.f32.mrb[0].mxu0
      %v3786 = vadd.f32 0.0, %v3785
      %v3787 = vpop.f32.mrb[0].mxu0
      %3788 = vmatprep.mubr.bf16.mxu0 0
      %3789 = vmatmul.mubr.bf16.gmra.mrb[0].mxu0 %v3731
      %v3790 = vpop.f32.mrb[0].mxu0
      %v3791 = vadd.f32 0.0, %v3790
      %v3792 = vpop.f32.mrb[0].mxu0
      %v3793 = vpop.f32.mrb[0].mxu0
      %v3794 = vadd.f32 0.0, %v3793
      %v3795 = vpop.f32.mrb[0].mxu0
      %3796 = vmatprep.mubr.bf16.mxu0 0
      %3797 = vmatmul.mubr.bf16.gmra.mrb[0].mxu0 %v3733
      %v3798 = vpop.f32.mrb[0].mxu0
      %v3799 = vadd.f32 0.0, %v3798
      %v3800 = vpop.f32.mrb[0].mxu0
      %v3801 = vpop.f32.mrb[0].mxu0
      %v3802 = vadd.f32 0.0, %v3801
      %v3803 = vpop.f32.mrb[0].mxu0
      %3804 = vmatprep.mubr.bf16.mxu0 0
      %3805 = vmatmul.mubr.bf16.gmra.mrb[0].mxu0 %v3735
      %v3806 = vpop.f32.mrb[0].mxu0
      %v3807 = vadd.f32 0.0, %v3806
      %v3808 = vpop.f32.mrb[0].mxu0
      %v3809 = vpop.f32.mrb[0].mxu0
      %v3810 = vadd.f32 0.0, %v3809
      %v3811 = vpop.f32.mrb[0].mxu0
      %3812 = vmatprep.mubr.bf16.mxu0 0
      %3813 = vmatmul.mubr.bf16.gmra.mrb[0].mxu0 %v3737
      %v3814 = vpop.f32.mrb[0].mxu0
      %v3815 = vadd.f32 0.0, %v3814
      %v3816 = vpop.f32.mrb[0].mxu0
      %v3817 = vpop.f32.mrb[0].mxu0
      %v3818 = vadd.f32 0.0, %v3817
      %v3819 = vpop.f32.mrb[0].mxu0
      %3820 = vmatprep.mubr.bf16.mxu0 0
      %3821 = vmatmul.mubr.bf16.gmra.mrb[0].mxu0 %v3739
      %v3822 = vpop.f32.mrb[0].mxu0
      %v3823 = vadd.f32 0.0, %v3822
      %v3824 = vpop.f32.mrb[0].mxu0
      %v3825 = vpop.f32.mrb[0].mxu0
      %v3826 = vadd.f32 0.0, %v3825
      %v3827 = vpop.f32.mrb[0].mxu0
      %3828 = vmatprep.mubr.bf16.mxu0 0
      %3829 = vmatmul.mubr.bf16.gmra.mrb[0].mxu0 %v3741
      %v3830 = vpop.f32.mrb[0].mxu0
      %v3831 = vadd.f32 0.0, %v3830
      %v3832 = vpop.f32.mrb[0].mxu0
      %v3833 = vpop.f32.mrb[0].mxu0
      %v3834 = vadd.f32 0.0, %v3833
      %v3835 = vpop.f32.mrb[0].mxu0
      %3836 = vmatprep.mubr.bf16.mxu0 0
      %3837 = vmatmul.mubr.bf16.gmra.mrb[0].mxu0 %v3743
      %v3838 = vpop.f32.mrb[0].mxu0
      %v3839 = vadd.f32 0.0, %v3838
      %v3840 = vpop.f32.mrb[0].mxu0
      %v3841 = vpop.f32.mrb[0].mxu0
      %v3842 = vadd.f32 0.0, %v3841
      %v3843 = vpop.f32.mrb[0].mxu0
      %3844 = vdwg.mxu0
      %v3845 = vadd.f32 %v3386, %v3783
      %v3846 = vadd.f32 %v3389, %v3786
      %v3847 = vadd.f32 %v3394, %v3791
      %v3848 = vadd.f32 %v3397, %v3794
      %v3849 = vadd.f32 %v3402, %v3799
      %v3850 = vadd.f32 %v3405, %v3802
      %v3851 = vadd.f32 %v3410, %v3807
      %v3852 = vadd.f32 %v3413, %v3810
      %v3853 = vadd.f32 %v3418, %v3815
      %v3854 = vadd.f32 %v3421, %v3818
      %v3855 = vadd.f32 %v3426, %v3823
      %v3856 = vadd.f32 %v3429, %v3826
      %v3857 = vadd.f32 %v3434, %v3831
      %v3858 = vadd.f32 %v3437, %v3834
      %v3859 = vadd.f32 %v3442, %v3839
      %v3860 = vadd.f32 %v3445, %v3842
      %v3861 = vld [vmem:[%s331] sm:$0xf]
      %v3862 = vld [vmem:[%s331 + $0x4] sm:$0xf]
      %v3863 = vld [vmem:[%s331 + $0x8] sm:$0xf]
      %v3864 = vld [vmem:[%s331 + $0xc] sm:$0xf]
      %v3865 = vld [vmem:[%s331 + $0x10] sm:$0xf]
      %v3866 = vld [vmem:[%s331 + $0x14] sm:$0xf]
      %v3867 = vld [vmem:[%s331 + $0x18] sm:$0xf]
      %v3868 = vld [vmem:[%s331 + $0x1c] sm:$0xf]
      %v3869 = vld [vmem:[%s331 + $0x20] sm:$0xf]
      %v3870 = vld [vmem:[%s331 + $0x24] sm:$0xf]
      %v3871 = vld [vmem:[%s331 + $0x28] sm:$0xf]
      %v3872 = vld [vmem:[%s331 + $0x2c] sm:$0xf]
      %v3873 = vld [vmem:[%s331 + $0x30] sm:$0xf]
      %v3874 = vld [vmem:[%s331 + $0x34] sm:$0xf]
      %v3875 = vld [vmem:[%s331 + $0x38] sm:$0xf]
      %v3876 = vld [vmem:[%s331 + $0x3c] sm:$0xf]
      %v3877 = vunpack.c.l.bf16 %v3861
      %v3878 = vunpack.c.l.bf16 %v3862
      %v3879 = vunpack.c.l.bf16 %v3863
      %v3880 = vunpack.c.l.bf16 %v3864
      %v3881 = vunpack.c.l.bf16 %v3865
      %v3882 = vunpack.c.l.bf16 %v3866
      %v3883 = vunpack.c.l.bf16 %v3867
      %v3884 = vunpack.c.l.bf16 %v3868
      %v3885 = vunpack.c.l.bf16 %v3869
      %v3886 = vunpack.c.l.bf16 %v3870
      %v3887 = vunpack.c.l.bf16 %v3871
      %v3888 = vunpack.c.l.bf16 %v3872
      %v3889 = vunpack.c.l.bf16 %v3873
      %v3890 = vunpack.c.l.bf16 %v3874
      %v3891 = vunpack.c.l.bf16 %v3875
      %v3892 = vunpack.c.l.bf16 %v3876
      %v3893 = vld [vmem:[%s4] sm:$0x1]
      %v3895 = vlaneseq
      %v3896 = vshrl.u32 %v3895, 7
      %v3897 = vsub.s32 0, %v3896
      %v3898 = vrot.slane %v3893, %v3897
      %v3900 = vadd.f32 %v3845, %v3898
      %v3901 = vadd.f32 %v3846, %v3898
      %v3902 = vadd.f32 %v3847, %v3898
      %v3903 = vadd.f32 %v3848, %v3898
      %v3904 = vadd.f32 %v3849, %v3898
      %v3905 = vadd.f32 %v3850, %v3898
      %v3906 = vadd.f32 %v3851, %v3898
      %v3907 = vadd.f32 %v3852, %v3898
      %v3908 = vadd.f32 %v3853, %v3898
      %v3909 = vadd.f32 %v3854, %v3898
      %v3910 = vadd.f32 %v3855, %v3898
      %v3911 = vadd.f32 %v3856, %v3898
      %v3912 = vadd.f32 %v3857, %v3898
      %v3913 = vadd.f32 %v3858, %v3898
      %v3914 = vadd.f32 %v3859, %v3898
      %v3915 = vadd.f32 %v3860, %v3898
      %v3916 = vadd.f32 %v3900, %v3877
      %v3917 = vadd.f32 %v3901, %v3878
      %v3918 = vadd.f32 %v3902, %v3879
      %v3919 = vadd.f32 %v3903, %v3880
      %v3920 = vadd.f32 %v3904, %v3881
      %v3921 = vadd.f32 %v3905, %v3882
      %v3922 = vadd.f32 %v3906, %v3883
      %v3923 = vadd.f32 %v3907, %v3884
      %v3924 = vadd.f32 %v3908, %v3885
      %v3925 = vadd.f32 %v3909, %v3886
      %v3926 = vadd.f32 %v3910, %v3887
      %v3927 = vadd.f32 %v3911, %v3888
      %v3928 = vadd.f32 %v3912, %v3889
      %v3929 = vadd.f32 %v3913, %v3890
      %v3930 = vadd.f32 %v3914, %v3891
      %v3931 = vadd.f32 %v3915, %v3892
      %v3932 = vmax.f32 %v3916, 0.0
      %v3933 = vmax.f32 %v3917, 0.0
      %v3934 = vmax.f32 %v3918, 0.0
      %v3935 = vmax.f32 %v3919, 0.0
      %v3936 = vmax.f32 %v3920, 0.0
      %v3937 = vmax.f32 %v3921, 0.0
      %v3938 = vmax.f32 %v3922, 0.0
      %v3939 = vmax.f32 %v3923, 0.0
      %v3940 = vmax.f32 %v3924, 0.0
      %v3941 = vmax.f32 %v3925, 0.0
      %v3942 = vmax.f32 %v3926, 0.0
      %v3943 = vmax.f32 %v3927, 0.0
      %v3944 = vmax.f32 %v3928, 0.0
      %v3945 = vmax.f32 %v3929, 0.0
      %v3946 = vmax.f32 %v3930, 0.0
      %v3947 = vmax.f32 %v3931, 0.0
      %3948 = vst.msk [vmem:[%s248] sm:$0xff] %vm1028, %v3932
      %3949 = vst.msk [vmem:[%s248 + $0x8] sm:$0xff] %vm1028, %v3933
      %3950 = vst.msk [vmem:[%s248 + $0x10] sm:$0xff] %vm1028, %v3934
      %3951 = vst.msk [vmem:[%s248 + $0x18] sm:$0xff] %vm1028, %v3935
      %3952 = vst.msk [vmem:[%s248 + $0x20] sm:$0xff] %vm1028, %v3936
      %3953 = vst.msk [vmem:[%s248 + $0x28] sm:$0xff] %vm1028, %v3937
      %3954 = vst.msk [vmem:[%s248 + $0x30] sm:$0xff] %vm1028, %v3938
      %3955 = vst.msk [vmem:[%s248 + $0x38] sm:$0xff] %vm1028, %v3939
      %3956 = vst.msk [vmem:[%s248 + $0x40] sm:$0xff] %vm1028, %v3940
      %3957 = vst.msk [vmem:[%s248 + $0x48] sm:$0xff] %vm1028, %v3941
      %3958 = vst.msk [vmem:[%s248 + $0x50] sm:$0xff] %vm1028, %v3942
      %3959 = vst.msk [vmem:[%s248 + $0x58] sm:$0xff] %vm1028, %v3943
      %3960 = vst.msk [vmem:[%s248 + $0x60] sm:$0xff] %vm1028, %v3944
      %3961 = vst.msk [vmem:[%s248 + $0x68] sm:$0xff] %vm1028, %v3945
      %3962 = vst.msk [vmem:[%s248 + $0x70] sm:$0xff] %vm1028, %v3946
      %3963 = vst.msk [vmem:[%s248 + $0x78] sm:$0xff] %vm1028, %v3947
      %s3964 = smul.u32 8, %s21
      %p3965 = scmp.lt.s32.totalorder %s20, 1
      %s3966 = scalar_select %p3965, %s20, 1
      %p3967 = scmp.lt.s32.totalorder %s3964, 15
      %s3968 = scalar_select %p3967, %s3964, 15
      %s3969 = smul.addr %s3968, 2
      %s3970 = smul.addr %s3966, 32
      %s3971 = sadd.s32 %s3969, %s3970
      %s3972 = smul.addr %s3971, 8
      %s3973 = scalar_lea.vmem %s5, %s3972
      // Predicated region
      $region65: #{tpu_custom_call.1} parent=39 // pred_check
        %p3974 = pneg %p158
      $region66: #{tpu_custom_call.1} parent=39 // pred_check_branch
        %3976 = sbr.rel (%p3974) target = $region68
      $region67: #{tpu_custom_call.1} parent=39 // pred_region
        %s3977 = smul.u32 8, %s21
      $region68: #{tpu_custom_call.1} parent=39 // pred_fallthru
        _
    $region40: #{tpu_custom_call.1} parent=5 // pred_fallthru
      _
    %p3978 = scmp.le.s32.totalorder 2, %s11
    // Predicated region
    $region69: #{tpu_custom_call.1} parent=5 // pred_check
      %p3979 = pneg %p3978
    $region70: #{tpu_custom_call.1} parent=5 // pred_check_branch
      %3981 = sbr.rel (%p3979) target = $region72
    $region71: #{tpu_custom_call.1} parent=5 // pred_region
      %s3982 = ssub.s32 %s11, 2
      // Predicated region
      $region73: #{tpu_custom_call.1} parent=71 // pred_check
        %p3983 = pneg %p164
      $region74: #{tpu_custom_call.1} parent=71 // pred_check_branch
        %3985 = sbr.rel (%p3983) target = $region76
      $region75: #{tpu_custom_call.1} parent=71 // pred_region
        %s3986 = smul.u32 8, %s23
        %p3987 = scmp.lt.s32.totalorder %s22, 1
        %s3988 = scalar_select %p3987, %s22, 1
        %p3989 = scmp.lt.s32.totalorder %s3986, 15
        %s3990 = scalar_select %p3989, %s3986, 15
        %s3991 = smul.addr %s3990, 2
        %s3992 = smul.addr %s3988, 32
        %s3993 = sadd.s32 %s3991, %s3992
        %s3994 = smul.addr %s3993, 8
        %s3995 = scalar_lea.vmem %s5, %s3994
      $region76: #{tpu_custom_call.1} parent=71 // pred_fallthru
        _
    $region72: #{tpu_custom_call.1} parent=5 // pred_fallthru
      _
  $region6: #{tpu_custom_call.1} parent=0 // loop_footer
    %s15 = sadd.s32 1, %s11
  $region7: #{tpu_custom_call.1} parent=0 // loop_footer_branch
    %10 = sbr.rel target = $region3
  $region8: #{tpu_custom_call.1} parent=0 // loop_exit
    _

</llo_original>
